<compile_context>
chip_gen: v6e
topology: v6e:2x2x1
jax: 0.10.0
libtpu: 0.0.40
codegen_flags: <defaults>
</compile_context>

<pallas_src>
import functools

import jax
import jax.numpy as jnp
from jax.experimental import pallas as pl
from jax.experimental.pallas import tpu as pltpu

KSIZE = 5
PAD = KSIZE // 2


def _round_up(x, m):
    return (x + m - 1) // m * m


def _cdiv(a, b):
    return -(-a // b)


def _vmem_limit_bytes():
    """Generation-aware VMEM request: ~3/4 of physical capacity (48 MiB on
    v7x's 64 MiB TensorCores, 96 MiB on v5e/v6e's 128 MiB), leaving headroom
    for Mosaic internal scratch and pipelining."""
    try:
        cap = int(pltpu.get_tpu_info().vmem_capacity_bytes)
    except Exception:
        cap = 64 * 1024 * 1024          # conservative (v7x-sized) fallback
    return cap * 3 // 4


def _pick_tiling(n, t_pad, d_pad, vmem_budget_bytes, target_rows=2048):
    """Pick (b_tile, grid_steps): M = b_tile * t_pad large enough (~2K rows)
    to amortize MXU fill/drain and the ~0.35us per-grid-step overhead, fitting
    the VMEM budget, with an even grid (>=2 steps) when possible so both v7x
    TensorCores get balanced work.  The batch is padded, no divisor needed."""
    # Per-batch-element per-step VMEM estimate (bytes per (t_pad*d_pad) elems):
    #   bf16 in/out blocks double-buffered (4+4), f32 stacked-tap slab (4*K),
    #   f32 accumulator (4), bf16 activations (2+2).
    per_b = t_pad * d_pad * (4 + 4 + 4 * KSIZE + 4 + 2 + 2)
    # Weights + biases, conservatively counted double-buffered.
    w_bytes = 2 * (3 * KSIZE * d_pad * d_pad * 2 + d_pad * d_pad * 2 + 4 * d_pad * 4)
    avail = max(vmem_budget_bytes - w_bytes, per_b)
    b = max(min(avail // per_b, max(target_rows // t_pad, 1), n), 1)
    steps = _cdiv(n, b)
    if steps == 1 and n >= 2:
        steps = 2                       # give the second v7x core some work
    elif steps > 1 and steps % 2 == 1:
        steps += 1                      # even split across the two cores
    b = _cdiv(n, steps)
    return int(b), int(steps)


def prenet_text_kernel(x_ref,
                       w1_ref, b1_ref,
                       w2_ref, b2_ref,
                       w3_ref, b3_ref,
                       wl_ref, bl_ref,
                       o_ref, *, t_valid):
    B, Tp, Dp = x_ref.shape
    M = B * Tp
    h16 = x_ref[...].reshape(M, Dp)            # bf16; free view (Tp % 16 == 0)

    # (M, 1) row-validity mask.  Time-pad rows must stay zero across layers so
    # that conv taps reading them (including across batch-element boundaries,
    # which only ever land on pad rows because Tp >= T + PAD) see zeros.
    row_t = jax.lax.broadcasted_iota(jnp.int32, (M, 1), 0)
    if B > 1:
        row_t = row_t % Tp
    valid_row = row_t < t_valid

    def conv_bn_relu(h, w_ref, b_ref):
        # Conv1d(k=5,'same') + folded BN + ReLU.
        # Single (M, Dp) @ (Dp, 5*Dp) bf16 matmul: tap k's partial product
        # lands in lane-block k of the f32 result (Cin reduction inside the
        # MXU, one fill/drain).  Taps are realigned with static XLU sublane
        # rolls; no per-tap masks are needed since out-of-range sources are
        # all-zero pad rows.
        p = jnp.dot(h, w_ref[...], preferred_element_type=jnp.float32)  # (M, 5*Dp)
        acc = p[:, PAD * Dp:(PAD + 1) * Dp]    # centre tap, already aligned
        for k in range(KSIZE):                 # static unroll
            d = k - PAD
            if d == 0:
                continue
            acc = acc + pltpu.roll(p[:, k * Dp:(k + 1) * Dp],
                                   shift=(-d) % M, axis=0)
        # f32 epilogue (v5e has no bf16 VALU); (M,1)-broadcast select keeps
        # the pad rows zero for the next layer's taps.
        y = jnp.where(valid_row, jnp.maximum(acc + b_ref[...], 0.0), 0.0)
        return y.astype(jnp.bfloat16)

    h16 = conv_bn_relu(h16, w1_ref, b1_ref)
    h16 = conv_bn_relu(h16, w2_ref, b2_ref)
    h16 = conv_bn_relu(h16, w3_ref, b3_ref)
    out = jnp.dot(h16, wl_ref[...], preferred_element_type=jnp.float32) + bl_ref[...]
    o_ref[...] = out.reshape(B, Tp, Dp).astype(o_ref.dtype)


def prenet_text(x, folded, *, b_tile=None):
    """x: (N, T, D) float32. folded: output of fold_params(). Returns (N,T,D)."""
    N, T, D = x.shape
    Dp = folded["d_pad"]
    # Tp >= T + PAD so every out-of-range conv tap reads an all-zero pad row;
    # multiple of 16 so bf16 (16,128)-packed reshapes stay free views.
    Tp = _round_up(T + PAD, 16)

    vmem_limit = _vmem_limit_bytes()
    if b_tile is None:
        b_tile, grid = _pick_tiling(N, Tp, Dp, (vmem_limit * 3) // 4)
    else:
        grid = _cdiv(N, b_tile)
    Np = b_tile * grid

    xp = jnp.pad(x, ((0, Np - N), (0, Tp - T), (0, Dp - D))).astype(jnp.bfloat16)

    def build(single_buffer_weights):
        if single_buffer_weights:
            # Weights/biases are grid-invariant: one VMEM buffer is enough.
            def wspec(shape):
                return pl.BlockSpec(shape, lambda n: (0,) * len(shape),
                                    pipeline_mode=pl.Buffered(1))
        else:
            def wspec(shape):
                return pl.BlockSpec(shape, lambda n: (0,) * len(shape))

        in_specs = [
            pl.BlockSpec((b_tile, Tp, Dp), lambda n: (n, 0, 0)),   # activations
            wspec((Dp, KSIZE * Dp)), wspec((1, Dp)),               # conv1 (+BN1)
            wspec((Dp, KSIZE * Dp)), wspec((1, Dp)),               # conv2 (+BN2)
            wspec((Dp, KSIZE * Dp)), wspec((1, Dp)),               # conv3 (+BN3)
            wspec((Dp, Dp)), wspec((1, Dp)),                       # linear
        ]
        return pl.pallas_call(
            functools.partial(prenet_text_kernel, t_valid=T),
            out_shape=jax.ShapeDtypeStruct((Np, Tp, Dp), jnp.bfloat16),
            grid_spec=pltpu.PrefetchScalarGridSpec(
                num_scalar_prefetch=0,
                grid=(grid,),
                in_specs=in_specs,
                out_specs=pl.BlockSpec((b_tile, Tp, Dp), lambda n: (n, 0, 0)),
            ),
            compiler_params=pltpu.CompilerParams(
                dimension_semantics=("parallel",),
                vmem_limit_bytes=vmem_limit),
        )

    args = (xp,
            folded["w1"], folded["b1"],
            folded["w2"], folded["b2"],
            folded["w3"], folded["b3"],
            folded["wl"], folded["bl"])
    try:
        out = jax.block_until_ready(build(True)(*args))
    except Exception:
        # pipeline_mode single-buffering unavailable on this build: fall back
        # to default double-buffered weight specs (identical semantics).
        out = build(False)(*args)

    return out[:N, :T, :D].astype(x.dtype)


def make_params(key, dim_model):
    """Deterministic synthetic parameters matching PrenetText's shapes.

    Conv weights are stored as (K, Cin, Cout) (PyTorch (Cout, Cin, K) permuted).
    Each BatchNorm (eval mode) is represented as per-channel scale/shift.
    """
    D = dim_model
    keys = jax.random.split(key, 20)
    kit = iter(keys)
    params = {}
    for i in (1, 2, 3):
        w_pt = jax.random.normal(next(kit), (D, D, KSIZE), jnp.float32) * 0.05
        gamma = 1.0 + 0.1 * jax.random.normal(next(kit), (D,), jnp.float32)
        beta = 0.1 * jax.random.normal(next(kit), (D,), jnp.float32)
        mean = 0.05 * jax.random.normal(next(kit), (D,), jnp.float32)
        var = 1.0 + 0.1 * jax.random.uniform(next(kit), (D,), jnp.float32)
        eps = 1e-5
        scale = gamma / jnp.sqrt(var + eps)
        shift = beta - mean * scale
        params[f"w{i}"] = jnp.transpose(w_pt, (2, 1, 0))   # (K, Cin, Cout)
        params[f"s{i}"] = scale[None, :]
        params[f"b{i}"] = shift[None, :]
    wl_pt = jax.random.normal(next(kit), (D, D), jnp.float32) * 0.05   # (out, in)
    bl = 0.1 * jax.random.normal(next(kit), (D,), jnp.float32)
    params["wl"] = wl_pt.T                                  # kernel computes h @ wl
    params["bl"] = bl[None, :]
    return params


def fold_params(params, dim_model):
    """Host-side, done once: fold eval-mode BN scale into conv weights,
    zero-pad channels to a lane-dense multiple of 128, stack the 5 taps along
    Cout into a single (Dp, 5*Dp) matmul RHS, cast matmul operands to bf16."""
    D = dim_model
    Dp = _round_up(D, 128)
    pc = Dp - D
    folded = {"d_pad": Dp}
    for i in (1, 2, 3):
        w = params[f"w{i}"] * params[f"s{i}"][0][None, None, :]   # BN scale -> Cout
        w = jnp.pad(w, ((0, 0), (0, pc), (0, pc)))                # (K, Dp, Dp)
        # Tap k occupies lane block k of the stacked RHS: (Dp, K*Dp).
        folded[f"w{i}"] = (jnp.transpose(w, (1, 0, 2))
                           .reshape(Dp, KSIZE * Dp).astype(jnp.bfloat16))
        folded[f"b{i}"] = jnp.pad(params[f"b{i}"], ((0, 0), (0, pc))).astype(jnp.float32)
    folded["wl"] = jnp.pad(params["wl"], ((0, pc), (0, pc))).astype(jnp.bfloat16)
    folded["bl"] = jnp.pad(params["bl"], ((0, 0), (0, pc))).astype(jnp.float32)
    return folded


def prenet_text_ref(x, params):
    """Pure-JAX f32 reference with module semantics (for verification)."""
    N, T, D = x.shape

    def conv_bn_relu(h, w, s, b):
        hp = jnp.pad(h, ((0, 0), (PAD, PAD), (0, 0)))
        acc = jnp.zeros((N, T, D), jnp.float32)
        for k in range(KSIZE):
            acc = acc + jnp.einsum("ntd,de->nte", hp[:, k:k + T, :], w[k])
        return jnp.maximum(acc * s[0] + b[0], 0.0)

    h = conv_bn_relu(x, params["w1"], params["s1"], params["b1"])
    h = conv_bn_relu(h, params["w2"], params["s2"], params["b2"])
    h = conv_bn_relu(h, params["w3"], params["s3"], params["b3"])
    return jnp.einsum("ntd,de->nte", h, params["wl"]) + params["bl"][0]


if __name__ == "__main__":
    N, T, D = 2, 16, 32  # batch, sequence length, dim_model
    key = jax.random.PRNGKey(0)
    kx, kp = jax.random.split(key)
    x = jax.random.normal(kx, (N, T, D), jnp.float32)
    params = make_params(kp, D)
    folded = fold_params(params, D)      # BN fold + lane pad + tap stack + bf16, once

    out = prenet_text(x, folded)
    out = jax.block_until_ready(out)

    ref = prenet_text_ref(x, params)
    assert out.shape == (N, T, D)
    # bf16 matmuls / bf16 inter-layer activations vs. f32 reference -> loose tol.
    assert jnp.allclose(out, ref, atol=5e-2, rtol=5e-2), "mismatch vs reference"

    # TODO(synk): training-mode BatchNorm (batch statistics) and active Dropout
    # are not implemented (eval()/inference semantics only); very long T would
    # additionally want a halo-based T tiling instead of whole-T blocks.
    print("KERNEL_OK")
</pallas_src>

<mosaic_0001>
module attributes {stable_mosaic.version = 11 : i64} {
  func.func @prenet_text_kernel(%arg0: i32, %arg1: memref<1x32x128xbf16, #tpu.memory_space<vmem>>, %arg2: memref<128x640xbf16, #tpu.memory_space<vmem>>, %arg3: memref<1x128xf32, #tpu.memory_space<vmem>>, %arg4: memref<128x640xbf16, #tpu.memory_space<vmem>>, %arg5: memref<1x128xf32, #tpu.memory_space<vmem>>, %arg6: memref<128x640xbf16, #tpu.memory_space<vmem>>, %arg7: memref<1x128xf32, #tpu.memory_space<vmem>>, %arg8: memref<128x128xbf16, #tpu.memory_space<vmem>>, %arg9: memref<1x128xf32, #tpu.memory_space<vmem>>, %arg10: memref<1x32x128xbf16, #tpu.memory_space<vmem>>) attributes {dimension_semantics = [#tpu.dimension_semantics<parallel>], iteration_bounds = array<i64: 2>, scalar_prefetch = 0 : i64, scratch_operands = 0 : i64, tpu.core_type = #tpu.core_type<tc>, window_params = [{transform_indices = @transform_0, window_bounds = array<i64: 1, 32, 128>}, {pipeline_mode = #tpu.pipeline_mode<synchronous>, transform_indices = @transform_1, window_bounds = array<i64: 128, 640>}, {pipeline_mode = #tpu.pipeline_mode<synchronous>, transform_indices = @transform_2, window_bounds = array<i64: 1, 128>}, {pipeline_mode = #tpu.pipeline_mode<synchronous>, transform_indices = @transform_3, window_bounds = array<i64: 128, 640>}, {pipeline_mode = #tpu.pipeline_mode<synchronous>, transform_indices = @transform_4, window_bounds = array<i64: 1, 128>}, {pipeline_mode = #tpu.pipeline_mode<synchronous>, transform_indices = @transform_5, window_bounds = array<i64: 128, 640>}, {pipeline_mode = #tpu.pipeline_mode<synchronous>, transform_indices = @transform_6, window_bounds = array<i64: 1, 128>}, {pipeline_mode = #tpu.pipeline_mode<synchronous>, transform_indices = @transform_7, window_bounds = array<i64: 128, 128>}, {pipeline_mode = #tpu.pipeline_mode<synchronous>, transform_indices = @transform_8, window_bounds = array<i64: 1, 128>}, {transform_indices = @transform_9, window_bounds = array<i64: 1, 32, 128>}]} {
    %c0 = arith.constant 0 : index
    %c0_0 = arith.constant 0 : index
    %c0_1 = arith.constant 0 : index
    %0 = vector.load %arg1[%c0, %c0_0, %c0_1] : memref<1x32x128xbf16, #tpu.memory_space<vmem>>, vector<1x32x128xbf16>
    %1 = vector.shape_cast %0 : vector<1x32x128xbf16> to vector<32x128xbf16>
    %2 = tpu.iota {dimensions = array<i32: 0>} : vector<32x1xi32>
    %c16_i32 = arith.constant 16 : i32
    %3 = vector.broadcast %c16_i32 : i32 to vector<32x1xi32>
    %4 = arith.cmpi slt, %2, %3 : vector<32x1xi32>
    %c0_2 = arith.constant 0 : index
    %c0_3 = arith.constant 0 : index
    %5 = vector.load %arg2[%c0_2, %c0_3] : memref<128x640xbf16, #tpu.memory_space<vmem>>, vector<128x640xbf16>
    %cst = arith.constant dense<0.000000e+00> : vector<32x640xf32>
    %6 = tpu.matmul %1, %5, %cst {dimension_numbers = #tpu.dot_dimension_numbers<[1], [0], [0], [1], [0, 0, 1, 1], [], []>} : vector<32x128xbf16>, vector<128x640xbf16>, vector<32x640xf32> -> vector<32x640xf32>
    %7 = vector.extract_strided_slice %6 {offsets = [0, 256], sizes = [32, 128], strides = [1, 1]} : vector<32x640xf32> to vector<32x128xf32>
    %8 = vector.extract_strided_slice %6 {offsets = [0, 0], sizes = [32, 128], strides = [1, 1]} : vector<32x640xf32> to vector<32x128xf32>
    %c2_i32 = arith.constant 2 : i32
    %9 = tpu.dynamic_rotate %8 by %c2_i32 dim 0 : vector<32x128xf32>, i32 -> vector<32x128xf32>
    %10 = arith.addf %7, %9 : vector<32x128xf32>
    %11 = vector.extract_strided_slice %6 {offsets = [0, 128], sizes = [32, 128], strides = [1, 1]} : vector<32x640xf32> to vector<32x128xf32>
    %c1_i32 = arith.constant 1 : i32
    %12 = tpu.dynamic_rotate %11 by %c1_i32 dim 0 : vector<32x128xf32>, i32 -> vector<32x128xf32>
    %13 = arith.addf %10, %12 : vector<32x128xf32>
    %14 = vector.extract_strided_slice %6 {offsets = [0, 384], sizes = [32, 128], strides = [1, 1]} : vector<32x640xf32> to vector<32x128xf32>
    %c31_i32 = arith.constant 31 : i32
    %15 = tpu.dynamic_rotate %14 by %c31_i32 dim 0 : vector<32x128xf32>, i32 -> vector<32x128xf32>
    %16 = arith.addf %13, %15 : vector<32x128xf32>
    %17 = vector.extract_strided_slice %6 {offsets = [0, 512], sizes = [32, 128], strides = [1, 1]} : vector<32x640xf32> to vector<32x128xf32>
    %c30_i32 = arith.constant 30 : i32
    %18 = tpu.dynamic_rotate %17 by %c30_i32 dim 0 : vector<32x128xf32>, i32 -> vector<32x128xf32>
    %19 = arith.addf %16, %18 : vector<32x128xf32>
    %c0_4 = arith.constant 0 : index
    %c0_5 = arith.constant 0 : index
    %20 = vector.load %arg3[%c0_4, %c0_5] : memref<1x128xf32, #tpu.memory_space<vmem>>, vector<1x128xf32>
    %21 = vector.broadcast %20 : vector<1x128xf32> to vector<32x128xf32>
    %22 = arith.addf %19, %21 : vector<32x128xf32>
    %cst_6 = arith.constant 0.000000e+00 : f32
    %23 = vector.broadcast %cst_6 : f32 to vector<32x128xf32>
    %24 = arith.maximumf %22, %23 : vector<32x128xf32>
    %cst_7 = arith.constant 0.000000e+00 : f32
    %25 = vector.shape_cast %4 : vector<32x1xi1> to vector<32x1xi1>
    %26 = vector.broadcast %25 : vector<32x1xi1> to vector<32x128xi1>
    %27 = vector.broadcast %cst_7 : f32 to vector<32x128xf32>
    %28 = arith.select %26, %24, %27 : vector<32x128xi1>, vector<32x128xf32>
    %29 = arith.truncf %28 : vector<32x128xf32> to vector<32x128xbf16>
    %c0_8 = arith.constant 0 : index
    %c0_9 = arith.constant 0 : index
    %30 = vector.load %arg4[%c0_8, %c0_9] : memref<128x640xbf16, #tpu.memory_space<vmem>>, vector<128x640xbf16>
    %cst_10 = arith.constant dense<0.000000e+00> : vector<32x640xf32>
    %31 = tpu.matmul %29, %30, %cst_10 {dimension_numbers = #tpu.dot_dimension_numbers<[1], [0], [0], [1], [0, 0, 1, 1], [], []>} : vector<32x128xbf16>, vector<128x640xbf16>, vector<32x640xf32> -> vector<32x640xf32>
    %32 = vector.extract_strided_slice %31 {offsets = [0, 256], sizes = [32, 128], strides = [1, 1]} : vector<32x640xf32> to vector<32x128xf32>
    %33 = vector.extract_strided_slice %31 {offsets = [0, 0], sizes = [32, 128], strides = [1, 1]} : vector<32x640xf32> to vector<32x128xf32>
    %c2_i32_11 = arith.constant 2 : i32
    %34 = tpu.dynamic_rotate %33 by %c2_i32_11 dim 0 : vector<32x128xf32>, i32 -> vector<32x128xf32>
    %35 = arith.addf %32, %34 : vector<32x128xf32>
    %36 = vector.extract_strided_slice %31 {offsets = [0, 128], sizes = [32, 128], strides = [1, 1]} : vector<32x640xf32> to vector<32x128xf32>
    %c1_i32_12 = arith.constant 1 : i32
    %37 = tpu.dynamic_rotate %36 by %c1_i32_12 dim 0 : vector<32x128xf32>, i32 -> vector<32x128xf32>
    %38 = arith.addf %35, %37 : vector<32x128xf32>
    %39 = vector.extract_strided_slice %31 {offsets = [0, 384], sizes = [32, 128], strides = [1, 1]} : vector<32x640xf32> to vector<32x128xf32>
    %c31_i32_13 = arith.constant 31 : i32
    %40 = tpu.dynamic_rotate %39 by %c31_i32_13 dim 0 : vector<32x128xf32>, i32 -> vector<32x128xf32>
    %41 = arith.addf %38, %40 : vector<32x128xf32>
    %42 = vector.extract_strided_slice %31 {offsets = [0, 512], sizes = [32, 128], strides = [1, 1]} : vector<32x640xf32> to vector<32x128xf32>
    %c30_i32_14 = arith.constant 30 : i32
    %43 = tpu.dynamic_rotate %42 by %c30_i32_14 dim 0 : vector<32x128xf32>, i32 -> vector<32x128xf32>
    %44 = arith.addf %41, %43 : vector<32x128xf32>
    %c0_15 = arith.constant 0 : index
    %c0_16 = arith.constant 0 : index
    %45 = vector.load %arg5[%c0_15, %c0_16] : memref<1x128xf32, #tpu.memory_space<vmem>>, vector<1x128xf32>
    %46 = vector.broadcast %45 : vector<1x128xf32> to vector<32x128xf32>
    %47 = arith.addf %44, %46 : vector<32x128xf32>
    %cst_17 = arith.constant 0.000000e+00 : f32
    %48 = vector.broadcast %cst_17 : f32 to vector<32x128xf32>
    %49 = arith.maximumf %47, %48 : vector<32x128xf32>
    %cst_18 = arith.constant 0.000000e+00 : f32
    %50 = vector.shape_cast %4 : vector<32x1xi1> to vector<32x1xi1>
    %51 = vector.broadcast %50 : vector<32x1xi1> to vector<32x128xi1>
    %52 = vector.broadcast %cst_18 : f32 to vector<32x128xf32>
    %53 = arith.select %51, %49, %52 : vector<32x128xi1>, vector<32x128xf32>
    %54 = arith.truncf %53 : vector<32x128xf32> to vector<32x128xbf16>
    %c0_19 = arith.constant 0 : index
    %c0_20 = arith.constant 0 : index
    %55 = vector.load %arg6[%c0_19, %c0_20] : memref<128x640xbf16, #tpu.memory_space<vmem>>, vector<128x640xbf16>
    %cst_21 = arith.constant dense<0.000000e+00> : vector<32x640xf32>
    %56 = tpu.matmul %54, %55, %cst_21 {dimension_numbers = #tpu.dot_dimension_numbers<[1], [0], [0], [1], [0, 0, 1, 1], [], []>} : vector<32x128xbf16>, vector<128x640xbf16>, vector<32x640xf32> -> vector<32x640xf32>
    %57 = vector.extract_strided_slice %56 {offsets = [0, 256], sizes = [32, 128], strides = [1, 1]} : vector<32x640xf32> to vector<32x128xf32>
    %58 = vector.extract_strided_slice %56 {offsets = [0, 0], sizes = [32, 128], strides = [1, 1]} : vector<32x640xf32> to vector<32x128xf32>
    %c2_i32_22 = arith.constant 2 : i32
    %59 = tpu.dynamic_rotate %58 by %c2_i32_22 dim 0 : vector<32x128xf32>, i32 -> vector<32x128xf32>
    %60 = arith.addf %57, %59 : vector<32x128xf32>
    %61 = vector.extract_strided_slice %56 {offsets = [0, 128], sizes = [32, 128], strides = [1, 1]} : vector<32x640xf32> to vector<32x128xf32>
    %c1_i32_23 = arith.constant 1 : i32
    %62 = tpu.dynamic_rotate %61 by %c1_i32_23 dim 0 : vector<32x128xf32>, i32 -> vector<32x128xf32>
    %63 = arith.addf %60, %62 : vector<32x128xf32>
    %64 = vector.extract_strided_slice %56 {offsets = [0, 384], sizes = [32, 128], strides = [1, 1]} : vector<32x640xf32> to vector<32x128xf32>
    %c31_i32_24 = arith.constant 31 : i32
    %65 = tpu.dynamic_rotate %64 by %c31_i32_24 dim 0 : vector<32x128xf32>, i32 -> vector<32x128xf32>
    %66 = arith.addf %63, %65 : vector<32x128xf32>
    %67 = vector.extract_strided_slice %56 {offsets = [0, 512], sizes = [32, 128], strides = [1, 1]} : vector<32x640xf32> to vector<32x128xf32>
    %c30_i32_25 = arith.constant 30 : i32
    %68 = tpu.dynamic_rotate %67 by %c30_i32_25 dim 0 : vector<32x128xf32>, i32 -> vector<32x128xf32>
    %69 = arith.addf %66, %68 : vector<32x128xf32>
    %c0_26 = arith.constant 0 : index
    %c0_27 = arith.constant 0 : index
    %70 = vector.load %arg7[%c0_26, %c0_27] : memref<1x128xf32, #tpu.memory_space<vmem>>, vector<1x128xf32>
    %71 = vector.broadcast %70 : vector<1x128xf32> to vector<32x128xf32>
    %72 = arith.addf %69, %71 : vector<32x128xf32>
    %cst_28 = arith.constant 0.000000e+00 : f32
    %73 = vector.broadcast %cst_28 : f32 to vector<32x128xf32>
    %74 = arith.maximumf %72, %73 : vector<32x128xf32>
    %cst_29 = arith.constant 0.000000e+00 : f32
    %75 = vector.shape_cast %4 : vector<32x1xi1> to vector<32x1xi1>
    %76 = vector.broadcast %75 : vector<32x1xi1> to vector<32x128xi1>
    %77 = vector.broadcast %cst_29 : f32 to vector<32x128xf32>
    %78 = arith.select %76, %74, %77 : vector<32x128xi1>, vector<32x128xf32>
    %79 = arith.truncf %78 : vector<32x128xf32> to vector<32x128xbf16>
    %c0_30 = arith.constant 0 : index
    %c0_31 = arith.constant 0 : index
    %80 = vector.load %arg8[%c0_30, %c0_31] : memref<128x128xbf16, #tpu.memory_space<vmem>>, vector<128x128xbf16>
    %cst_32 = arith.constant dense<0.000000e+00> : vector<32x128xf32>
    %81 = tpu.matmul %79, %80, %cst_32 {dimension_numbers = #tpu.dot_dimension_numbers<[1], [0], [0], [1], [0, 0, 1, 1], [], []>} : vector<32x128xbf16>, vector<128x128xbf16>, vector<32x128xf32> -> vector<32x128xf32>
    %c0_33 = arith.constant 0 : index
    %c0_34 = arith.constant 0 : index
    %82 = vector.load %arg9[%c0_33, %c0_34] : memref<1x128xf32, #tpu.memory_space<vmem>>, vector<1x128xf32>
    %83 = vector.broadcast %82 : vector<1x128xf32> to vector<32x128xf32>
    %84 = arith.addf %81, %83 : vector<32x128xf32>
    %85 = vector.shape_cast %84 : vector<32x128xf32> to vector<1x32x128xf32>
    %86 = arith.truncf %85 : vector<1x32x128xf32> to vector<1x32x128xbf16>
    %c0_35 = arith.constant 0 : index
    %c0_36 = arith.constant 0 : index
    %c0_37 = arith.constant 0 : index
    %87 = vector.load %arg10[%c0_35, %c0_36, %c0_37] : memref<1x32x128xbf16, #tpu.memory_space<vmem>>, vector<1x32x128xbf16>
    tpu.vector_store %arg10[%c0_35, %c0_36, %c0_37], %86 {strides = array<i32>} : memref<1x32x128xbf16, #tpu.memory_space<vmem>>, vector<1x32x128xbf16>,
    return
  }
  func.func @transform_0(%arg0: i32) -> (i32, i32, i32) {
    %c0_i32 = arith.constant 0 : i32
    %c0_i32_0 = arith.constant 0 : i32
    %c0_i32_1 = arith.constant 0 : i32
    return %arg0, %c0_i32, %c0_i32_0 : i32, i32, i32
  }
  func.func @transform_1(%arg0: i32) -> (i32, i32) {
    %c0_i32 = arith.constant 0 : i32
    %c0_i32_0 = arith.constant 0 : i32
    %c0_i32_1 = arith.constant 0 : i32
    return %c0_i32, %c0_i32_0 : i32, i32
  }
  func.func @transform_2(%arg0: i32) -> (i32, i32) {
    %c0_i32 = arith.constant 0 : i32
    %c0_i32_0 = arith.constant 0 : i32
    %c0_i32_1 = arith.constant 0 : i32
    return %c0_i32, %c0_i32_0 : i32, i32
  }
  func.func @transform_3(%arg0: i32) -> (i32, i32) {
    %c0_i32 = arith.constant 0 : i32
    %c0_i32_0 = arith.constant 0 : i32
    %c0_i32_1 = arith.constant 0 : i32
    return %c0_i32, %c0_i32_0 : i32, i32
  }
  func.func @transform_4(%arg0: i32) -> (i32, i32) {
    %c0_i32 = arith.constant 0 : i32
    %c0_i32_0 = arith.constant 0 : i32
    %c0_i32_1 = arith.constant 0 : i32
    return %c0_i32, %c0_i32_0 : i32, i32
  }
  func.func @transform_5(%arg0: i32) -> (i32, i32) {
    %c0_i32 = arith.constant 0 : i32
    %c0_i32_0 = arith.constant 0 : i32
    %c0_i32_1 = arith.constant 0 : i32
    return %c0_i32, %c0_i32_0 : i32, i32
  }
  func.func @transform_6(%arg0: i32) -> (i32, i32) {
    %c0_i32 = arith.constant 0 : i32
    %c0_i32_0 = arith.constant 0 : i32
    %c0_i32_1 = arith.constant 0 : i32
    return %c0_i32, %c0_i32_0 : i32, i32
  }
  func.func @transform_7(%arg0: i32) -> (i32, i32) {
    %c0_i32 = arith.constant 0 : i32
    %c0_i32_0 = arith.constant 0 : i32
    %c0_i32_1 = arith.constant 0 : i32
    return %c0_i32, %c0_i32_0 : i32, i32
  }
  func.func @transform_8(%arg0: i32) -> (i32, i32) {
    %c0_i32 = arith.constant 0 : i32
    %c0_i32_0 = arith.constant 0 : i32
    %c0_i32_1 = arith.constant 0 : i32
    return %c0_i32, %c0_i32_0 : i32, i32
  }
  func.func @transform_9(%arg0: i32) -> (i32, i32, i32) {
    %c0_i32 = arith.constant 0 : i32
    %c0_i32_0 = arith.constant 0 : i32
    %c0_i32_1 = arith.constant 0 : i32
    return %arg0, %c0_i32, %c0_i32_0 : i32, i32, i32
  }
}

module attributes {stable_mosaic.version = 11 : i64} {
  func.func @prenet_text_kernel(%arg0: i32, %arg1: memref<1x32x128xbf16, #tpu.memory_space<vmem>>, %arg2: memref<128x640xbf16, #tpu.memory_space<vmem>>, %arg3: memref<1x128xf32, #tpu.memory_space<vmem>>, %arg4: memref<128x640xbf16, #tpu.memory_space<vmem>>, %arg5: memref<1x128xf32, #tpu.memory_space<vmem>>, %arg6: memref<128x640xbf16, #tpu.memory_space<vmem>>, %arg7: memref<1x128xf32, #tpu.memory_space<vmem>>, %arg8: memref<128x128xbf16, #tpu.memory_space<vmem>>, %arg9: memref<1x128xf32, #tpu.memory_space<vmem>>, %arg10: memref<1x32x128xbf16, #tpu.memory_space<vmem>>) attributes {dimension_semantics = [#tpu.dimension_semantics<parallel>], iteration_bounds = array<i64: 2>, scalar_prefetch = 0 : i64, scratch_operands = 0 : i64, tpu.core_type = #tpu.core_type<tc>, window_params = [{transform_indices = @transform_0, window_bounds = array<i64: 1, 32, 128>}, {pipeline_mode = #tpu.pipeline_mode<synchronous>, transform_indices = @transform_1, window_bounds = array<i64: 128, 640>}, {pipeline_mode = #tpu.pipeline_mode<synchronous>, transform_indices = @transform_2, window_bounds = array<i64: 1, 128>}, {pipeline_mode = #tpu.pipeline_mode<synchronous>, transform_indices = @transform_3, window_bounds = array<i64: 128, 640>}, {pipeline_mode = #tpu.pipeline_mode<synchronous>, transform_indices = @transform_4, window_bounds = array<i64: 1, 128>}, {pipeline_mode = #tpu.pipeline_mode<synchronous>, transform_indices = @transform_5, window_bounds = array<i64: 128, 640>}, {pipeline_mode = #tpu.pipeline_mode<synchronous>, transform_indices = @transform_6, window_bounds = array<i64: 1, 128>}, {pipeline_mode = #tpu.pipeline_mode<synchronous>, transform_indices = @transform_7, window_bounds = array<i64: 128, 128>}, {pipeline_mode = #tpu.pipeline_mode<synchronous>, transform_indices = @transform_8, window_bounds = array<i64: 1, 128>}, {transform_indices = @transform_9, window_bounds = array<i64: 1, 32, 128>}]} {
    %c0 = arith.constant 0 : index
    %c0_0 = arith.constant 0 : index
    %c0_1 = arith.constant 0 : index
    %0 = vector.load %arg1[%c0, %c0_0, %c0_1] : memref<1x32x128xbf16, #tpu.memory_space<vmem>>, vector<1x32x128xbf16>
    %1 = vector.shape_cast %0 : vector<1x32x128xbf16> to vector<32x128xbf16>
    %2 = tpu.iota {dimensions = array<i32: 0>} : vector<32x1xi32>
    %c16_i32 = arith.constant 16 : i32
    %3 = vector.broadcast %c16_i32 : i32 to vector<32x1xi32>
    %4 = arith.cmpi slt, %2, %3 : vector<32x1xi32>
    %c0_2 = arith.constant 0 : index
    %c0_3 = arith.constant 0 : index
    %5 = vector.load %arg2[%c0_2, %c0_3] : memref<128x640xbf16, #tpu.memory_space<vmem>>, vector<128x640xbf16>
    %cst = arith.constant dense<0.000000e+00> : vector<32x640xf32>
    %6 = tpu.matmul %1, %5, %cst {dimension_numbers = #tpu.dot_dimension_numbers<[1], [0], [0], [1], [0, 0, 1, 1], [], []>} : vector<32x128xbf16>, vector<128x640xbf16>, vector<32x640xf32> -> vector<32x640xf32>
    %7 = vector.extract_strided_slice %6 {offsets = [0, 256], sizes = [32, 128], strides = [1, 1]} : vector<32x640xf32> to vector<32x128xf32>
    %8 = vector.extract_strided_slice %6 {offsets = [0, 0], sizes = [32, 128], strides = [1, 1]} : vector<32x640xf32> to vector<32x128xf32>
    %c2_i32 = arith.constant 2 : i32
    %9 = tpu.dynamic_rotate %8 by %c2_i32 dim 0 : vector<32x128xf32>, i32 -> vector<32x128xf32>
    %10 = arith.addf %7, %9 : vector<32x128xf32>
    %11 = vector.extract_strided_slice %6 {offsets = [0, 128], sizes = [32, 128], strides = [1, 1]} : vector<32x640xf32> to vector<32x128xf32>
    %c1_i32 = arith.constant 1 : i32
    %12 = tpu.dynamic_rotate %11 by %c1_i32 dim 0 : vector<32x128xf32>, i32 -> vector<32x128xf32>
    %13 = arith.addf %10, %12 : vector<32x128xf32>
    %14 = vector.extract_strided_slice %6 {offsets = [0, 384], sizes = [32, 128], strides = [1, 1]} : vector<32x640xf32> to vector<32x128xf32>
    %c31_i32 = arith.constant 31 : i32
    %15 = tpu.dynamic_rotate %14 by %c31_i32 dim 0 : vector<32x128xf32>, i32 -> vector<32x128xf32>
    %16 = arith.addf %13, %15 : vector<32x128xf32>
    %17 = vector.extract_strided_slice %6 {offsets = [0, 512], sizes = [32, 128], strides = [1, 1]} : vector<32x640xf32> to vector<32x128xf32>
    %c30_i32 = arith.constant 30 : i32
    %18 = tpu.dynamic_rotate %17 by %c30_i32 dim 0 : vector<32x128xf32>, i32 -> vector<32x128xf32>
    %19 = arith.addf %16, %18 : vector<32x128xf32>
    %c0_4 = arith.constant 0 : index
    %c0_5 = arith.constant 0 : index
    %20 = vector.load %arg3[%c0_4, %c0_5] : memref<1x128xf32, #tpu.memory_space<vmem>>, vector<1x128xf32>
    %21 = vector.broadcast %20 : vector<1x128xf32> to vector<32x128xf32>
    %22 = arith.addf %19, %21 : vector<32x128xf32>
    %cst_6 = arith.constant 0.000000e+00 : f32
    %23 = vector.broadcast %cst_6 : f32 to vector<32x128xf32>
    %24 = arith.maximumf %22, %23 : vector<32x128xf32>
    %cst_7 = arith.constant 0.000000e+00 : f32
    %25 = vector.shape_cast %4 : vector<32x1xi1> to vector<32x1xi1>
    %26 = vector.broadcast %25 : vector<32x1xi1> to vector<32x128xi1>
    %27 = vector.broadcast %cst_7 : f32 to vector<32x128xf32>
    %28 = arith.select %26, %24, %27 : vector<32x128xi1>, vector<32x128xf32>
    %29 = arith.truncf %28 : vector<32x128xf32> to vector<32x128xbf16>
    %c0_8 = arith.constant 0 : index
    %c0_9 = arith.constant 0 : index
    %30 = vector.load %arg4[%c0_8, %c0_9] : memref<128x640xbf16, #tpu.memory_space<vmem>>, vector<128x640xbf16>
    %cst_10 = arith.constant dense<0.000000e+00> : vector<32x640xf32>
    %31 = tpu.matmul %29, %30, %cst_10 {dimension_numbers = #tpu.dot_dimension_numbers<[1], [0], [0], [1], [0, 0, 1, 1], [], []>} : vector<32x128xbf16>, vector<128x640xbf16>, vector<32x640xf32> -> vector<32x640xf32>
    %32 = vector.extract_strided_slice %31 {offsets = [0, 256], sizes = [32, 128], strides = [1, 1]} : vector<32x640xf32> to vector<32x128xf32>
    %33 = vector.extract_strided_slice %31 {offsets = [0, 0], sizes = [32, 128], strides = [1, 1]} : vector<32x640xf32> to vector<32x128xf32>
    %c2_i32_11 = arith.constant 2 : i32
    %34 = tpu.dynamic_rotate %33 by %c2_i32_11 dim 0 : vector<32x128xf32>, i32 -> vector<32x128xf32>
    %35 = arith.addf %32, %34 : vector<32x128xf32>
    %36 = vector.extract_strided_slice %31 {offsets = [0, 128], sizes = [32, 128], strides = [1, 1]} : vector<32x640xf32> to vector<32x128xf32>
    %c1_i32_12 = arith.constant 1 : i32
    %37 = tpu.dynamic_rotate %36 by %c1_i32_12 dim 0 : vector<32x128xf32>, i32 -> vector<32x128xf32>
    %38 = arith.addf %35, %37 : vector<32x128xf32>
    %39 = vector.extract_strided_slice %31 {offsets = [0, 384], sizes = [32, 128], strides = [1, 1]} : vector<32x640xf32> to vector<32x128xf32>
    %c31_i32_13 = arith.constant 31 : i32
    %40 = tpu.dynamic_rotate %39 by %c31_i32_13 dim 0 : vector<32x128xf32>, i32 -> vector<32x128xf32>
    %41 = arith.addf %38, %40 : vector<32x128xf32>
    %42 = vector.extract_strided_slice %31 {offsets = [0, 512], sizes = [32, 128], strides = [1, 1]} : vector<32x640xf32> to vector<32x128xf32>
    %c30_i32_14 = arith.constant 30 : i32
    %43 = tpu.dynamic_rotate %42 by %c30_i32_14 dim 0 : vector<32x128xf32>, i32 -> vector<32x128xf32>
    %44 = arith.addf %41, %43 : vector<32x128xf32>
    %c0_15 = arith.constant 0 : index
    %c0_16 = arith.constant 0 : index
    %45 = vector.load %arg5[%c0_15, %c0_16] : memref<1x128xf32, #tpu.memory_space<vmem>>, vector<1x128xf32>
    %46 = vector.broadcast %45 : vector<1x128xf32> to vector<32x128xf32>
    %47 = arith.addf %44, %46 : vector<32x128xf32>
    %cst_17 = arith.constant 0.000000e+00 : f32
    %48 = vector.broadcast %cst_17 : f32 to vector<32x128xf32>
    %49 = arith.maximumf %47, %48 : vector<32x128xf32>
    %cst_18 = arith.constant 0.000000e+00 : f32
    %50 = vector.shape_cast %4 : vector<32x1xi1> to vector<32x1xi1>
    %51 = vector.broadcast %50 : vector<32x1xi1> to vector<32x128xi1>
    %52 = vector.broadcast %cst_18 : f32 to vector<32x128xf32>
    %53 = arith.select %51, %49, %52 : vector<32x128xi1>, vector<32x128xf32>
    %54 = arith.truncf %53 : vector<32x128xf32> to vector<32x128xbf16>
    %c0_19 = arith.constant 0 : index
    %c0_20 = arith.constant 0 : index
    %55 = vector.load %arg6[%c0_19, %c0_20] : memref<128x640xbf16, #tpu.memory_space<vmem>>, vector<128x640xbf16>
    %cst_21 = arith.constant dense<0.000000e+00> : vector<32x640xf32>
    %56 = tpu.matmul %54, %55, %cst_21 {dimension_numbers = #tpu.dot_dimension_numbers<[1], [0], [0], [1], [0, 0, 1, 1], [], []>} : vector<32x128xbf16>, vector<128x640xbf16>, vector<32x640xf32> -> vector<32x640xf32>
    %57 = vector.extract_strided_slice %56 {offsets = [0, 256], sizes = [32, 128], strides = [1, 1]} : vector<32x640xf32> to vector<32x128xf32>
    %58 = vector.extract_strided_slice %56 {offsets = [0, 0], sizes = [32, 128], strides = [1, 1]} : vector<32x640xf32> to vector<32x128xf32>
    %c2_i32_22 = arith.constant 2 : i32
    %59 = tpu.dynamic_rotate %58 by %c2_i32_22 dim 0 : vector<32x128xf32>, i32 -> vector<32x128xf32>
    %60 = arith.addf %57, %59 : vector<32x128xf32>
    %61 = vector.extract_strided_slice %56 {offsets = [0, 128], sizes = [32, 128], strides = [1, 1]} : vector<32x640xf32> to vector<32x128xf32>
    %c1_i32_23 = arith.constant 1 : i32
    %62 = tpu.dynamic_rotate %61 by %c1_i32_23 dim 0 : vector<32x128xf32>, i32 -> vector<32x128xf32>
    %63 = arith.addf %60, %62 : vector<32x128xf32>
    %64 = vector.extract_strided_slice %56 {offsets = [0, 384], sizes = [32, 128], strides = [1, 1]} : vector<32x640xf32> to vector<32x128xf32>
    %c31_i32_24 = arith.constant 31 : i32
    %65 = tpu.dynamic_rotate %64 by %c31_i32_24 dim 0 : vector<32x128xf32>, i32 -> vector<32x128xf32>
    %66 = arith.addf %63, %65 : vector<32x128xf32>
    %67 = vector.extract_strided_slice %56 {offsets = [0, 512], sizes = [32, 128], strides = [1, 1]} : vector<32x640xf32> to vector<32x128xf32>
    %c30_i32_25 = arith.constant 30 : i32
    %68 = tpu.dynamic_rotate %67 by %c30_i32_25 dim 0 : vector<32x128xf32>, i32 -> vector<32x128xf32>
    %69 = arith.addf %66, %68 : vector<32x128xf32>
    %c0_26 = arith.constant 0 : index
    %c0_27 = arith.constant 0 : index
    %70 = vector.load %arg7[%c0_26, %c0_27] : memref<1x128xf32, #tpu.memory_space<vmem>>, vector<1x128xf32>
    %71 = vector.broadcast %70 : vector<1x128xf32> to vector<32x128xf32>
    %72 = arith.addf %69, %71 : vector<32x128xf32>
    %cst_28 = arith.constant 0.000000e+00 : f32
    %73 = vector.broadcast %cst_28 : f32 to vector<32x128xf32>
    %74 = arith.maximumf %72, %73 : vector<32x128xf32>
    %cst_29 = arith.constant 0.000000e+00 : f32
    %75 = vector.shape_cast %4 : vector<32x1xi1> to vector<32x1xi1>
    %76 = vector.broadcast %75 : vector<32x1xi1> to vector<32x128xi1>
    %77 = vector.broadcast %cst_29 : f32 to vector<32x128xf32>
    %78 = arith.select %76, %74, %77 : vector<32x128xi1>, vector<32x128xf32>
    %79 = arith.truncf %78 : vector<32x128xf32> to vector<32x128xbf16>
    %c0_30 = arith.constant 0 : index
    %c0_31 = arith.constant 0 : index
    %80 = vector.load %arg8[%c0_30, %c0_31] : memref<128x128xbf16, #tpu.memory_space<vmem>>, vector<128x128xbf16>
    %cst_32 = arith.constant dense<0.000000e+00> : vector<32x128xf32>
    %81 = tpu.matmul %79, %80, %cst_32 {dimension_numbers = #tpu.dot_dimension_numbers<[1], [0], [0], [1], [0, 0, 1, 1], [], []>} : vector<32x128xbf16>, vector<128x128xbf16>, vector<32x128xf32> -> vector<32x128xf32>
    %c0_33 = arith.constant 0 : index
    %c0_34 = arith.constant 0 : index
    %82 = vector.load %arg9[%c0_33, %c0_34] : memref<1x128xf32, #tpu.memory_space<vmem>>, vector<1x128xf32>
    %83 = vector.broadcast %82 : vector<1x128xf32> to vector<32x128xf32>
    %84 = arith.addf %81, %83 : vector<32x128xf32>
    %85 = vector.shape_cast %84 : vector<32x128xf32> to vector<1x32x128xf32>
    %86 = arith.truncf %85 : vector<1x32x128xf32> to vector<1x32x128xbf16>
    %c0_35 = arith.constant 0 : index
    %c0_36 = arith.constant 0 : index
    %c0_37 = arith.constant 0 : index
    %87 = vector.load %arg10[%c0_35, %c0_36, %c0_37] : memref<1x32x128xbf16, #tpu.memory_space<vmem>>, vector<1x32x128xbf16>
    tpu.vector_store %arg10[%c0_35, %c0_36, %c0_37], %86 {strides = array<i32>} : memref<1x32x128xbf16, #tpu.memory_space<vmem>>, vector<1x32x128xbf16>,
    return
  }
  func.func @transform_0(%arg0: i32) -> (i32, i32, i32) {
    %c0_i32 = arith.constant 0 : i32
    %c0_i32_0 = arith.constant 0 : i32
    %c0_i32_1 = arith.constant 0 : i32
    return %arg0, %c0_i32, %c0_i32_0 : i32, i32, i32
  }
  func.func @transform_1(%arg0: i32) -> (i32, i32) {
    %c0_i32 = arith.constant 0 : i32
    %c0_i32_0 = arith.constant 0 : i32
    %c0_i32_1 = arith.constant 0 : i32
    return %c0_i32, %c0_i32_0 : i32, i32
  }
  func.func @transform_2(%arg0: i32) -> (i32, i32) {
    %c0_i32 = arith.constant 0 : i32
    %c0_i32_0 = arith.constant 0 : i32
    %c0_i32_1 = arith.constant 0 : i32
    return %c0_i32, %c0_i32_0 : i32, i32
  }
  func.func @transform_3(%arg0: i32) -> (i32, i32) {
    %c0_i32 = arith.constant 0 : i32
    %c0_i32_0 = arith.constant 0 : i32
    %c0_i32_1 = arith.constant 0 : i32
    return %c0_i32, %c0_i32_0 : i32, i32
  }
  func.func @transform_4(%arg0: i32) -> (i32, i32) {
    %c0_i32 = arith.constant 0 : i32
    %c0_i32_0 = arith.constant 0 : i32
    %c0_i32_1 = arith.constant 0 : i32
    return %c0_i32, %c0_i32_0 : i32, i32
  }
  func.func @transform_5(%arg0: i32) -> (i32, i32) {
    %c0_i32 = arith.constant 0 : i32
    %c0_i32_0 = arith.constant 0 : i32
    %c0_i32_1 = arith.constant 0 : i32
    return %c0_i32, %c0_i32_0 : i32, i32
  }
  func.func @transform_6(%arg0: i32) -> (i32, i32) {
    %c0_i32 = arith.constant 0 : i32
    %c0_i32_0 = arith.constant 0 : i32
    %c0_i32_1 = arith.constant 0 : i32
    return %c0_i32, %c0_i32_0 : i32, i32
  }
  func.func @transform_7(%arg0: i32) -> (i32, i32) {
    %c0_i32 = arith.constant 0 : i32
    %c0_i32_0 = arith.constant 0 : i32
    %c0_i32_1 = arith.constant 0 : i32
    return %c0_i32, %c0_i32_0 : i32, i32
  }
  func.func @transform_8(%arg0: i32) -> (i32, i32) {
    %c0_i32 = arith.constant 0 : i32
    %c0_i32_0 = arith.constant 0 : i32
    %c0_i32_1 = arith.constant 0 : i32
    return %c0_i32, %c0_i32_0 : i32, i32
  }
  func.func @transform_9(%arg0: i32) -> (i32, i32, i32) {
    %c0_i32 = arith.constant 0 : i32
    %c0_i32_0 = arith.constant 0 : i32
    %c0_i32_1 = arith.constant 0 : i32
    return %arg0, %c0_i32, %c0_i32_0 : i32, i32, i32
  }
}

</mosaic_0001>

<llo_original>
// kernel: tpu_custom_call.1
$region0: #{tpu_custom_call.1}
  #allocation0 [shape = 'u32[]', space=smem, size = 0x4, offset = 0x4, fixed_abs, tag = 'smem constant byte address 0x4 - core index']
  #allocation1 [shape = 'u32[144,128]{1,0:T(1,128)}', space=vmem, size = 0x12000, scoped, tag = 'internal scratch']
  %s0 = inlined_call_operand.hbm [shape: bf16[2,32,128], index: 0, kind: input, shape index: {}]
  %s1 = inlined_call_operand.hbm [shape: bf16[128,640], index: 1, kind: input, shape index: {}]
  %s2 = inlined_call_operand.vmem [shape: f32[1,128], index: 2, kind: input, shape index: {}]
  %s3 = inlined_call_operand.hbm [shape: bf16[128,640], index: 3, kind: input, shape index: {}]
  %s4 = inlined_call_operand.vmem [shape: f32[1,128], index: 4, kind: input, shape index: {}]
  %s5 = inlined_call_operand.hbm [shape: bf16[128,640], index: 5, kind: input, shape index: {}]
  %s6 = inlined_call_operand.vmem [shape: f32[1,128], index: 6, kind: input, shape index: {}]
  %s7 = inlined_call_operand.hbm [shape: bf16[128,128], index: 7, kind: input, shape index: {}]
  %s8 = inlined_call_operand.vmem [shape: f32[1,128], index: 8, kind: input, shape index: {}]
  %s9 = inlined_call_operand.hbm [shape: bf16[2,32,128], index: 9, kind: output, shape index: {}]
  %s10 = sld [smem:[#allocation0]]
  $region89: #{tpu_custom_call.1} parent=0
    _
  %s12 = ssub.s32 1, %s10
  %s13 = scalar_select 0, %s12, %s10
  $region1: #{tpu_custom_call.1} parent=0
    #allocation2 [shape = 'u8[16384]{0}', space=vmem, size = 0x4000, scoped, tag = 'input window, operand 0']
    #allocation3 [shape = 's32[2]{0}', space=sflag, size = 0x8, scoped, tag = 'scoped memory for tpu_custom_call.1']
    #allocation4 [shape = 's32[2]{0}', space=sflag, size = 0x8, scoped, tag = 'scoped memory for tpu_custom_call.1']
    #allocation5 [shape = 'u8[163840]{0}', space=vmem, size = 0x28000, scoped, tag = 'input window, operand 1, single buffered']
    #allocation6 [shape = 's32[1]{0}', space=sflag, size = 0x4, scoped, tag = 'scoped memory for tpu_custom_call.1']
    #allocation7 [shape = 'u8[163840]{0}', space=vmem, size = 0x28000, scoped, tag = 'input window, operand 3, single buffered']
    #allocation8 [shape = 'u8[163840]{0}', space=vmem, size = 0x28000, scoped, tag = 'input window, operand 5, single buffered']
    #allocation9 [shape = 's32[1]{0}', space=sflag, size = 0x4, scoped, tag = 'scoped memory for tpu_custom_call.1']
    #allocation10 [shape = 'u8[32768]{0}', space=vmem, size = 0x8000, scoped, tag = 'input window, operand 7, single buffered']
    #allocation11 [shape = 'u8[16384]{0}', space=vmem, size = 0x4000, scoped, tag = 'output window, operand 0']
    %14 = vsyncpa [#allocation3], 0
    %s15 = scalar_lea.sflag [#allocation3], 1
    %16 = vsyncpa %s15, 0
    %17 = vsyncpa [#allocation6], 0
    %18 = vsyncpa [#allocation9], 0
    %19 = vsyncpa [#allocation4], 0
    %s20 = scalar_lea.sflag [#allocation4], 1
    %21 = vsyncpa %s20, 0
    loop: start=0, step=1, limit=4
    $region2: #{tpu_custom_call.1} parent=1 // loop_pre_header
      _
    $region3: #{tpu_custom_call.1} parent=1 // loop_header
      %s23 = sphi 0, %s27
      %p24 = scmp.ge.s32.totalorder %s23, 4
      %s33 = sphi 0, %s35
      %s36 = sphi 0, %s33
      %s37 = sphi 0, %s36
      %s53 = sphi 0, %s37
      %s57 = sphi 0, %s57
      %s59 = sphi 0, %s57
      %s60 = sphi 0, %s59
      %s74 = sphi 0, %s60
      %s78 = sphi 0, %s78
      %s80 = sphi 0, %s78
      %s81 = sphi 0, %s80
      %s95 = sphi 0, %s81
      %s99 = sphi 0, %s99
      %s101 = sphi 0, %s99
      %s102 = sphi 0, %s101
      %s116 = sphi 0, %s102
      %s120 = sphi 0, %s120
      %s122 = sphi 0, %s120
      %s123 = sphi 0, %s122
      %s137 = sphi 0, %s123
      %s141 = sphi 0, %s141
      %s143 = sphi 0, %s141
      %s144 = sphi 0, %s143
      %s158 = sphi 0, %s144
      %s162 = sphi 0, %s162
      %s164 = sphi 0, %s162
      %s165 = sphi 0, %s164
      %s179 = sphi 0, %s165
      %s183 = sphi 0, %s183
      %s185 = sphi 0, %s183
      %s186 = sphi 0, %s185
      %s200 = sphi 0, %s186
      %s204 = sphi 0, %s204
      %s206 = sphi 0, %s204
      %s207 = sphi 0, %s206
      %s221 = sphi 0, %s207
      %s227 = sphi 0, %s229
      %s230 = sphi 0, %s227
      %s231 = sphi 0, %s230
      %s247 = sphi 0, %s231
    $region4: #{tpu_custom_call.1} parent=1 // loop_header_branch
      %26 = sbr.rel (%p24) target = $region8
    $region5: #{tpu_custom_call.1} parent=1 // loop_body
      %s28 = ssub.s32 %s23, 1
      %s29 = ssub.s32 %s23, 2
      %s30 = sadd.s32 %s23, 1
      %s31 = ssub.s32 %s23, %s30
      %p32 = scmp.eq.s32.totalorder %s31, 0
      %s34 = sadd.s32 %s33, 1
      %s35 = scalar_select %p32, %s33, %s34
      %p38 = pneg %p32
      %p39 = scmp.eq.s32.totalorder %s23, 1
      %p40 = por %p38, %p39
      %p41 = scmp.ne.s32.totalorder %s33, %s36
      %p42 = scmp.eq.s32.totalorder %s23, 0
      %p43 = por %p41, %p42
      %p44 = scmp.ne.s32.totalorder %s33, %s36
      %p45 = scmp.eq.s32.totalorder %s28, 1
      %p46 = por %p44, %p45
      %p47 = scmp.ne.s32.totalorder %s36, %s37
      %p48 = scmp.eq.s32.totalorder %s28, 0
      %p49 = por %p47, %p48
      %p50 = scmp.ne.s32.totalorder %s36, %s37
      %p51 = scmp.eq.s32.totalorder %s29, 1
      %p52 = por %p50, %p51
      %p54 = scmp.ne.s32.totalorder %s37, %s53
      %p55 = scmp.eq.s32.totalorder %s29, 0
      %p56 = por %p54, %p55
      %s58 = sadd.s32 %s57, 1
      %p61 = scmp.eq.s32.totalorder %s23, 1
      %p62 = scmp.ne.s32.totalorder %s57, %s59
      %p63 = scmp.eq.s32.totalorder %s23, 0
      %p64 = por %p62, %p63
      %p65 = scmp.ne.s32.totalorder %s57, %s59
      %p66 = scmp.eq.s32.totalorder %s28, 1
      %p67 = por %p65, %p66
      %p68 = scmp.ne.s32.totalorder %s59, %s60
      %p69 = scmp.eq.s32.totalorder %s28, 0
      %p70 = por %p68, %p69
      %p71 = scmp.ne.s32.totalorder %s59, %s60
      %p72 = scmp.eq.s32.totalorder %s29, 1
      %p73 = por %p71, %p72
      %p75 = scmp.ne.s32.totalorder %s60, %s74
      %p76 = scmp.eq.s32.totalorder %s29, 0
      %p77 = por %p75, %p76
      %s79 = sadd.s32 %s78, 1
      %p82 = scmp.eq.s32.totalorder %s23, 1
      %p83 = scmp.ne.s32.totalorder %s78, %s80
      %p84 = scmp.eq.s32.totalorder %s23, 0
      %p85 = por %p83, %p84
      %p86 = scmp.ne.s32.totalorder %s78, %s80
      %p87 = scmp.eq.s32.totalorder %s28, 1
      %p88 = por %p86, %p87
      %p89 = scmp.ne.s32.totalorder %s80, %s81
      %p90 = scmp.eq.s32.totalorder %s28, 0
      %p91 = por %p89, %p90
      %p92 = scmp.ne.s32.totalorder %s80, %s81
      %p93 = scmp.eq.s32.totalorder %s29, 1
      %p94 = por %p92, %p93
      %p96 = scmp.ne.s32.totalorder %s81, %s95
      %p97 = scmp.eq.s32.totalorder %s29, 0
      %p98 = por %p96, %p97
      %s100 = sadd.s32 %s99, 1
      %p103 = scmp.eq.s32.totalorder %s23, 1
      %p104 = scmp.ne.s32.totalorder %s99, %s101
      %p105 = scmp.eq.s32.totalorder %s23, 0
      %p106 = por %p104, %p105
      %p107 = scmp.ne.s32.totalorder %s99, %s101
      %p108 = scmp.eq.s32.totalorder %s28, 1
      %p109 = por %p107, %p108
      %p110 = scmp.ne.s32.totalorder %s101, %s102
      %p111 = scmp.eq.s32.totalorder %s28, 0
      %p112 = por %p110, %p111
      %p113 = scmp.ne.s32.totalorder %s101, %s102
      %p114 = scmp.eq.s32.totalorder %s29, 1
      %p115 = por %p113, %p114
      %p117 = scmp.ne.s32.totalorder %s102, %s116
      %p118 = scmp.eq.s32.totalorder %s29, 0
      %p119 = por %p117, %p118
      %s121 = sadd.s32 %s120, 1
      %p124 = scmp.eq.s32.totalorder %s23, 1
      %p125 = scmp.ne.s32.totalorder %s120, %s122
      %p126 = scmp.eq.s32.totalorder %s23, 0
      %p127 = por %p125, %p126
      %p128 = scmp.ne.s32.totalorder %s120, %s122
      %p129 = scmp.eq.s32.totalorder %s28, 1
      %p130 = por %p128, %p129
      %p131 = scmp.ne.s32.totalorder %s122, %s123
      %p132 = scmp.eq.s32.totalorder %s28, 0
      %p133 = por %p131, %p132
      %p134 = scmp.ne.s32.totalorder %s122, %s123
      %p135 = scmp.eq.s32.totalorder %s29, 1
      %p136 = por %p134, %p135
      %p138 = scmp.ne.s32.totalorder %s123, %s137
      %p139 = scmp.eq.s32.totalorder %s29, 0
      %p140 = por %p138, %p139
      %s142 = sadd.s32 %s141, 1
      %p145 = scmp.eq.s32.totalorder %s23, 1
      %p146 = scmp.ne.s32.totalorder %s141, %s143
      %p147 = scmp.eq.s32.totalorder %s23, 0
      %p148 = por %p146, %p147
      %p149 = scmp.ne.s32.totalorder %s141, %s143
      %p150 = scmp.eq.s32.totalorder %s28, 1
      %p151 = por %p149, %p150
      %p152 = scmp.ne.s32.totalorder %s143, %s144
      %p153 = scmp.eq.s32.totalorder %s28, 0
      %p154 = por %p152, %p153
      %p155 = scmp.ne.s32.totalorder %s143, %s144
      %p156 = scmp.eq.s32.totalorder %s29, 1
      %p157 = por %p155, %p156
      %p159 = scmp.ne.s32.totalorder %s144, %s158
      %p160 = scmp.eq.s32.totalorder %s29, 0
      %p161 = por %p159, %p160
      %s163 = sadd.s32 %s162, 1
      %p166 = scmp.eq.s32.totalorder %s23, 1
      %p167 = scmp.ne.s32.totalorder %s162, %s164
      %p168 = scmp.eq.s32.totalorder %s23, 0
      %p169 = por %p167, %p168
      %p170 = scmp.ne.s32.totalorder %s162, %s164
      %p171 = scmp.eq.s32.totalorder %s28, 1
      %p172 = por %p170, %p171
      %p173 = scmp.ne.s32.totalorder %s164, %s165
      %p174 = scmp.eq.s32.totalorder %s28, 0
      %p175 = por %p173, %p174
      %p176 = scmp.ne.s32.totalorder %s164, %s165
      %p177 = scmp.eq.s32.totalorder %s29, 1
      %p178 = por %p176, %p177
      %p180 = scmp.ne.s32.totalorder %s165, %s179
      %p181 = scmp.eq.s32.totalorder %s29, 0
      %p182 = por %p180, %p181
      %s184 = sadd.s32 %s183, 1
      %p187 = scmp.eq.s32.totalorder %s23, 1
      %p188 = scmp.ne.s32.totalorder %s183, %s185
      %p189 = scmp.eq.s32.totalorder %s23, 0
      %p190 = por %p188, %p189
      %p191 = scmp.ne.s32.totalorder %s183, %s185
      %p192 = scmp.eq.s32.totalorder %s28, 1
      %p193 = por %p191, %p192
      %p194 = scmp.ne.s32.totalorder %s185, %s186
      %p195 = scmp.eq.s32.totalorder %s28, 0
      %p196 = por %p194, %p195
      %p197 = scmp.ne.s32.totalorder %s185, %s186
      %p198 = scmp.eq.s32.totalorder %s29, 1
      %p199 = por %p197, %p198
      %p201 = scmp.ne.s32.totalorder %s186, %s200
      %p202 = scmp.eq.s32.totalorder %s29, 0
      %p203 = por %p201, %p202
      %s205 = sadd.s32 %s204, 1
      %p208 = scmp.eq.s32.totalorder %s23, 1
      %p209 = scmp.ne.s32.totalorder %s204, %s206
      %p210 = scmp.eq.s32.totalorder %s23, 0
      %p211 = por %p209, %p210
      %p212 = scmp.ne.s32.totalorder %s204, %s206
      %p213 = scmp.eq.s32.totalorder %s28, 1
      %p214 = por %p212, %p213
      %p215 = scmp.ne.s32.totalorder %s206, %s207
      %p216 = scmp.eq.s32.totalorder %s28, 0
      %p217 = por %p215, %p216
      %p218 = scmp.ne.s32.totalorder %s206, %s207
      %p219 = scmp.eq.s32.totalorder %s29, 1
      %p220 = por %p218, %p219
      %p222 = scmp.ne.s32.totalorder %s207, %s221
      %p223 = scmp.eq.s32.totalorder %s29, 0
      %p224 = por %p222, %p223
      %s225 = ssub.s32 %s23, %s30
      %p226 = scmp.eq.s32.totalorder %s225, 0
      %s228 = sadd.s32 %s227, 1
      %s229 = scalar_select %p226, %s227, %s228
      %p232 = pneg %p226
      %p233 = scmp.eq.s32.totalorder %s23, 1
      %p234 = por %p232, %p233
      %p235 = scmp.ne.s32.totalorder %s227, %s230
      %p236 = scmp.eq.s32.totalorder %s23, 0
      %p237 = por %p235, %p236
      %p238 = scmp.ne.s32.totalorder %s227, %s230
      %p239 = scmp.eq.s32.totalorder %s28, 1
      %p240 = por %p238, %p239
      %p241 = scmp.ne.s32.totalorder %s230, %s231
      %p242 = scmp.eq.s32.totalorder %s28, 0
      %p243 = por %p241, %p242
      %p244 = scmp.ne.s32.totalorder %s230, %s231
      %p245 = scmp.eq.s32.totalorder %s29, 1
      %p246 = por %p244, %p245
      %p248 = scmp.ne.s32.totalorder %s231, %s247
      %p249 = scmp.eq.s32.totalorder %s29, 0
      %p250 = por %p248, %p249
      %p251 = scmp.le.s32.totalorder 1, %s23
      %p252 = scmp.lt.s32.totalorder %s23, 3
      %p253 = pnand %p251, %p252
      %p254 = pneg %p253
      // Predicated region
      $region9: #{tpu_custom_call.1} parent=5 // pred_check
        _
      $region10: #{tpu_custom_call.1} parent=5 // pred_check_branch
        %256 = sbr.rel (%p253) target = $region12
      $region11: #{tpu_custom_call.1} parent=5 // pred_region
        %s257 = ssub.s32 %s23, 1
        // Predicated region
        $region13: #{tpu_custom_call.1} parent=11 // pred_check
          %p258 = pneg %p70
        $region14: #{tpu_custom_call.1} parent=11 // pred_check_branch
          %260 = sbr.rel (%p258) target = $region16
        $region15: #{tpu_custom_call.1} parent=11 // pred_region
          %s262 = ssub.s32 5120, 5120
          %263 = vsyncadd [#allocation6], %s262
          %s264 = sshll.u32 [#allocation5], 4
          %s265 = int_to_ptr.vmem [resolvable:$true] %s264
          %270 = dma.hbm_to_vmem [thread:$0]  %s1, 5120, %s265, [#allocation6], 320, 320, 20
        $region16: #{tpu_custom_call.1} parent=11 // pred_fallthru
          _
        // Predicated region
        $region17: #{tpu_custom_call.1} parent=11 // pred_check
          %p271 = pneg %p91
        $region18: #{tpu_custom_call.1} parent=11 // pred_check_branch
          %273 = sbr.rel (%p271) target = $region20
        $region19: #{tpu_custom_call.1} parent=11 // pred_region
          _
        $region20: #{tpu_custom_call.1} parent=11 // pred_fallthru
          _
        // Predicated region
        $region21: #{tpu_custom_call.1} parent=11 // pred_check
          %p274 = pneg %p112
        $region22: #{tpu_custom_call.1} parent=11 // pred_check_branch
          %276 = sbr.rel (%p274) target = $region24
        $region23: #{tpu_custom_call.1} parent=11 // pred_region
          %s278 = ssub.s32 5120, 5120
          %279 = vsyncadd [#allocation6], %s278
          %s280 = sshll.u32 [#allocation7], 4
          %s281 = int_to_ptr.vmem [resolvable:$true] %s280
          %286 = dma.hbm_to_vmem [thread:$0]  %s3, 5120, %s281, [#allocation6], 320, 320, 20
        $region24: #{tpu_custom_call.1} parent=11 // pred_fallthru
          _
        // Predicated region
        $region25: #{tpu_custom_call.1} parent=11 // pred_check
          %p287 = pneg %p133
        $region26: #{tpu_custom_call.1} parent=11 // pred_check_branch
          %289 = sbr.rel (%p287) target = $region28
        $region27: #{tpu_custom_call.1} parent=11 // pred_region
          _
        $region28: #{tpu_custom_call.1} parent=11 // pred_fallthru
          _
        // Predicated region
        $region29: #{tpu_custom_call.1} parent=11 // pred_check
          %p290 = pneg %p154
        $region30: #{tpu_custom_call.1} parent=11 // pred_check_branch
          %292 = sbr.rel (%p290) target = $region32
        $region31: #{tpu_custom_call.1} parent=11 // pred_region
          %s294 = ssub.s32 5120, 5120
          %295 = vsyncadd [#allocation9], %s294
          %s296 = sshll.u32 [#allocation8], 4
          %s297 = int_to_ptr.vmem [resolvable:$true] %s296
          %302 = dma.hbm_to_vmem [thread:$0]  %s5, 5120, %s297, [#allocation9], 320, 320, 20
        $region32: #{tpu_custom_call.1} parent=11 // pred_fallthru
          _
        // Predicated region
        $region33: #{tpu_custom_call.1} parent=11 // pred_check
          %p303 = pneg %p175
        $region34: #{tpu_custom_call.1} parent=11 // pred_check_branch
          %305 = sbr.rel (%p303) target = $region36
        $region35: #{tpu_custom_call.1} parent=11 // pred_region
          _
        $region36: #{tpu_custom_call.1} parent=11 // pred_fallthru
          _
        // Predicated region
        $region37: #{tpu_custom_call.1} parent=11 // pred_check
          %p306 = pneg %p196
        $region38: #{tpu_custom_call.1} parent=11 // pred_check_branch
          %308 = sbr.rel (%p306) target = $region40
        $region39: #{tpu_custom_call.1} parent=11 // pred_region
          %s310 = ssub.s32 1024, 1024
          %311 = vsyncadd [#allocation9], %s310
          %s312 = sshll.u32 [#allocation10], 4
          %s313 = int_to_ptr.vmem [resolvable:$true] %s312
          %318 = dma.hbm_to_vmem [thread:$0]  %s7, 1024, %s313, [#allocation9], 64, 64, 4
        $region40: #{tpu_custom_call.1} parent=11 // pred_fallthru
          _
        // Predicated region
        $region41: #{tpu_custom_call.1} parent=11 // pred_check
          %p319 = pneg %p217
        $region42: #{tpu_custom_call.1} parent=11 // pred_check_branch
          %321 = sbr.rel (%p319) target = $region44
        $region43: #{tpu_custom_call.1} parent=11 // pred_region
          _
        $region44: #{tpu_custom_call.1} parent=11 // pred_fallthru
          _
      $region12: #{tpu_custom_call.1} parent=5 // pred_fallthru
        _
      %p322 = scmp.lt.s32.totalorder %s23, 2
      // Predicated region
      $region45: #{tpu_custom_call.1} parent=5 // pred_check
        %p323 = pneg %p322
      $region46: #{tpu_custom_call.1} parent=5 // pred_check_branch
        %325 = sbr.rel (%p323) target = $region48
      $region47: #{tpu_custom_call.1} parent=5 // pred_region
        // Predicated region
        $region49: #{tpu_custom_call.1} parent=47 // pred_check
          %p326 = pneg %p43
        $region50: #{tpu_custom_call.1} parent=47 // pred_check_branch
          %328 = sbr.rel (%p326) target = $region52
        $region51: #{tpu_custom_call.1} parent=47 // pred_region
          %s329 = sand.u32 %s33, 1
          %s330 = scalar_lea.sflag [#allocation3], %s329
          %s331 = sand.u32 %s33, 1
          %s332 = smul.addr %s331, 16
          %s333 = scalar_lea.vmem [#allocation2], %s332
          %s335 = ssub.s32 256, 256
          %336 = vsyncadd %s330, %s335
          %s337 = smul.addr %s23, 4
          %s338 = smul.addr %s337, 64
          %s339 = scalar_lea.hbm %s0, %s338
          %s340 = sshll.u32 %s333, 4
          %s341 = int_to_ptr.vmem [resolvable:$true] %s340
          %346 = dma.hbm_to_vmem [thread:$0]  %s339, 256, %s341, %s330, 64, 64, 4
        $region52: #{tpu_custom_call.1} parent=47 // pred_fallthru
          _
      $region48: #{tpu_custom_call.1} parent=5 // pred_fallthru
        _
      %p347 = scmp.le.s32.totalorder 1, %s23
      %p348 = scmp.lt.s32.totalorder %s23, 3
      %p349 = pnand %p347, %p348
      %p350 = pneg %p349
      // Predicated region
      $region53: #{tpu_custom_call.1} parent=5 // pred_check
        _
      $region54: #{tpu_custom_call.1} parent=5 // pred_check_branch
        %352 = sbr.rel (%p349) target = $region56
      $region55: #{tpu_custom_call.1} parent=5 // pred_region
        %s353 = ssub.s32 %s23, 1
        %s354 = sand.u32 %s36, 1
        %s355 = scalar_lea.sflag [#allocation3], %s354
        %s356 = sand.u32 %s36, 1
        %s357 = smul.addr %s356, 16
        %s358 = scalar_lea.vmem [#allocation2], %s357
        // Predicated region
        $region57: #{tpu_custom_call.1} parent=55 // pred_check
          %p359 = pneg %p49
        $region58: #{tpu_custom_call.1} parent=55 // pred_check_branch
          %361 = sbr.rel (%p359) target = $region60
        $region59: #{tpu_custom_call.1} parent=55 // pred_region
          %362 = dma.done %s355, 256
        $region60: #{tpu_custom_call.1} parent=55 // pred_fallthru
          _
        // Predicated region
        $region61: #{tpu_custom_call.1} parent=55 // pred_check
          %p363 = pneg %p70
        $region62: #{tpu_custom_call.1} parent=55 // pred_check_branch
          %365 = sbr.rel (%p363) target = $region64
        $region63: #{tpu_custom_call.1} parent=55 // pred_region
          %366 = dma.done [#allocation6], 5120
        $region64: #{tpu_custom_call.1} parent=55 // pred_fallthru
          _
        // Predicated region
        $region65: #{tpu_custom_call.1} parent=55 // pred_check
          %p367 = pneg %p112
        $region66: #{tpu_custom_call.1} parent=55 // pred_check_branch
          %369 = sbr.rel (%p367) target = $region68
        $region67: #{tpu_custom_call.1} parent=55 // pred_region
          %370 = dma.done [#allocation6], 5120
        $region68: #{tpu_custom_call.1} parent=55 // pred_fallthru
          _
        // Predicated region
        $region69: #{tpu_custom_call.1} parent=55 // pred_check
          %p371 = pneg %p154
        $region70: #{tpu_custom_call.1} parent=55 // pred_check_branch
          %373 = sbr.rel (%p371) target = $region72
        $region71: #{tpu_custom_call.1} parent=55 // pred_region
          %374 = dma.done [#allocation9], 5120
        $region72: #{tpu_custom_call.1} parent=55 // pred_fallthru
          _
        // Predicated region
        $region73: #{tpu_custom_call.1} parent=55 // pred_check
          %p375 = pneg %p196
        $region74: #{tpu_custom_call.1} parent=55 // pred_check_branch
          %377 = sbr.rel (%p375) target = $region76
        $region75: #{tpu_custom_call.1} parent=55 // pred_region
          %378 = dma.done [#allocation9], 1024
        $region76: #{tpu_custom_call.1} parent=55 // pred_fallthru
          _
        %s379 = sand.u32 %s36, 1
        %s380 = scalar_lea.sflag [#allocation3], %s379
        %s381 = sand.u32 %s36, 1
        %s382 = smul.addr %s381, 16
        %s383 = scalar_lea.vmem [#allocation2], %s382
        %p384 = pneg %p49
        %p385 = pneg %p46
        %p386 = pneg %p70
        %p387 = pneg %p67
        %p388 = pneg %p91
        %p389 = pneg %p88
        %p390 = pneg %p112
        %p391 = pneg %p109
        %p392 = pneg %p133
        %p393 = pneg %p130
        %p394 = pneg %p154
        %p395 = pneg %p151
        %p396 = pneg %p175
        %p397 = pneg %p172
        %p398 = pneg %p196
        %p399 = pneg %p193
        %p400 = pneg %p217
        %p401 = pneg %p214
        %p402 = pneg %p243
        %p403 = pneg %p240
        %s404 = sand.u32 %s230, 1
        %s405 = scalar_lea.sflag [#allocation4], %s404
        %s406 = sand.u32 %s230, 1
        %s407 = smul.addr %s406, 16
        %s408 = scalar_lea.vmem [#allocation11], %s407
        %v410 = vld [vmem:[%s358] sm:$0xf]
        %v411 = vld [vmem:[%s358 + $0x4] sm:$0xf]
        %v412 = vld [vmem:[%s358 + $0x8] sm:$0xf]
        %v413 = vld [vmem:[%s358 + $0xc] sm:$0xf]
        %v414 = vlaneseq
        %v415 = vshrl.u32 %v414, 7
        %v416 = vadd.s32 %v415, 8
        %v417 = vadd.s32 %v415, 16
        %v418 = vadd.s32 %v415, 24
        %vm419 = vcmp.lt.s32.totalorder %v415, 16
        %vm420 = vcmp.lt.s32.totalorder %v416, 16
        %vm421 = vcmp.lt.s32.totalorder %v417, 16
        %vm422 = vcmp.lt.s32.totalorder %v418, 16
        %v423 = vld [vmem:[#allocation5] sm:$0xff]
        %v424 = vld [vmem:[#allocation5 + $0x8] sm:$0xff]
        %v425 = vld [vmem:[#allocation5 + $0x10] sm:$0xf]
        %v426 = vld [vmem:[#allocation5 + $0x14] sm:$0xff]
        %v427 = vld [vmem:[#allocation5 + $0x1c] sm:$0xff]
        %v428 = vld [vmem:[#allocation5 + $0x24] sm:$0xf]
        %v429 = vld [vmem:[#allocation5 + $0x28] sm:$0xff]
        %v430 = vld [vmem:[#allocation5 + $0x30] sm:$0xff]
        %v431 = vld [vmem:[#allocation5 + $0x38] sm:$0xf]
        %v432 = vld [vmem:[#allocation5 + $0x3c] sm:$0xff]
        %v433 = vld [vmem:[#allocation5 + $0x44] sm:$0xff]
        %v434 = vld [vmem:[#allocation5 + $0x4c] sm:$0xf]
        %v435 = vld [vmem:[#allocation5 + $0x50] sm:$0xff]
        %v436 = vld [vmem:[#allocation5 + $0x58] sm:$0xff]
        %v437 = vld [vmem:[#allocation5 + $0x60] sm:$0xf]
        %v438 = vld [vmem:[#allocation5 + $0x64] sm:$0xff]
        %v439 = vld [vmem:[#allocation5 + $0x6c] sm:$0xff]
        %v440 = vld [vmem:[#allocation5 + $0x74] sm:$0xf]
        %v441 = vld [vmem:[#allocation5 + $0x78] sm:$0xff]
        %v442 = vld [vmem:[#allocation5 + $0x80] sm:$0xff]
        %v443 = vld [vmem:[#allocation5 + $0x88] sm:$0xf]
        %v444 = vld [vmem:[#allocation5 + $0x8c] sm:$0xff]
        %v445 = vld [vmem:[#allocation5 + $0x94] sm:$0xff]
        %v446 = vld [vmem:[#allocation5 + $0x9c] sm:$0xf]
        %v447 = vld [vmem:[#allocation5 + $0xa0] sm:$0xff]
        %v448 = vld [vmem:[#allocation5 + $0xa8] sm:$0xff]
        %v449 = vld [vmem:[#allocation5 + $0xb0] sm:$0xf]
        %v450 = vld [vmem:[#allocation5 + $0xb4] sm:$0xff]
        %v451 = vld [vmem:[#allocation5 + $0xbc] sm:$0xff]
        %v452 = vld [vmem:[#allocation5 + $0xc4] sm:$0xf]
        %v453 = vld [vmem:[#allocation5 + $0xc8] sm:$0xff]
        %v454 = vld [vmem:[#allocation5 + $0xd0] sm:$0xff]
        %v455 = vld [vmem:[#allocation5 + $0xd8] sm:$0xf]
        %v456 = vld [vmem:[#allocation5 + $0xdc] sm:$0xff]
        %v457 = vld [vmem:[#allocation5 + $0xe4] sm:$0xff]
        %v458 = vld [vmem:[#allocation5 + $0xec] sm:$0xf]
        %v459 = vld [vmem:[#allocation5 + $0xf0] sm:$0xff]
        %v460 = vld [vmem:[#allocation5 + $0xf8] sm:$0xff]
        %v461 = vld [vmem:[#allocation5 + $0x100] sm:$0xf]
        %v462 = vld [vmem:[#allocation5 + $0x104] sm:$0xff]
        %v463 = vld [vmem:[#allocation5 + $0x10c] sm:$0xff]
        %v464 = vld [vmem:[#allocation5 + $0x114] sm:$0xf]
        %v465 = vld [vmem:[#allocation5 + $0x118] sm:$0xff]
        %v466 = vld [vmem:[#allocation5 + $0x120] sm:$0xff]
        %v467 = vld [vmem:[#allocation5 + $0x128] sm:$0xf]
        %v468 = vld [vmem:[#allocation5 + $0x12c] sm:$0xff]
        %v469 = vld [vmem:[#allocation5 + $0x134] sm:$0xff]
        %v470 = vld [vmem:[#allocation5 + $0x13c] sm:$0xf]
        %v475 = vunpack.c.l.b16 %v410
        %v476 = vunpack.c.l.b16 %v411
        %v477 = vunpack.c.l.b16 %v412
        %v478 = vunpack.c.l.b16 %v413
        %v479 = vpack.c.b16 %v476, %v475
        %v480 = vpack.c.b16 %v478, %v477
        %v531 = vunpack.c.l.b16 %v423
        %v532 = vunpack.c.h.b16 %v423
        %v533 = vunpack.c.l.b16 %v424
        %v534 = vunpack.c.h.b16 %v424
        %v535 = vunpack.c.l.b16 %v425
        %v536 = vunpack.c.l.b16 %v426
        %v537 = vunpack.c.h.b16 %v426
        %v538 = vunpack.c.l.b16 %v427
        %v539 = vunpack.c.h.b16 %v427
        %v540 = vunpack.c.l.b16 %v428
        %v541 = vunpack.c.l.b16 %v429
        %v542 = vunpack.c.h.b16 %v429
        %v543 = vunpack.c.l.b16 %v430
        %v544 = vunpack.c.h.b16 %v430
        %v545 = vunpack.c.l.b16 %v431
        %v546 = vunpack.c.l.b16 %v432
        %v547 = vunpack.c.h.b16 %v432
        %v548 = vunpack.c.l.b16 %v433
        %v549 = vunpack.c.h.b16 %v433
        %v550 = vunpack.c.l.b16 %v434
        %v551 = vunpack.c.l.b16 %v435
        %v552 = vunpack.c.h.b16 %v435
        %v553 = vunpack.c.l.b16 %v436
        %v554 = vunpack.c.h.b16 %v436
        %v555 = vunpack.c.l.b16 %v437
        %v556 = vunpack.c.l.b16 %v438
        %v557 = vunpack.c.h.b16 %v438
        %v558 = vunpack.c.l.b16 %v439
        %v559 = vunpack.c.h.b16 %v439
        %v560 = vunpack.c.l.b16 %v440
        %v561 = vunpack.c.l.b16 %v441
        %v562 = vunpack.c.h.b16 %v441
        %v563 = vunpack.c.l.b16 %v442
        %v564 = vunpack.c.h.b16 %v442
        %v565 = vunpack.c.l.b16 %v443
        %v566 = vunpack.c.l.b16 %v444
        %v567 = vunpack.c.h.b16 %v444
        %v568 = vunpack.c.l.b16 %v445
        %v569 = vunpack.c.h.b16 %v445
        %v570 = vunpack.c.l.b16 %v446
        %v571 = vunpack.c.l.b16 %v447
        %v572 = vunpack.c.h.b16 %v447
        %v573 = vunpack.c.l.b16 %v448
        %v574 = vunpack.c.h.b16 %v448
        %v575 = vunpack.c.l.b16 %v449
        %v576 = vunpack.c.l.b16 %v450
        %v577 = vunpack.c.h.b16 %v450
        %v578 = vunpack.c.l.b16 %v451
        %v579 = vunpack.c.h.b16 %v451
        %v580 = vunpack.c.l.b16 %v452
        %v581 = vunpack.c.l.b16 %v453
        %v582 = vunpack.c.h.b16 %v453
        %v583 = vunpack.c.l.b16 %v454
        %v584 = vunpack.c.h.b16 %v454
        %v585 = vunpack.c.l.b16 %v455
        %v586 = vunpack.c.l.b16 %v456
        %v587 = vunpack.c.h.b16 %v456
        %v588 = vunpack.c.l.b16 %v457
        %v589 = vunpack.c.h.b16 %v457
        %v590 = vunpack.c.l.b16 %v458
        %v591 = vunpack.c.l.b16 %v459
        %v592 = vunpack.c.h.b16 %v459
        %v593 = vunpack.c.l.b16 %v460
        %v594 = vunpack.c.h.b16 %v460
        %v595 = vunpack.c.l.b16 %v461
        %v596 = vunpack.c.l.b16 %v462
        %v597 = vunpack.c.h.b16 %v462
        %v598 = vunpack.c.l.b16 %v463
        %v599 = vunpack.c.h.b16 %v463
        %v600 = vunpack.c.l.b16 %v464
        %v601 = vunpack.c.l.b16 %v465
        %v602 = vunpack.c.h.b16 %v465
        %v603 = vunpack.c.l.b16 %v466
        %v604 = vunpack.c.h.b16 %v466
        %v605 = vunpack.c.l.b16 %v467
        %v606 = vunpack.c.l.b16 %v468
        %v607 = vunpack.c.h.b16 %v468
        %v608 = vunpack.c.l.b16 %v469
        %v609 = vunpack.c.h.b16 %v469
        %v610 = vunpack.c.l.b16 %v470
        %v611 = vpack.c.b16 %v536, %v531
        %v612 = vpack.c.b16 %v537, %v532
        %v613 = vpack.c.b16 %v538, %v533
        %v614 = vpack.c.b16 %v539, %v534
        %v615 = vpack.c.b16 %v540, %v535
        %v616 = vpack.c.b16 %v546, %v541
        %v617 = vpack.c.b16 %v547, %v542
        %v618 = vpack.c.b16 %v548, %v543
        %v619 = vpack.c.b16 %v549, %v544
        %v620 = vpack.c.b16 %v550, %v545
        %v621 = vpack.c.b16 %v556, %v551
        %v622 = vpack.c.b16 %v557, %v552
        %v623 = vpack.c.b16 %v558, %v553
        %v624 = vpack.c.b16 %v559, %v554
        %v625 = vpack.c.b16 %v560, %v555
        %v626 = vpack.c.b16 %v566, %v561
        %v627 = vpack.c.b16 %v567, %v562
        %v628 = vpack.c.b16 %v568, %v563
        %v629 = vpack.c.b16 %v569, %v564
        %v630 = vpack.c.b16 %v570, %v565
        %v631 = vpack.c.b16 %v576, %v571
        %v632 = vpack.c.b16 %v577, %v572
        %v633 = vpack.c.b16 %v578, %v573
        %v634 = vpack.c.b16 %v579, %v574
        %v635 = vpack.c.b16 %v580, %v575
        %v636 = vpack.c.b16 %v586, %v581
        %v637 = vpack.c.b16 %v587, %v582
        %v638 = vpack.c.b16 %v588, %v583
        %v639 = vpack.c.b16 %v589, %v584
        %v640 = vpack.c.b16 %v590, %v585
        %v641 = vpack.c.b16 %v596, %v591
        %v642 = vpack.c.b16 %v597, %v592
        %v643 = vpack.c.b16 %v598, %v593
        %v644 = vpack.c.b16 %v599, %v594
        %v645 = vpack.c.b16 %v600, %v595
        %v646 = vpack.c.b16 %v606, %v601
        %v647 = vpack.c.b16 %v607, %v602
        %v648 = vpack.c.b16 %v608, %v603
        %v649 = vpack.c.b16 %v609, %v604
        %v650 = vpack.c.b16 %v610, %v605
        %691 = vmatprep.subr.bf16.mxu0 %v647
        %692 = vmatpush1.bf16.msra.mxu0 %v646
        %693 = vmatprep.subr.bf16.mxu0 %v642
        %694 = vmatpush1.bf16.msra.mxu0 %v641
        %695 = vmatprep.subr.bf16.mxu0 %v637
        %696 = vmatpush1.bf16.msra.mxu0 %v636
        %697 = vmatprep.subr.bf16.mxu0 %v632
        %698 = vmatpush1.bf16.msra.mxu0 %v631
        %699 = vmatprep.subr.bf16.mxu0 %v627
        %700 = vmatpush1.bf16.msra.mxu0 %v626
        %701 = vmatprep.subr.bf16.mxu0 %v622
        %702 = vmatpush1.bf16.msra.mxu0 %v621
        %703 = vmatprep.subr.bf16.mxu0 %v617
        %704 = vmatpush1.bf16.msra.mxu0 %v616
        %705 = vmatprep.subr.bf16.mxu0 %v612
        %706 = vmatpush1.bf16.msra.mxu0 %v611
        %707 = vmatprep.subr.bf16.mxu0 0
        %708 = vmatpush2.bf16.msra.mxu0 0
        %709 = vmatprep.subr.bf16.mxu0 0
        %710 = vmatpush2.bf16.msra.mxu0 0
        %711 = vmatprep.subr.bf16.mxu0 0
        %712 = vmatpush2.bf16.msra.mxu0 0
        %713 = vmatprep.subr.bf16.mxu0 0
        %714 = vmatpush2.bf16.msra.mxu0 0
        %715 = vmatprep.subr.bf16.mxu0 0
        %716 = vmatpush2.bf16.msra.mxu0 0
        %717 = vmatprep.subr.bf16.mxu0 0
        %718 = vmatpush2.bf16.msra.mxu0 0
        %719 = vmatprep.subr.bf16.mxu0 0
        %720 = vmatpush2.bf16.msra.mxu0 0
        %721 = vmatprep.subr.bf16.mxu0 0
        %722 = vmatpush2.bf16.msra.mxu0 0
        %723 = vmatprep.mubr.bf16.mxu0 0
        %724 = vmatmul.mubr.bf16.gmra.mxu0 %v479
        %v725 = vpop.f32.mrf.mxu0
        %v726 = vadd.f32 0.0, %v725
        %v727 = vpop.f32.mrf.mxu0
        %v728 = vadd.f32 0.0, %v727
        %v729 = vpop.f32.mrf.mxu0
        %v730 = vadd.f32 0.0, %v729
        %v731 = vpop.f32.mrf.mxu0
        %v732 = vadd.f32 0.0, %v731
        %733 = vmatprep.mubr.bf16.mxu0 0
        %734 = vmatmul.mubr.bf16.gmra.mxu0 %v480
        %v735 = vpop.f32.mrf.mxu0
        %v736 = vadd.f32 0.0, %v735
        %v737 = vpop.f32.mrf.mxu0
        %v738 = vadd.f32 0.0, %v737
        %v739 = vpop.f32.mrf.mxu0
        %v740 = vadd.f32 0.0, %v739
        %v741 = vpop.f32.mrf.mxu0
        %v742 = vadd.f32 0.0, %v741
        %743 = vdwg.mxu0
        %744 = vmatprep.subr.bf16.mxu0 %v649
        %745 = vmatpush1.bf16.msra.mxu0 %v648
        %746 = vmatprep.subr.bf16.mxu0 %v644
        %747 = vmatpush1.bf16.msra.mxu0 %v643
        %748 = vmatprep.subr.bf16.mxu0 %v639
        %749 = vmatpush1.bf16.msra.mxu0 %v638
        %750 = vmatprep.subr.bf16.mxu0 %v634
        %751 = vmatpush1.bf16.msra.mxu0 %v633
        %752 = vmatprep.subr.bf16.mxu0 %v629
        %753 = vmatpush1.bf16.msra.mxu0 %v628
        %754 = vmatprep.subr.bf16.mxu0 %v624
        %755 = vmatpush1.bf16.msra.mxu0 %v623
        %756 = vmatprep.subr.bf16.mxu0 %v619
        %757 = vmatpush1.bf16.msra.mxu0 %v618
        %758 = vmatprep.subr.bf16.mxu0 %v614
        %759 = vmatpush1.bf16.msra.mxu0 %v613
        %760 = vmatprep.subr.bf16.mxu0 0
        %761 = vmatpush2.bf16.msra.mxu0 0
        %762 = vmatprep.subr.bf16.mxu0 0
        %763 = vmatpush2.bf16.msra.mxu0 0
        %764 = vmatprep.subr.bf16.mxu0 0
        %765 = vmatpush2.bf16.msra.mxu0 0
        %766 = vmatprep.subr.bf16.mxu0 0
        %767 = vmatpush2.bf16.msra.mxu0 0
        %768 = vmatprep.subr.bf16.mxu0 0
        %769 = vmatpush2.bf16.msra.mxu0 0
        %770 = vmatprep.subr.bf16.mxu0 0
        %771 = vmatpush2.bf16.msra.mxu0 0
        %772 = vmatprep.subr.bf16.mxu0 0
        %773 = vmatpush2.bf16.msra.mxu0 0
        %774 = vmatprep.subr.bf16.mxu0 0
        %775 = vmatpush2.bf16.msra.mxu0 0
        %776 = vmatprep.mubr.bf16.mxu0 0
        %777 = vmatmul.mubr.bf16.gmra.mxu0 %v479
        %v778 = vpop.f32.mrf.mxu0
        %v779 = vadd.f32 0.0, %v778
        %v780 = vpop.f32.mrf.mxu0
        %v781 = vadd.f32 0.0, %v780
        %v782 = vpop.f32.mrf.mxu0
        %v783 = vadd.f32 0.0, %v782
        %v784 = vpop.f32.mrf.mxu0
        %v785 = vadd.f32 0.0, %v784
        %786 = vmatprep.mubr.bf16.mxu0 0
        %787 = vmatmul.mubr.bf16.gmra.mxu0 %v480
        %v788 = vpop.f32.mrf.mxu0
        %v789 = vadd.f32 0.0, %v788
        %v790 = vpop.f32.mrf.mxu0
        %v791 = vadd.f32 0.0, %v790
        %v792 = vpop.f32.mrf.mxu0
        %v793 = vadd.f32 0.0, %v792
        %v794 = vpop.f32.mrf.mxu0
        %v795 = vadd.f32 0.0, %v794
        %796 = vdwg.mxu0
        %797 = vmatprep.subr.bf16.mxu0 0
        %798 = vmatpush1.bf16.msra.mxu0 %v650
        %799 = vmatprep.subr.bf16.mxu0 0
        %800 = vmatpush1.bf16.msra.mxu0 %v645
        %801 = vmatprep.subr.bf16.mxu0 0
        %802 = vmatpush1.bf16.msra.mxu0 %v640
        %803 = vmatprep.subr.bf16.mxu0 0
        %804 = vmatpush1.bf16.msra.mxu0 %v635
        %805 = vmatprep.subr.bf16.mxu0 0
        %806 = vmatpush1.bf16.msra.mxu0 %v630
        %807 = vmatprep.subr.bf16.mxu0 0
        %808 = vmatpush1.bf16.msra.mxu0 %v625
        %809 = vmatprep.subr.bf16.mxu0 0
        %810 = vmatpush1.bf16.msra.mxu0 %v620
        %811 = vmatprep.subr.bf16.mxu0 0
        %812 = vmatpush1.bf16.msra.mxu0 %v615
        %813 = vmatprep.subr.bf16.mxu0 0
        %814 = vmatpush2.bf16.msra.mxu0 0
        %815 = vmatprep.subr.bf16.mxu0 0
        %816 = vmatpush2.bf16.msra.mxu0 0
        %817 = vmatprep.subr.bf16.mxu0 0
        %818 = vmatpush2.bf16.msra.mxu0 0
        %819 = vmatprep.subr.bf16.mxu0 0
        %820 = vmatpush2.bf16.msra.mxu0 0
        %821 = vmatprep.subr.bf16.mxu0 0
        %822 = vmatpush2.bf16.msra.mxu0 0
        %823 = vmatprep.subr.bf16.mxu0 0
        %824 = vmatpush2.bf16.msra.mxu0 0
        %825 = vmatprep.subr.bf16.mxu0 0
        %826 = vmatpush2.bf16.msra.mxu0 0
        %827 = vmatprep.subr.bf16.mxu0 0
        %828 = vmatpush2.bf16.msra.mxu0 0
        %829 = vmatprep.mubr.bf16.mxu0 0
        %830 = vmatmul.mubr.bf16.gmra.mxu0 %v479
        %v831 = vpop.f32.mrf.mxu0
        %v832 = vadd.f32 0.0, %v831
        %v833 = vpop.f32.mrf.mxu0
        %v834 = vpop.f32.mrf.mxu0
        %v835 = vadd.f32 0.0, %v834
        %v836 = vpop.f32.mrf.mxu0
        %837 = vmatprep.mubr.bf16.mxu0 0
        %838 = vmatmul.mubr.bf16.gmra.mxu0 %v480
        %v839 = vpop.f32.mrf.mxu0
        %v840 = vadd.f32 0.0, %v839
        %v841 = vpop.f32.mrf.mxu0
        %v842 = vpop.f32.mrf.mxu0
        %v843 = vadd.f32 0.0, %v842
        %v844 = vpop.f32.mrf.mxu0
        %845 = vdwg.mxu0
        %v846 = vrot.slane %v726, 6
        %v847 = vrot.slane %v730, 6
        %v848 = vrot.slane %v736, 6
        %v849 = vrot.slane %v740, 6
        %vm850 = vcmp.lt.s32.totalorder %v415, 2
        %v851 = vsel %vm850, %v848, %v849
        %v852 = vsel %vm850, %v847, %v848
        %v853 = vsel %vm850, %v846, %v847
        %v854 = vsel %vm850, %v849, %v846
        %v855 = vadd.f32 %v779, %v854
        %v856 = vadd.f32 %v783, %v853
        %v857 = vadd.f32 %v789, %v852
        %v858 = vadd.f32 %v793, %v851
        %v859 = vrot.slane %v728, 7
        %v860 = vrot.slane %v732, 7
        %v861 = vrot.slane %v738, 7
        %v862 = vrot.slane %v742, 7
        %vm863 = vcmp.lt.s32.totalorder %v415, 1
        %v864 = vsel %vm863, %v861, %v862
        %v865 = vsel %vm863, %v860, %v861
        %v866 = vsel %vm863, %v859, %v860
        %v867 = vsel %vm863, %v862, %v859
        %v868 = vadd.f32 %v855, %v867
        %v869 = vadd.f32 %v856, %v866
        %v870 = vadd.f32 %v857, %v865
        %v871 = vadd.f32 %v858, %v864
        %v872 = vrot.slane %v781, 1
        %v873 = vrot.slane %v785, 1
        %v874 = vrot.slane %v791, 1
        %v875 = vrot.slane %v795, 1
        %vm876 = vcmp.lt.s32.totalorder %v415, 7
        %v877 = vsel %vm876, %v874, %v875
        %v878 = vsel %vm876, %v873, %v874
        %v879 = vsel %vm876, %v872, %v873
        %v880 = vsel %vm876, %v875, %v872
        %v881 = vadd.f32 %v868, %v879
        %v882 = vadd.f32 %v869, %v878
        %v883 = vadd.f32 %v870, %v877
        %v884 = vadd.f32 %v871, %v880
        %v885 = vrot.slane %v832, 2
        %v886 = vrot.slane %v835, 2
        %v887 = vrot.slane %v840, 2
        %v888 = vrot.slane %v843, 2
        %vm889 = vcmp.lt.s32.totalorder %v415, 6
        %v890 = vsel %vm889, %v887, %v888
        %v891 = vsel %vm889, %v886, %v887
        %v892 = vsel %vm889, %v885, %v886
        %v893 = vsel %vm889, %v888, %v885
        %v894 = vadd.f32 %v881, %v892
        %v895 = vadd.f32 %v882, %v891
        %v896 = vadd.f32 %v883, %v890
        %v897 = vadd.f32 %v884, %v893
        %v898 = vld [vmem:[%s2] sm:$0x1]
        %v900 = vlaneseq
        %v901 = vshrl.u32 %v900, 7
        %v902 = vsub.s32 0, %v901
        %v903 = vrot.slane %v898, %v902
        %v905 = vadd.f32 %v894, %v903
        %v906 = vadd.f32 %v895, %v903
        %v907 = vadd.f32 %v896, %v903
        %v908 = vadd.f32 %v897, %v903
        %v909 = vmax.f32 %v905, 0.0
        %v910 = vmax.f32 %v906, 0.0
        %v911 = vmax.f32 %v907, 0.0
        %v912 = vmax.f32 %v908, 0.0
        %v913 = vsel %vm419, 1, 0
        %v914 = vsel %vm420, 1, 0
        %v915 = vsel %vm421, 1, 0
        %v916 = vsel %vm422, 1, 0
        %vm917 = vcmp.eq.s32.totalorder %v913, 1
        %vm918 = vcmp.eq.s32.totalorder %v914, 1
        %vm919 = vcmp.eq.s32.totalorder %v915, 1
        %vm920 = vcmp.eq.s32.totalorder %v916, 1
        %v921 = vsel %vm917, %v909, 0.0
        %v922 = vsel %vm918, %v910, 0.0
        %v923 = vsel %vm919, %v911, 0.0
        %v924 = vsel %vm920, %v912, 0.0
        %v925 = vpack.c.bf16 %v922, %v921
        %v926 = vpack.c.bf16 %v924, %v923
        %v927 = vld [vmem:[#allocation7] sm:$0xff]
        %v928 = vld [vmem:[#allocation7 + $0x8] sm:$0xff]
        %v929 = vld [vmem:[#allocation7 + $0x10] sm:$0xf]
        %v930 = vld [vmem:[#allocation7 + $0x14] sm:$0xff]
        %v931 = vld [vmem:[#allocation7 + $0x1c] sm:$0xff]
        %v932 = vld [vmem:[#allocation7 + $0x24] sm:$0xf]
        %v933 = vld [vmem:[#allocation7 + $0x28] sm:$0xff]
        %v934 = vld [vmem:[#allocation7 + $0x30] sm:$0xff]
        %v935 = vld [vmem:[#allocation7 + $0x38] sm:$0xf]
        %v936 = vld [vmem:[#allocation7 + $0x3c] sm:$0xff]
        %v937 = vld [vmem:[#allocation7 + $0x44] sm:$0xff]
        %v938 = vld [vmem:[#allocation7 + $0x4c] sm:$0xf]
        %v939 = vld [vmem:[#allocation7 + $0x50] sm:$0xff]
        %v940 = vld [vmem:[#allocation7 + $0x58] sm:$0xff]
        %v941 = vld [vmem:[#allocation7 + $0x60] sm:$0xf]
        %v942 = vld [vmem:[#allocation7 + $0x64] sm:$0xff]
        %v943 = vld [vmem:[#allocation7 + $0x6c] sm:$0xff]
        %v944 = vld [vmem:[#allocation7 + $0x74] sm:$0xf]
        %v945 = vld [vmem:[#allocation7 + $0x78] sm:$0xff]
        %v946 = vld [vmem:[#allocation7 + $0x80] sm:$0xff]
        %v947 = vld [vmem:[#allocation7 + $0x88] sm:$0xf]
        %v948 = vld [vmem:[#allocation7 + $0x8c] sm:$0xff]
        %v949 = vld [vmem:[#allocation7 + $0x94] sm:$0xff]
        %v950 = vld [vmem:[#allocation7 + $0x9c] sm:$0xf]
        %v951 = vld [vmem:[#allocation7 + $0xa0] sm:$0xff]
        %v952 = vld [vmem:[#allocation7 + $0xa8] sm:$0xff]
        %v953 = vld [vmem:[#allocation7 + $0xb0] sm:$0xf]
        %v954 = vld [vmem:[#allocation7 + $0xb4] sm:$0xff]
        %v955 = vld [vmem:[#allocation7 + $0xbc] sm:$0xff]
        %v956 = vld [vmem:[#allocation7 + $0xc4] sm:$0xf]
        %v957 = vld [vmem:[#allocation7 + $0xc8] sm:$0xff]
        %v958 = vld [vmem:[#allocation7 + $0xd0] sm:$0xff]
        %v959 = vld [vmem:[#allocation7 + $0xd8] sm:$0xf]
        %v960 = vld [vmem:[#allocation7 + $0xdc] sm:$0xff]
        %v961 = vld [vmem:[#allocation7 + $0xe4] sm:$0xff]
        %v962 = vld [vmem:[#allocation7 + $0xec] sm:$0xf]
        %v963 = vld [vmem:[#allocation7 + $0xf0] sm:$0xff]
        %v964 = vld [vmem:[#allocation7 + $0xf8] sm:$0xff]
        %v965 = vld [vmem:[#allocation7 + $0x100] sm:$0xf]
        %v966 = vld [vmem:[#allocation7 + $0x104] sm:$0xff]
        %v967 = vld [vmem:[#allocation7 + $0x10c] sm:$0xff]
        %v968 = vld [vmem:[#allocation7 + $0x114] sm:$0xf]
        %v969 = vld [vmem:[#allocation7 + $0x118] sm:$0xff]
        %v970 = vld [vmem:[#allocation7 + $0x120] sm:$0xff]
        %v971 = vld [vmem:[#allocation7 + $0x128] sm:$0xf]
        %v972 = vld [vmem:[#allocation7 + $0x12c] sm:$0xff]
        %v973 = vld [vmem:[#allocation7 + $0x134] sm:$0xff]
        %v974 = vld [vmem:[#allocation7 + $0x13c] sm:$0xf]
        %v1023 = vunpack.c.l.b16 %v927
        %v1024 = vunpack.c.h.b16 %v927
        %v1025 = vunpack.c.l.b16 %v928
        %v1026 = vunpack.c.h.b16 %v928
        %v1027 = vunpack.c.l.b16 %v929
        %v1028 = vunpack.c.l.b16 %v930
        %v1029 = vunpack.c.h.b16 %v930
        %v1030 = vunpack.c.l.b16 %v931
        %v1031 = vunpack.c.h.b16 %v931
        %v1032 = vunpack.c.l.b16 %v932
        %v1033 = vunpack.c.l.b16 %v933
        %v1034 = vunpack.c.h.b16 %v933
        %v1035 = vunpack.c.l.b16 %v934
        %v1036 = vunpack.c.h.b16 %v934
        %v1037 = vunpack.c.l.b16 %v935
        %v1038 = vunpack.c.l.b16 %v936
        %v1039 = vunpack.c.h.b16 %v936
        %v1040 = vunpack.c.l.b16 %v937
        %v1041 = vunpack.c.h.b16 %v937
        %v1042 = vunpack.c.l.b16 %v938
        %v1043 = vunpack.c.l.b16 %v939
        %v1044 = vunpack.c.h.b16 %v939
        %v1045 = vunpack.c.l.b16 %v940
        %v1046 = vunpack.c.h.b16 %v940
        %v1047 = vunpack.c.l.b16 %v941
        %v1048 = vunpack.c.l.b16 %v942
        %v1049 = vunpack.c.h.b16 %v942
        %v1050 = vunpack.c.l.b16 %v943
        %v1051 = vunpack.c.h.b16 %v943
        %v1052 = vunpack.c.l.b16 %v944
        %v1053 = vunpack.c.l.b16 %v945
        %v1054 = vunpack.c.h.b16 %v945
        %v1055 = vunpack.c.l.b16 %v946
        %v1056 = vunpack.c.h.b16 %v946
        %v1057 = vunpack.c.l.b16 %v947
        %v1058 = vunpack.c.l.b16 %v948
        %v1059 = vunpack.c.h.b16 %v948
        %v1060 = vunpack.c.l.b16 %v949
        %v1061 = vunpack.c.h.b16 %v949
        %v1062 = vunpack.c.l.b16 %v950
        %v1063 = vunpack.c.l.b16 %v951
        %v1064 = vunpack.c.h.b16 %v951
        %v1065 = vunpack.c.l.b16 %v952
        %v1066 = vunpack.c.h.b16 %v952
        %v1067 = vunpack.c.l.b16 %v953
        %v1068 = vunpack.c.l.b16 %v954
        %v1069 = vunpack.c.h.b16 %v954
        %v1070 = vunpack.c.l.b16 %v955
        %v1071 = vunpack.c.h.b16 %v955
        %v1072 = vunpack.c.l.b16 %v956
        %v1073 = vunpack.c.l.b16 %v957
        %v1074 = vunpack.c.h.b16 %v957
        %v1075 = vunpack.c.l.b16 %v958
        %v1076 = vunpack.c.h.b16 %v958
        %v1077 = vunpack.c.l.b16 %v959
        %v1078 = vunpack.c.l.b16 %v960
        %v1079 = vunpack.c.h.b16 %v960
        %v1080 = vunpack.c.l.b16 %v961
        %v1081 = vunpack.c.h.b16 %v961
        %v1082 = vunpack.c.l.b16 %v962
        %v1083 = vunpack.c.l.b16 %v963
        %v1084 = vunpack.c.h.b16 %v963
        %v1085 = vunpack.c.l.b16 %v964
        %v1086 = vunpack.c.h.b16 %v964
        %v1087 = vunpack.c.l.b16 %v965
        %v1088 = vunpack.c.l.b16 %v966
        %v1089 = vunpack.c.h.b16 %v966
        %v1090 = vunpack.c.l.b16 %v967
        %v1091 = vunpack.c.h.b16 %v967
        %v1092 = vunpack.c.l.b16 %v968
        %v1093 = vunpack.c.l.b16 %v969
        %v1094 = vunpack.c.h.b16 %v969
        %v1095 = vunpack.c.l.b16 %v970
        %v1096 = vunpack.c.h.b16 %v970
        %v1097 = vunpack.c.l.b16 %v971
        %v1098 = vunpack.c.l.b16 %v972
        %v1099 = vunpack.c.h.b16 %v972
        %v1100 = vunpack.c.l.b16 %v973
        %v1101 = vunpack.c.h.b16 %v973
        %v1102 = vunpack.c.l.b16 %v974
        %v1103 = vpack.c.b16 %v1028, %v1023
        %v1104 = vpack.c.b16 %v1029, %v1024
        %v1105 = vpack.c.b16 %v1030, %v1025
        %v1106 = vpack.c.b16 %v1031, %v1026
        %v1107 = vpack.c.b16 %v1032, %v1027
        %v1108 = vpack.c.b16 %v1038, %v1033
        %v1109 = vpack.c.b16 %v1039, %v1034
        %v1110 = vpack.c.b16 %v1040, %v1035
        %v1111 = vpack.c.b16 %v1041, %v1036
        %v1112 = vpack.c.b16 %v1042, %v1037
        %v1113 = vpack.c.b16 %v1048, %v1043
        %v1114 = vpack.c.b16 %v1049, %v1044
        %v1115 = vpack.c.b16 %v1050, %v1045
        %v1116 = vpack.c.b16 %v1051, %v1046
        %v1117 = vpack.c.b16 %v1052, %v1047
        %v1118 = vpack.c.b16 %v1058, %v1053
        %v1119 = vpack.c.b16 %v1059, %v1054
        %v1120 = vpack.c.b16 %v1060, %v1055
        %v1121 = vpack.c.b16 %v1061, %v1056
        %v1122 = vpack.c.b16 %v1062, %v1057
        %v1123 = vpack.c.b16 %v1068, %v1063
        %v1124 = vpack.c.b16 %v1069, %v1064
        %v1125 = vpack.c.b16 %v1070, %v1065
        %v1126 = vpack.c.b16 %v1071, %v1066
        %v1127 = vpack.c.b16 %v1072, %v1067
        %v1128 = vpack.c.b16 %v1078, %v1073
        %v1129 = vpack.c.b16 %v1079, %v1074
        %v1130 = vpack.c.b16 %v1080, %v1075
        %v1131 = vpack.c.b16 %v1081, %v1076
        %v1132 = vpack.c.b16 %v1082, %v1077
        %v1133 = vpack.c.b16 %v1088, %v1083
        %v1134 = vpack.c.b16 %v1089, %v1084
        %v1135 = vpack.c.b16 %v1090, %v1085
        %v1136 = vpack.c.b16 %v1091, %v1086
        %v1137 = vpack.c.b16 %v1092, %v1087
        %v1138 = vpack.c.b16 %v1098, %v1093
        %v1139 = vpack.c.b16 %v1099, %v1094
        %v1140 = vpack.c.b16 %v1100, %v1095
        %v1141 = vpack.c.b16 %v1101, %v1096
        %v1142 = vpack.c.b16 %v1102, %v1097
        %1183 = vmatprep.subr.bf16.mxu0 %v1139
        %1184 = vmatpush1.bf16.msra.mxu0 %v1138
        %1185 = vmatprep.subr.bf16.mxu0 %v1134
        %1186 = vmatpush1.bf16.msra.mxu0 %v1133
        %1187 = vmatprep.subr.bf16.mxu0 %v1129
        %1188 = vmatpush1.bf16.msra.mxu0 %v1128
        %1189 = vmatprep.subr.bf16.mxu0 %v1124
        %1190 = vmatpush1.bf16.msra.mxu0 %v1123
        %1191 = vmatprep.subr.bf16.mxu0 %v1119
        %1192 = vmatpush1.bf16.msra.mxu0 %v1118
        %1193 = vmatprep.subr.bf16.mxu0 %v1114
        %1194 = vmatpush1.bf16.msra.mxu0 %v1113
        %1195 = vmatprep.subr.bf16.mxu0 %v1109
        %1196 = vmatpush1.bf16.msra.mxu0 %v1108
        %1197 = vmatprep.subr.bf16.mxu0 %v1104
        %1198 = vmatpush1.bf16.msra.mxu0 %v1103
        %1199 = vmatprep.subr.bf16.mxu0 0
        %1200 = vmatpush2.bf16.msra.mxu0 0
        %1201 = vmatprep.subr.bf16.mxu0 0
        %1202 = vmatpush2.bf16.msra.mxu0 0
        %1203 = vmatprep.subr.bf16.mxu0 0
        %1204 = vmatpush2.bf16.msra.mxu0 0
        %1205 = vmatprep.subr.bf16.mxu0 0
        %1206 = vmatpush2.bf16.msra.mxu0 0
        %1207 = vmatprep.subr.bf16.mxu0 0
        %1208 = vmatpush2.bf16.msra.mxu0 0
        %1209 = vmatprep.subr.bf16.mxu0 0
        %1210 = vmatpush2.bf16.msra.mxu0 0
        %1211 = vmatprep.subr.bf16.mxu0 0
        %1212 = vmatpush2.bf16.msra.mxu0 0
        %1213 = vmatprep.subr.bf16.mxu0 0
        %1214 = vmatpush2.bf16.msra.mxu0 0
        %1215 = vmatprep.mubr.bf16.mxu0 0
        %1216 = vmatmul.mubr.bf16.gmra.mxu0 %v925
        %v1217 = vpop.f32.mrf.mxu0
        %v1218 = vadd.f32 0.0, %v1217
        %v1219 = vpop.f32.mrf.mxu0
        %v1220 = vadd.f32 0.0, %v1219
        %v1221 = vpop.f32.mrf.mxu0
        %v1222 = vadd.f32 0.0, %v1221
        %v1223 = vpop.f32.mrf.mxu0
        %v1224 = vadd.f32 0.0, %v1223
        %1225 = vmatprep.mubr.bf16.mxu0 0
        %1226 = vmatmul.mubr.bf16.gmra.mxu0 %v926
        %v1227 = vpop.f32.mrf.mxu0
        %v1228 = vadd.f32 0.0, %v1227
        %v1229 = vpop.f32.mrf.mxu0
        %v1230 = vadd.f32 0.0, %v1229
        %v1231 = vpop.f32.mrf.mxu0
        %v1232 = vadd.f32 0.0, %v1231
        %v1233 = vpop.f32.mrf.mxu0
        %v1234 = vadd.f32 0.0, %v1233
        %1235 = vdwg.mxu0
        %1236 = vmatprep.subr.bf16.mxu0 %v1141
        %1237 = vmatpush1.bf16.msra.mxu0 %v1140
        %1238 = vmatprep.subr.bf16.mxu0 %v1136
        %1239 = vmatpush1.bf16.msra.mxu0 %v1135
        %1240 = vmatprep.subr.bf16.mxu0 %v1131
        %1241 = vmatpush1.bf16.msra.mxu0 %v1130
        %1242 = vmatprep.subr.bf16.mxu0 %v1126
        %1243 = vmatpush1.bf16.msra.mxu0 %v1125
        %1244 = vmatprep.subr.bf16.mxu0 %v1121
        %1245 = vmatpush1.bf16.msra.mxu0 %v1120
        %1246 = vmatprep.subr.bf16.mxu0 %v1116
        %1247 = vmatpush1.bf16.msra.mxu0 %v1115
        %1248 = vmatprep.subr.bf16.mxu0 %v1111
        %1249 = vmatpush1.bf16.msra.mxu0 %v1110
        %1250 = vmatprep.subr.bf16.mxu0 %v1106
        %1251 = vmatpush1.bf16.msra.mxu0 %v1105
        %1252 = vmatprep.subr.bf16.mxu0 0
        %1253 = vmatpush2.bf16.msra.mxu0 0
        %1254 = vmatprep.subr.bf16.mxu0 0
        %1255 = vmatpush2.bf16.msra.mxu0 0
        %1256 = vmatprep.subr.bf16.mxu0 0
        %1257 = vmatpush2.bf16.msra.mxu0 0
        %1258 = vmatprep.subr.bf16.mxu0 0
        %1259 = vmatpush2.bf16.msra.mxu0 0
        %1260 = vmatprep.subr.bf16.mxu0 0
        %1261 = vmatpush2.bf16.msra.mxu0 0
        %1262 = vmatprep.subr.bf16.mxu0 0
        %1263 = vmatpush2.bf16.msra.mxu0 0
        %1264 = vmatprep.subr.bf16.mxu0 0
        %1265 = vmatpush2.bf16.msra.mxu0 0
        %1266 = vmatprep.subr.bf16.mxu0 0
        %1267 = vmatpush2.bf16.msra.mxu0 0
        %1268 = vmatprep.mubr.bf16.mxu0 0
        %1269 = vmatmul.mubr.bf16.gmra.mxu0 %v925
        %v1270 = vpop.f32.mrf.mxu0
        %v1271 = vadd.f32 0.0, %v1270
        %v1272 = vpop.f32.mrf.mxu0
        %v1273 = vadd.f32 0.0, %v1272
        %v1274 = vpop.f32.mrf.mxu0
        %v1275 = vadd.f32 0.0, %v1274
        %v1276 = vpop.f32.mrf.mxu0
        %v1277 = vadd.f32 0.0, %v1276
        %1278 = vmatprep.mubr.bf16.mxu0 0
        %1279 = vmatmul.mubr.bf16.gmra.mxu0 %v926
        %v1280 = vpop.f32.mrf.mxu0
        %v1281 = vadd.f32 0.0, %v1280
        %v1282 = vpop.f32.mrf.mxu0
        %v1283 = vadd.f32 0.0, %v1282
        %v1284 = vpop.f32.mrf.mxu0
        %v1285 = vadd.f32 0.0, %v1284
        %v1286 = vpop.f32.mrf.mxu0
        %v1287 = vadd.f32 0.0, %v1286
        %1288 = vdwg.mxu0
        %1289 = vmatprep.subr.bf16.mxu0 0
        %1290 = vmatpush1.bf16.msra.mxu0 %v1142
        %1291 = vmatprep.subr.bf16.mxu0 0
        %1292 = vmatpush1.bf16.msra.mxu0 %v1137
        %1293 = vmatprep.subr.bf16.mxu0 0
        %1294 = vmatpush1.bf16.msra.mxu0 %v1132
        %1295 = vmatprep.subr.bf16.mxu0 0
        %1296 = vmatpush1.bf16.msra.mxu0 %v1127
        %1297 = vmatprep.subr.bf16.mxu0 0
        %1298 = vmatpush1.bf16.msra.mxu0 %v1122
        %1299 = vmatprep.subr.bf16.mxu0 0
        %1300 = vmatpush1.bf16.msra.mxu0 %v1117
        %1301 = vmatprep.subr.bf16.mxu0 0
        %1302 = vmatpush1.bf16.msra.mxu0 %v1112
        %1303 = vmatprep.subr.bf16.mxu0 0
        %1304 = vmatpush1.bf16.msra.mxu0 %v1107
        %1305 = vmatprep.subr.bf16.mxu0 0
        %1306 = vmatpush2.bf16.msra.mxu0 0
        %1307 = vmatprep.subr.bf16.mxu0 0
        %1308 = vmatpush2.bf16.msra.mxu0 0
        %1309 = vmatprep.subr.bf16.mxu0 0
        %1310 = vmatpush2.bf16.msra.mxu0 0
        %1311 = vmatprep.subr.bf16.mxu0 0
        %1312 = vmatpush2.bf16.msra.mxu0 0
        %1313 = vmatprep.subr.bf16.mxu0 0
        %1314 = vmatpush2.bf16.msra.mxu0 0
        %1315 = vmatprep.subr.bf16.mxu0 0
        %1316 = vmatpush2.bf16.msra.mxu0 0
        %1317 = vmatprep.subr.bf16.mxu0 0
        %1318 = vmatpush2.bf16.msra.mxu0 0
        %1319 = vmatprep.subr.bf16.mxu0 0
        %1320 = vmatpush2.bf16.msra.mxu0 0
        %1321 = vmatprep.mubr.bf16.mxu0 0
        %1322 = vmatmul.mubr.bf16.gmra.mxu0 %v925
        %v1323 = vpop.f32.mrf.mxu0
        %v1324 = vadd.f32 0.0, %v1323
        %v1325 = vpop.f32.mrf.mxu0
        %v1326 = vpop.f32.mrf.mxu0
        %v1327 = vadd.f32 0.0, %v1326
        %v1328 = vpop.f32.mrf.mxu0
        %1329 = vmatprep.mubr.bf16.mxu0 0
        %1330 = vmatmul.mubr.bf16.gmra.mxu0 %v926
        %v1331 = vpop.f32.mrf.mxu0
        %v1332 = vadd.f32 0.0, %v1331
        %v1333 = vpop.f32.mrf.mxu0
        %v1334 = vpop.f32.mrf.mxu0
        %v1335 = vadd.f32 0.0, %v1334
        %v1336 = vpop.f32.mrf.mxu0
        %1337 = vdwg.mxu0
        %v1338 = vrot.slane %v1218, 6
        %v1339 = vrot.slane %v1222, 6
        %v1340 = vrot.slane %v1228, 6
        %v1341 = vrot.slane %v1232, 6
        %v1342 = vsel %vm850, %v1340, %v1341
        %v1343 = vsel %vm850, %v1339, %v1340
        %v1344 = vsel %vm850, %v1338, %v1339
        %v1345 = vsel %vm850, %v1341, %v1338
        %v1346 = vadd.f32 %v1271, %v1345
        %v1347 = vadd.f32 %v1275, %v1344
        %v1348 = vadd.f32 %v1281, %v1343
        %v1349 = vadd.f32 %v1285, %v1342
        %v1350 = vrot.slane %v1220, 7
        %v1351 = vrot.slane %v1224, 7
        %v1352 = vrot.slane %v1230, 7
        %v1353 = vrot.slane %v1234, 7
        %v1354 = vsel %vm863, %v1352, %v1353
        %v1355 = vsel %vm863, %v1351, %v1352
        %v1356 = vsel %vm863, %v1350, %v1351
        %v1357 = vsel %vm863, %v1353, %v1350
        %v1358 = vadd.f32 %v1346, %v1357
        %v1359 = vadd.f32 %v1347, %v1356
        %v1360 = vadd.f32 %v1348, %v1355
        %v1361 = vadd.f32 %v1349, %v1354
        %v1362 = vrot.slane %v1273, 1
        %v1363 = vrot.slane %v1277, 1
        %v1364 = vrot.slane %v1283, 1
        %v1365 = vrot.slane %v1287, 1
        %v1366 = vsel %vm876, %v1364, %v1365
        %v1367 = vsel %vm876, %v1363, %v1364
        %v1368 = vsel %vm876, %v1362, %v1363
        %v1369 = vsel %vm876, %v1365, %v1362
        %v1370 = vadd.f32 %v1358, %v1368
        %v1371 = vadd.f32 %v1359, %v1367
        %v1372 = vadd.f32 %v1360, %v1366
        %v1373 = vadd.f32 %v1361, %v1369
        %v1374 = vrot.slane %v1324, 2
        %v1375 = vrot.slane %v1327, 2
        %v1376 = vrot.slane %v1332, 2
        %v1377 = vrot.slane %v1335, 2
        %v1378 = vsel %vm889, %v1376, %v1377
        %v1379 = vsel %vm889, %v1375, %v1376
        %v1380 = vsel %vm889, %v1374, %v1375
        %v1381 = vsel %vm889, %v1377, %v1374
        %v1382 = vadd.f32 %v1370, %v1380
        %v1383 = vadd.f32 %v1371, %v1379
        %v1384 = vadd.f32 %v1372, %v1378
        %v1385 = vadd.f32 %v1373, %v1381
        %v1386 = vld [vmem:[%s4] sm:$0x1]
        %v1388 = vlaneseq
        %v1389 = vshrl.u32 %v1388, 7
        %v1390 = vsub.s32 0, %v1389
        %v1391 = vrot.slane %v1386, %v1390
        %v1393 = vadd.f32 %v1382, %v1391
        %v1394 = vadd.f32 %v1383, %v1391
        %v1395 = vadd.f32 %v1384, %v1391
        %v1396 = vadd.f32 %v1385, %v1391
        %v1397 = vmax.f32 %v1393, 0.0
        %v1398 = vmax.f32 %v1394, 0.0
        %v1399 = vmax.f32 %v1395, 0.0
        %v1400 = vmax.f32 %v1396, 0.0
        %v1401 = vsel %vm917, %v1397, 0.0
        %v1402 = vsel %vm918, %v1398, 0.0
        %v1403 = vsel %vm919, %v1399, 0.0
        %v1404 = vsel %vm920, %v1400, 0.0
        %v1405 = vpack.c.bf16 %v1402, %v1401
        %v1406 = vpack.c.bf16 %v1404, %v1403
        %v1407 = vld [vmem:[#allocation8] sm:$0xff]
        %v1408 = vld [vmem:[#allocation8 + $0x8] sm:$0xff]
        %v1409 = vld [vmem:[#allocation8 + $0x10] sm:$0xf]
        %v1410 = vld [vmem:[#allocation8 + $0x14] sm:$0xff]
        %v1411 = vld [vmem:[#allocation8 + $0x1c] sm:$0xff]
        %v1412 = vld [vmem:[#allocation8 + $0x24] sm:$0xf]
        %v1413 = vld [vmem:[#allocation8 + $0x28] sm:$0xff]
        %v1414 = vld [vmem:[#allocation8 + $0x30] sm:$0xff]
        %v1415 = vld [vmem:[#allocation8 + $0x38] sm:$0xf]
        %v1416 = vld [vmem:[#allocation8 + $0x3c] sm:$0xff]
        %v1417 = vld [vmem:[#allocation8 + $0x44] sm:$0xff]
        %v1418 = vld [vmem:[#allocation8 + $0x4c] sm:$0xf]
        %v1419 = vld [vmem:[#allocation8 + $0x50] sm:$0xff]
        %v1420 = vld [vmem:[#allocation8 + $0x58] sm:$0xff]
        %v1421 = vld [vmem:[#allocation8 + $0x60] sm:$0xf]
        %v1422 = vld [vmem:[#allocation8 + $0x64] sm:$0xff]
        %v1423 = vld [vmem:[#allocation8 + $0x6c] sm:$0xff]
        %v1424 = vld [vmem:[#allocation8 + $0x74] sm:$0xf]
        %v1425 = vld [vmem:[#allocation8 + $0x78] sm:$0xff]
        %v1426 = vld [vmem:[#allocation8 + $0x80] sm:$0xff]
        %v1427 = vld [vmem:[#allocation8 + $0x88] sm:$0xf]
        %v1428 = vld [vmem:[#allocation8 + $0x8c] sm:$0xff]
        %v1429 = vld [vmem:[#allocation8 + $0x94] sm:$0xff]
        %v1430 = vld [vmem:[#allocation8 + $0x9c] sm:$0xf]
        %v1431 = vld [vmem:[#allocation8 + $0xa0] sm:$0xff]
        %v1432 = vld [vmem:[#allocation8 + $0xa8] sm:$0xff]
        %v1433 = vld [vmem:[#allocation8 + $0xb0] sm:$0xf]
        %v1434 = vld [vmem:[#allocation8 + $0xb4] sm:$0xff]
        %v1435 = vld [vmem:[#allocation8 + $0xbc] sm:$0xff]
        %v1436 = vld [vmem:[#allocation8 + $0xc4] sm:$0xf]
        %v1437 = vld [vmem:[#allocation8 + $0xc8] sm:$0xff]
        %v1438 = vld [vmem:[#allocation8 + $0xd0] sm:$0xff]
        %v1439 = vld [vmem:[#allocation8 + $0xd8] sm:$0xf]
        %v1440 = vld [vmem:[#allocation8 + $0xdc] sm:$0xff]
        %v1441 = vld [vmem:[#allocation8 + $0xe4] sm:$0xff]
        %v1442 = vld [vmem:[#allocation8 + $0xec] sm:$0xf]
        %v1443 = vld [vmem:[#allocation8 + $0xf0] sm:$0xff]
        %v1444 = vld [vmem:[#allocation8 + $0xf8] sm:$0xff]
        %v1445 = vld [vmem:[#allocation8 + $0x100] sm:$0xf]
        %v1446 = vld [vmem:[#allocation8 + $0x104] sm:$0xff]
        %v1447 = vld [vmem:[#allocation8 + $0x10c] sm:$0xff]
        %v1448 = vld [vmem:[#allocation8 + $0x114] sm:$0xf]
        %v1449 = vld [vmem:[#allocation8 + $0x118] sm:$0xff]
        %v1450 = vld [vmem:[#allocation8 + $0x120] sm:$0xff]
        %v1451 = vld [vmem:[#allocation8 + $0x128] sm:$0xf]
        %v1452 = vld [vmem:[#allocation8 + $0x12c] sm:$0xff]
        %v1453 = vld [vmem:[#allocation8 + $0x134] sm:$0xff]
        %v1454 = vld [vmem:[#allocation8 + $0x13c] sm:$0xf]
        %v1503 = vunpack.c.l.b16 %v1407
        %v1504 = vunpack.c.h.b16 %v1407
        %v1505 = vunpack.c.l.b16 %v1408
        %v1506 = vunpack.c.h.b16 %v1408
        %v1507 = vunpack.c.l.b16 %v1409
        %v1508 = vunpack.c.l.b16 %v1410
        %v1509 = vunpack.c.h.b16 %v1410
        %v1510 = vunpack.c.l.b16 %v1411
        %v1511 = vunpack.c.h.b16 %v1411
        %v1512 = vunpack.c.l.b16 %v1412
        %v1513 = vunpack.c.l.b16 %v1413
        %v1514 = vunpack.c.h.b16 %v1413
        %v1515 = vunpack.c.l.b16 %v1414
        %v1516 = vunpack.c.h.b16 %v1414
        %v1517 = vunpack.c.l.b16 %v1415
        %v1518 = vunpack.c.l.b16 %v1416
        %v1519 = vunpack.c.h.b16 %v1416
        %v1520 = vunpack.c.l.b16 %v1417
        %v1521 = vunpack.c.h.b16 %v1417
        %v1522 = vunpack.c.l.b16 %v1418
        %v1523 = vunpack.c.l.b16 %v1419
        %v1524 = vunpack.c.h.b16 %v1419
        %v1525 = vunpack.c.l.b16 %v1420
        %v1526 = vunpack.c.h.b16 %v1420
        %v1527 = vunpack.c.l.b16 %v1421
        %v1528 = vunpack.c.l.b16 %v1422
        %v1529 = vunpack.c.h.b16 %v1422
        %v1530 = vunpack.c.l.b16 %v1423
        %v1531 = vunpack.c.h.b16 %v1423
        %v1532 = vunpack.c.l.b16 %v1424
        %v1533 = vunpack.c.l.b16 %v1425
        %v1534 = vunpack.c.h.b16 %v1425
        %v1535 = vunpack.c.l.b16 %v1426
        %v1536 = vunpack.c.h.b16 %v1426
        %v1537 = vunpack.c.l.b16 %v1427
        %v1538 = vunpack.c.l.b16 %v1428
        %v1539 = vunpack.c.h.b16 %v1428
        %v1540 = vunpack.c.l.b16 %v1429
        %v1541 = vunpack.c.h.b16 %v1429
        %v1542 = vunpack.c.l.b16 %v1430
        %v1543 = vunpack.c.l.b16 %v1431
        %v1544 = vunpack.c.h.b16 %v1431
        %v1545 = vunpack.c.l.b16 %v1432
        %v1546 = vunpack.c.h.b16 %v1432
        %v1547 = vunpack.c.l.b16 %v1433
        %v1548 = vunpack.c.l.b16 %v1434
        %v1549 = vunpack.c.h.b16 %v1434
        %v1550 = vunpack.c.l.b16 %v1435
        %v1551 = vunpack.c.h.b16 %v1435
        %v1552 = vunpack.c.l.b16 %v1436
        %v1553 = vunpack.c.l.b16 %v1437
        %v1554 = vunpack.c.h.b16 %v1437
        %v1555 = vunpack.c.l.b16 %v1438
        %v1556 = vunpack.c.h.b16 %v1438
        %v1557 = vunpack.c.l.b16 %v1439
        %v1558 = vunpack.c.l.b16 %v1440
        %v1559 = vunpack.c.h.b16 %v1440
        %v1560 = vunpack.c.l.b16 %v1441
        %v1561 = vunpack.c.h.b16 %v1441
        %v1562 = vunpack.c.l.b16 %v1442
        %v1563 = vunpack.c.l.b16 %v1443
        %v1564 = vunpack.c.h.b16 %v1443
        %v1565 = vunpack.c.l.b16 %v1444
        %v1566 = vunpack.c.h.b16 %v1444
        %v1567 = vunpack.c.l.b16 %v1445
        %v1568 = vunpack.c.l.b16 %v1446
        %v1569 = vunpack.c.h.b16 %v1446
        %v1570 = vunpack.c.l.b16 %v1447
        %v1571 = vunpack.c.h.b16 %v1447
        %v1572 = vunpack.c.l.b16 %v1448
        %v1573 = vunpack.c.l.b16 %v1449
        %v1574 = vunpack.c.h.b16 %v1449
        %v1575 = vunpack.c.l.b16 %v1450
        %v1576 = vunpack.c.h.b16 %v1450
        %v1577 = vunpack.c.l.b16 %v1451
        %v1578 = vunpack.c.l.b16 %v1452
        %v1579 = vunpack.c.h.b16 %v1452
        %v1580 = vunpack.c.l.b16 %v1453
        %v1581 = vunpack.c.h.b16 %v1453
        %v1582 = vunpack.c.l.b16 %v1454
        %v1583 = vpack.c.b16 %v1508, %v1503
        %v1584 = vpack.c.b16 %v1509, %v1504
        %v1585 = vpack.c.b16 %v1510, %v1505
        %v1586 = vpack.c.b16 %v1511, %v1506
        %v1587 = vpack.c.b16 %v1512, %v1507
        %v1588 = vpack.c.b16 %v1518, %v1513
        %v1589 = vpack.c.b16 %v1519, %v1514
        %v1590 = vpack.c.b16 %v1520, %v1515
        %v1591 = vpack.c.b16 %v1521, %v1516
        %v1592 = vpack.c.b16 %v1522, %v1517
        %v1593 = vpack.c.b16 %v1528, %v1523
        %v1594 = vpack.c.b16 %v1529, %v1524
        %v1595 = vpack.c.b16 %v1530, %v1525
        %v1596 = vpack.c.b16 %v1531, %v1526
        %v1597 = vpack.c.b16 %v1532, %v1527
        %v1598 = vpack.c.b16 %v1538, %v1533
        %v1599 = vpack.c.b16 %v1539, %v1534
        %v1600 = vpack.c.b16 %v1540, %v1535
        %v1601 = vpack.c.b16 %v1541, %v1536
        %v1602 = vpack.c.b16 %v1542, %v1537
        %v1603 = vpack.c.b16 %v1548, %v1543
        %v1604 = vpack.c.b16 %v1549, %v1544
        %v1605 = vpack.c.b16 %v1550, %v1545
        %v1606 = vpack.c.b16 %v1551, %v1546
        %v1607 = vpack.c.b16 %v1552, %v1547
        %v1608 = vpack.c.b16 %v1558, %v1553
        %v1609 = vpack.c.b16 %v1559, %v1554
        %v1610 = vpack.c.b16 %v1560, %v1555
        %v1611 = vpack.c.b16 %v1561, %v1556
        %v1612 = vpack.c.b16 %v1562, %v1557
        %v1613 = vpack.c.b16 %v1568, %v1563
        %v1614 = vpack.c.b16 %v1569, %v1564
        %v1615 = vpack.c.b16 %v1570, %v1565
        %v1616 = vpack.c.b16 %v1571, %v1566
        %v1617 = vpack.c.b16 %v1572, %v1567
        %v1618 = vpack.c.b16 %v1578, %v1573
        %v1619 = vpack.c.b16 %v1579, %v1574
        %v1620 = vpack.c.b16 %v1580, %v1575
        %v1621 = vpack.c.b16 %v1581, %v1576
        %v1622 = vpack.c.b16 %v1582, %v1577
        %1663 = vmatprep.subr.bf16.mxu0 %v1619
        %1664 = vmatpush1.bf16.msra.mxu0 %v1618
        %1665 = vmatprep.subr.bf16.mxu0 %v1614
        %1666 = vmatpush1.bf16.msra.mxu0 %v1613
        %1667 = vmatprep.subr.bf16.mxu0 %v1609
        %1668 = vmatpush1.bf16.msra.mxu0 %v1608
        %1669 = vmatprep.subr.bf16.mxu0 %v1604
        %1670 = vmatpush1.bf16.msra.mxu0 %v1603
        %1671 = vmatprep.subr.bf16.mxu0 %v1599
        %1672 = vmatpush1.bf16.msra.mxu0 %v1598
        %1673 = vmatprep.subr.bf16.mxu0 %v1594
        %1674 = vmatpush1.bf16.msra.mxu0 %v1593
        %1675 = vmatprep.subr.bf16.mxu0 %v1589
        %1676 = vmatpush1.bf16.msra.mxu0 %v1588
        %1677 = vmatprep.subr.bf16.mxu0 %v1584
        %1678 = vmatpush1.bf16.msra.mxu0 %v1583
        %1679 = vmatprep.subr.bf16.mxu0 0
        %1680 = vmatpush2.bf16.msra.mxu0 0
        %1681 = vmatprep.subr.bf16.mxu0 0
        %1682 = vmatpush2.bf16.msra.mxu0 0
        %1683 = vmatprep.subr.bf16.mxu0 0
        %1684 = vmatpush2.bf16.msra.mxu0 0
        %1685 = vmatprep.subr.bf16.mxu0 0
        %1686 = vmatpush2.bf16.msra.mxu0 0
        %1687 = vmatprep.subr.bf16.mxu0 0
        %1688 = vmatpush2.bf16.msra.mxu0 0
        %1689 = vmatprep.subr.bf16.mxu0 0
        %1690 = vmatpush2.bf16.msra.mxu0 0
        %1691 = vmatprep.subr.bf16.mxu0 0
        %1692 = vmatpush2.bf16.msra.mxu0 0
        %1693 = vmatprep.subr.bf16.mxu0 0
        %1694 = vmatpush2.bf16.msra.mxu0 0
        %1695 = vmatprep.mubr.bf16.mxu0 0
        %1696 = vmatmul.mubr.bf16.gmra.mxu0 %v1405
        %v1697 = vpop.f32.mrf.mxu0
        %v1698 = vadd.f32 0.0, %v1697
        %v1699 = vpop.f32.mrf.mxu0
        %v1700 = vadd.f32 0.0, %v1699
        %v1701 = vpop.f32.mrf.mxu0
        %v1702 = vadd.f32 0.0, %v1701
        %v1703 = vpop.f32.mrf.mxu0
        %v1704 = vadd.f32 0.0, %v1703
        %1705 = vmatprep.mubr.bf16.mxu0 0
        %1706 = vmatmul.mubr.bf16.gmra.mxu0 %v1406
        %v1707 = vpop.f32.mrf.mxu0
        %v1708 = vadd.f32 0.0, %v1707
        %v1709 = vpop.f32.mrf.mxu0
        %v1710 = vadd.f32 0.0, %v1709
        %v1711 = vpop.f32.mrf.mxu0
        %v1712 = vadd.f32 0.0, %v1711
        %v1713 = vpop.f32.mrf.mxu0
        %v1714 = vadd.f32 0.0, %v1713
        %1715 = vdwg.mxu0
        %1716 = vmatprep.subr.bf16.mxu0 %v1621
        %1717 = vmatpush1.bf16.msra.mxu0 %v1620
        %1718 = vmatprep.subr.bf16.mxu0 %v1616
        %1719 = vmatpush1.bf16.msra.mxu0 %v1615
        %1720 = vmatprep.subr.bf16.mxu0 %v1611
        %1721 = vmatpush1.bf16.msra.mxu0 %v1610
        %1722 = vmatprep.subr.bf16.mxu0 %v1606
        %1723 = vmatpush1.bf16.msra.mxu0 %v1605
        %1724 = vmatprep.subr.bf16.mxu0 %v1601
        %1725 = vmatpush1.bf16.msra.mxu0 %v1600
        %1726 = vmatprep.subr.bf16.mxu0 %v1596
        %1727 = vmatpush1.bf16.msra.mxu0 %v1595
        %1728 = vmatprep.subr.bf16.mxu0 %v1591
        %1729 = vmatpush1.bf16.msra.mxu0 %v1590
        %1730 = vmatprep.subr.bf16.mxu0 %v1586
        %1731 = vmatpush1.bf16.msra.mxu0 %v1585
        %1732 = vmatprep.subr.bf16.mxu0 0
        %1733 = vmatpush2.bf16.msra.mxu0 0
        %1734 = vmatprep.subr.bf16.mxu0 0
        %1735 = vmatpush2.bf16.msra.mxu0 0
        %1736 = vmatprep.subr.bf16.mxu0 0
        %1737 = vmatpush2.bf16.msra.mxu0 0
        %1738 = vmatprep.subr.bf16.mxu0 0
        %1739 = vmatpush2.bf16.msra.mxu0 0
        %1740 = vmatprep.subr.bf16.mxu0 0
        %1741 = vmatpush2.bf16.msra.mxu0 0
        %1742 = vmatprep.subr.bf16.mxu0 0
        %1743 = vmatpush2.bf16.msra.mxu0 0
        %1744 = vmatprep.subr.bf16.mxu0 0
        %1745 = vmatpush2.bf16.msra.mxu0 0
        %1746 = vmatprep.subr.bf16.mxu0 0
        %1747 = vmatpush2.bf16.msra.mxu0 0
        %1748 = vmatprep.mubr.bf16.mxu0 0
        %1749 = vmatmul.mubr.bf16.gmra.mxu0 %v1405
        %v1750 = vpop.f32.mrf.mxu0
        %v1751 = vadd.f32 0.0, %v1750
        %v1752 = vpop.f32.mrf.mxu0
        %v1753 = vadd.f32 0.0, %v1752
        %v1754 = vpop.f32.mrf.mxu0
        %v1755 = vadd.f32 0.0, %v1754
        %v1756 = vpop.f32.mrf.mxu0
        %v1757 = vadd.f32 0.0, %v1756
        %1758 = vmatprep.mubr.bf16.mxu0 0
        %1759 = vmatmul.mubr.bf16.gmra.mxu0 %v1406
        %v1760 = vpop.f32.mrf.mxu0
        %v1761 = vadd.f32 0.0, %v1760
        %v1762 = vpop.f32.mrf.mxu0
        %v1763 = vadd.f32 0.0, %v1762
        %v1764 = vpop.f32.mrf.mxu0
        %v1765 = vadd.f32 0.0, %v1764
        %v1766 = vpop.f32.mrf.mxu0
        %v1767 = vadd.f32 0.0, %v1766
        %1768 = vdwg.mxu0
        %1769 = vmatprep.subr.bf16.mxu0 0
        %1770 = vmatpush1.bf16.msra.mxu0 %v1622
        %1771 = vmatprep.subr.bf16.mxu0 0
        %1772 = vmatpush1.bf16.msra.mxu0 %v1617
        %1773 = vmatprep.subr.bf16.mxu0 0
        %1774 = vmatpush1.bf16.msra.mxu0 %v1612
        %1775 = vmatprep.subr.bf16.mxu0 0
        %1776 = vmatpush1.bf16.msra.mxu0 %v1607
        %1777 = vmatprep.subr.bf16.mxu0 0
        %1778 = vmatpush1.bf16.msra.mxu0 %v1602
        %1779 = vmatprep.subr.bf16.mxu0 0
        %1780 = vmatpush1.bf16.msra.mxu0 %v1597
        %1781 = vmatprep.subr.bf16.mxu0 0
        %1782 = vmatpush1.bf16.msra.mxu0 %v1592
        %1783 = vmatprep.subr.bf16.mxu0 0
        %1784 = vmatpush1.bf16.msra.mxu0 %v1587
        %1785 = vmatprep.subr.bf16.mxu0 0
        %1786 = vmatpush2.bf16.msra.mxu0 0
        %1787 = vmatprep.subr.bf16.mxu0 0
        %1788 = vmatpush2.bf16.msra.mxu0 0
        %1789 = vmatprep.subr.bf16.mxu0 0
        %1790 = vmatpush2.bf16.msra.mxu0 0
        %1791 = vmatprep.subr.bf16.mxu0 0
        %1792 = vmatpush2.bf16.msra.mxu0 0
        %1793 = vmatprep.subr.bf16.mxu0 0
        %1794 = vmatpush2.bf16.msra.mxu0 0
        %1795 = vmatprep.subr.bf16.mxu0 0
        %1796 = vmatpush2.bf16.msra.mxu0 0
        %1797 = vmatprep.subr.bf16.mxu0 0
        %1798 = vmatpush2.bf16.msra.mxu0 0
        %1799 = vmatprep.subr.bf16.mxu0 0
        %1800 = vmatpush2.bf16.msra.mxu0 0
        %1801 = vmatprep.mubr.bf16.mxu0 0
        %1802 = vmatmul.mubr.bf16.gmra.mxu0 %v1405
        %v1803 = vpop.f32.mrf.mxu0
        %v1804 = vadd.f32 0.0, %v1803
        %v1805 = vpop.f32.mrf.mxu0
        %v1806 = vpop.f32.mrf.mxu0
        %v1807 = vadd.f32 0.0, %v1806
        %v1808 = vpop.f32.mrf.mxu0
        %1809 = vmatprep.mubr.bf16.mxu0 0
        %1810 = vmatmul.mubr.bf16.gmra.mxu0 %v1406
        %v1811 = vpop.f32.mrf.mxu0
        %v1812 = vadd.f32 0.0, %v1811
        %v1813 = vpop.f32.mrf.mxu0
        %v1814 = vpop.f32.mrf.mxu0
        %v1815 = vadd.f32 0.0, %v1814
        %v1816 = vpop.f32.mrf.mxu0
        %1817 = vdwg.mxu0
        %v1818 = vrot.slane %v1698, 6
        %v1819 = vrot.slane %v1702, 6
        %v1820 = vrot.slane %v1708, 6
        %v1821 = vrot.slane %v1712, 6
        %v1822 = vsel %vm850, %v1820, %v1821
        %v1823 = vsel %vm850, %v1819, %v1820
        %v1824 = vsel %vm850, %v1818, %v1819
        %v1825 = vsel %vm850, %v1821, %v1818
        %v1826 = vadd.f32 %v1751, %v1825
        %v1827 = vadd.f32 %v1755, %v1824
        %v1828 = vadd.f32 %v1761, %v1823
        %v1829 = vadd.f32 %v1765, %v1822
        %v1830 = vrot.slane %v1700, 7
        %v1831 = vrot.slane %v1704, 7
        %v1832 = vrot.slane %v1710, 7
        %v1833 = vrot.slane %v1714, 7
        %v1834 = vsel %vm863, %v1832, %v1833
        %v1835 = vsel %vm863, %v1831, %v1832
        %v1836 = vsel %vm863, %v1830, %v1831
        %v1837 = vsel %vm863, %v1833, %v1830
        %v1838 = vadd.f32 %v1826, %v1837
        %v1839 = vadd.f32 %v1827, %v1836
        %v1840 = vadd.f32 %v1828, %v1835
        %v1841 = vadd.f32 %v1829, %v1834
        %v1842 = vrot.slane %v1753, 1
        %v1843 = vrot.slane %v1757, 1
        %v1844 = vrot.slane %v1763, 1
        %v1845 = vrot.slane %v1767, 1
        %v1846 = vsel %vm876, %v1844, %v1845
        %v1847 = vsel %vm876, %v1843, %v1844
        %v1848 = vsel %vm876, %v1842, %v1843
        %v1849 = vsel %vm876, %v1845, %v1842
        %v1850 = vadd.f32 %v1838, %v1848
        %v1851 = vadd.f32 %v1839, %v1847
        %v1852 = vadd.f32 %v1840, %v1846
        %v1853 = vadd.f32 %v1841, %v1849
        %v1854 = vrot.slane %v1804, 2
        %v1855 = vrot.slane %v1807, 2
        %v1856 = vrot.slane %v1812, 2
        %v1857 = vrot.slane %v1815, 2
        %v1858 = vsel %vm889, %v1856, %v1857
        %v1859 = vsel %vm889, %v1855, %v1856
        %v1860 = vsel %vm889, %v1854, %v1855
        %v1861 = vsel %vm889, %v1857, %v1854
        %v1862 = vadd.f32 %v1850, %v1860
        %v1863 = vadd.f32 %v1851, %v1859
        %v1864 = vadd.f32 %v1852, %v1858
        %v1865 = vadd.f32 %v1853, %v1861
        %v1866 = vld [vmem:[%s6] sm:$0x1]
        %v1868 = vlaneseq
        %v1869 = vshrl.u32 %v1868, 7
        %v1870 = vsub.s32 0, %v1869
        %v1871 = vrot.slane %v1866, %v1870
        %v1873 = vadd.f32 %v1862, %v1871
        %v1874 = vadd.f32 %v1863, %v1871
        %v1875 = vadd.f32 %v1864, %v1871
        %v1876 = vadd.f32 %v1865, %v1871
        %v1877 = vmax.f32 %v1873, 0.0
        %v1878 = vmax.f32 %v1874, 0.0
        %v1879 = vmax.f32 %v1875, 0.0
        %v1880 = vmax.f32 %v1876, 0.0
        %v1881 = vsel %vm917, %v1877, 0.0
        %v1882 = vsel %vm918, %v1878, 0.0
        %v1883 = vsel %vm919, %v1879, 0.0
        %v1884 = vsel %vm920, %v1880, 0.0
        %v1885 = vpack.c.bf16 %v1882, %v1881
        %v1886 = vpack.c.bf16 %v1884, %v1883
        %v1887 = vld [vmem:[#allocation10] sm:$0xf]
        %v1888 = vld [vmem:[#allocation10 + $0x4] sm:$0xf]
        %v1889 = vld [vmem:[#allocation10 + $0x8] sm:$0xf]
        %v1890 = vld [vmem:[#allocation10 + $0xc] sm:$0xf]
        %v1891 = vld [vmem:[#allocation10 + $0x10] sm:$0xf]
        %v1892 = vld [vmem:[#allocation10 + $0x14] sm:$0xf]
        %v1893 = vld [vmem:[#allocation10 + $0x18] sm:$0xf]
        %v1894 = vld [vmem:[#allocation10 + $0x1c] sm:$0xf]
        %v1895 = vld [vmem:[#allocation10 + $0x20] sm:$0xf]
        %v1896 = vld [vmem:[#allocation10 + $0x24] sm:$0xf]
        %v1897 = vld [vmem:[#allocation10 + $0x28] sm:$0xf]
        %v1898 = vld [vmem:[#allocation10 + $0x2c] sm:$0xf]
        %v1899 = vld [vmem:[#allocation10 + $0x30] sm:$0xf]
        %v1900 = vld [vmem:[#allocation10 + $0x34] sm:$0xf]
        %v1901 = vld [vmem:[#allocation10 + $0x38] sm:$0xf]
        %v1902 = vld [vmem:[#allocation10 + $0x3c] sm:$0xf]
        %v1903 = vld [vmem:[%s8] sm:$0x1]
        %v1905 = vlaneseq
        %v1906 = vshrl.u32 %v1905, 7
        %v1907 = vsub.s32 0, %v1906
        %v1908 = vrot.slane %v1903, %v1907
        %v1926 = vunpack.c.l.b16 %v1887
        %v1927 = vunpack.c.l.b16 %v1888
        %v1928 = vunpack.c.l.b16 %v1889
        %v1929 = vunpack.c.l.b16 %v1890
        %v1930 = vunpack.c.l.b16 %v1891
        %v1931 = vunpack.c.l.b16 %v1892
        %v1932 = vunpack.c.l.b16 %v1893
        %v1933 = vunpack.c.l.b16 %v1894
        %v1934 = vunpack.c.l.b16 %v1895
        %v1935 = vunpack.c.l.b16 %v1896
        %v1936 = vunpack.c.l.b16 %v1897
        %v1937 = vunpack.c.l.b16 %v1898
        %v1938 = vunpack.c.l.b16 %v1899
        %v1939 = vunpack.c.l.b16 %v1900
        %v1940 = vunpack.c.l.b16 %v1901
        %v1941 = vunpack.c.l.b16 %v1902
        %v1942 = vpack.c.b16 %v1927, %v1926
        %v1943 = vpack.c.b16 %v1929, %v1928
        %v1944 = vpack.c.b16 %v1931, %v1930
        %v1945 = vpack.c.b16 %v1933, %v1932
        %v1946 = vpack.c.b16 %v1935, %v1934
        %v1947 = vpack.c.b16 %v1937, %v1936
        %v1948 = vpack.c.b16 %v1939, %v1938
        %v1949 = vpack.c.b16 %v1941, %v1940
        %1958 = vmatprep.subr.bf16.mxu0 0
        %1959 = vmatpush1.bf16.msra.mxu0 %v1949
        %1960 = vmatprep.subr.bf16.mxu0 0
        %1961 = vmatpush1.bf16.msra.mxu0 %v1948
        %1962 = vmatprep.subr.bf16.mxu0 0
        %1963 = vmatpush1.bf16.msra.mxu0 %v1947
        %1964 = vmatprep.subr.bf16.mxu0 0
        %1965 = vmatpush1.bf16.msra.mxu0 %v1946
        %1966 = vmatprep.subr.bf16.mxu0 0
        %1967 = vmatpush1.bf16.msra.mxu0 %v1945
        %1968 = vmatprep.subr.bf16.mxu0 0
        %1969 = vmatpush1.bf16.msra.mxu0 %v1944
        %1970 = vmatprep.subr.bf16.mxu0 0
        %1971 = vmatpush1.bf16.msra.mxu0 %v1943
        %1972 = vmatprep.subr.bf16.mxu0 0
        %1973 = vmatpush1.bf16.msra.mxu0 %v1942
        %1974 = vmatprep.subr.bf16.mxu0 0
        %1975 = vmatpush2.bf16.msra.mxu0 0
        %1976 = vmatprep.subr.bf16.mxu0 0
        %1977 = vmatpush2.bf16.msra.mxu0 0
        %1978 = vmatprep.subr.bf16.mxu0 0
        %1979 = vmatpush2.bf16.msra.mxu0 0
        %1980 = vmatprep.subr.bf16.mxu0 0
        %1981 = vmatpush2.bf16.msra.mxu0 0
        %1982 = vmatprep.subr.bf16.mxu0 0
        %1983 = vmatpush2.bf16.msra.mxu0 0
        %1984 = vmatprep.subr.bf16.mxu0 0
        %1985 = vmatpush2.bf16.msra.mxu0 0
        %1986 = vmatprep.subr.bf16.mxu0 0
        %1987 = vmatpush2.bf16.msra.mxu0 0
        %1988 = vmatprep.subr.bf16.mxu0 0
        %1989 = vmatpush2.bf16.msra.mxu0 0
        %1990 = vmatprep.mubr.bf16.mxu0 0
        %1991 = vmatmul.mubr.bf16.gmra.mxu0 %v1885
        %v1992 = vpop.f32.mrf.mxu0
        %v1993 = vadd.f32 %v1908, %v1992
        %v1994 = vpop.f32.mrf.mxu0
        %v1995 = vpop.f32.mrf.mxu0
        %v1996 = vadd.f32 %v1908, %v1995
        %v1997 = vpop.f32.mrf.mxu0
        %1998 = vmatprep.mubr.bf16.mxu0 0
        %1999 = vmatmul.mubr.bf16.gmra.mxu0 %v1886
        %v2000 = vpop.f32.mrf.mxu0
        %v2001 = vadd.f32 %v1908, %v2000
        %v2002 = vpop.f32.mrf.mxu0
        %v2003 = vpop.f32.mrf.mxu0
        %v2004 = vadd.f32 %v1908, %v2003
        %v2005 = vpop.f32.mrf.mxu0
        %2006 = vdwg.mxu0
        %v2007 = vpack.c.bf16 %v1996, %v1993
        %v2008 = vpack.c.bf16 %v2004, %v2001
        %v2011 = vunpack.c.l.b16 %v2007
        %v2012 = vunpack.c.h.b16 %v2007
        %v2013 = vunpack.c.l.b16 %v2008
        %v2014 = vunpack.c.h.b16 %v2008
        %v2015 = vpack.c.b16 %v2011, %v2011
        %v2016 = vpack.c.b16 %v2012, %v2012
        %v2017 = vpack.c.b16 %v2013, %v2013
        %v2018 = vpack.c.b16 %v2014, %v2014
        %2023 = vst [vmem:[%s408] sm:$0xf] %v2015
        %2024 = vst [vmem:[%s408 + $0x4] sm:$0xf] %v2016
        %2025 = vst [vmem:[%s408 + $0x8] sm:$0xf] %v2017
        %2026 = vst [vmem:[%s408 + $0xc] sm:$0xf] %v2018
        %s2027 = sand.u32 %s230, 1
        %s2028 = scalar_lea.sflag [#allocation4], %s2027
        %s2029 = sand.u32 %s230, 1
        %s2030 = smul.addr %s2029, 16
        %s2031 = scalar_lea.vmem [#allocation11], %s2030
        // Predicated region
        $region77: #{tpu_custom_call.1} parent=55 // pred_check
          %p2032 = pneg %p240
        $region78: #{tpu_custom_call.1} parent=55 // pred_check_branch
          %2034 = sbr.rel (%p2032) target = $region80
        $region79: #{tpu_custom_call.1} parent=55 // pred_region
          %s2036 = ssub.s32 256, 256
          %2037 = vsyncadd %s2028, %s2036
          %s2038 = smul.addr %s28, 4
          %s2039 = smul.addr %s2038, 64
          %s2040 = scalar_lea.hbm %s9, %s2039
          %s2041 = sshll.u32 %s2031, 4
          %s2042 = int_to_ptr.vmem [resolvable:$true] %s2041
          %2047 = dma.vmem_to_hbm [thread:$0]  %s2042, 256, %s2040, %s2028, 64, 64, 4
        $region80: #{tpu_custom_call.1} parent=55 // pred_fallthru
          _
      $region56: #{tpu_custom_call.1} parent=5 // pred_fallthru
        _
      %p2048 = scmp.le.s32.totalorder 2, %s23
      // Predicated region
      $region81: #{tpu_custom_call.1} parent=5 // pred_check
        %p2049 = pneg %p2048
      $region82: #{tpu_custom_call.1} parent=5 // pred_check_branch
        %2051 = sbr.rel (%p2049) target = $region84
      $region83: #{tpu_custom_call.1} parent=5 // pred_region
        %s2052 = ssub.s32 %s23, 2
        // Predicated region
        $region85: #{tpu_custom_call.1} parent=83 // pred_check
          %p2053 = pneg %p246
        $region86: #{tpu_custom_call.1} parent=83 // pred_check_branch
          %2055 = sbr.rel (%p2053) target = $region88
        $region87: #{tpu_custom_call.1} parent=83 // pred_region
          %s2056 = sand.u32 %s231, 1
          %s2057 = scalar_lea.sflag [#allocation4], %s2056
          %s2058 = sand.u32 %s231, 1
          %s2059 = smul.addr %s2058, 16
          %s2060 = scalar_lea.vmem [#allocation11], %s2059
          %2061 = dma.done %s2057, 256
        $region88: #{tpu_custom_call.1} parent=83 // pred_fallthru
          _
      $region84: #{tpu_custom_call.1} parent=5 // pred_fallthru
        _
    $region6: #{tpu_custom_call.1} parent=1 // loop_footer
      %s27 = sadd.s32 1, %s23
    $region7: #{tpu_custom_call.1} parent=1 // loop_footer_branch
      %22 = sbr.rel target = $region3
    $region8: #{tpu_custom_call.1} parent=1 // loop_exit
      _
    %2062 = vsyncpa [#allocation3], 1
    %s2063 = scalar_lea.sflag [#allocation3], 1
    %2064 = vsyncpa %s2063, 1
    %2065 = vsyncpa [#allocation6], 1
    %2066 = vsyncpa [#allocation9], 1
    %2067 = vsyncpa [#allocation4], 1
    %s2068 = scalar_lea.sflag [#allocation4], 1
    %2069 = vsyncpa %s2068, 1

// kernel: tpu_custom_call.1
$region0: #{tpu_custom_call.1}
  #allocation0 [shape = 'u32[]', space=smem, size = 0x4, offset = 0x4, fixed_abs, tag = 'smem constant byte address 0x4 - core index']
  #allocation1 [shape = 'u32[144,128]{1,0:T(1,128)}', space=vmem, size = 0x12000, scoped, tag = 'internal scratch']
  %s0 = inlined_call_operand.hbm [shape: bf16[2,32,128], index: 0, kind: input, shape index: {}]
  %s1 = inlined_call_operand.hbm [shape: bf16[128,640], index: 1, kind: input, shape index: {}]
  %s2 = inlined_call_operand.vmem [shape: f32[1,128], index: 2, kind: input, shape index: {}]
  %s3 = inlined_call_operand.hbm [shape: bf16[128,640], index: 3, kind: input, shape index: {}]
  %s4 = inlined_call_operand.vmem [shape: f32[1,128], index: 4, kind: input, shape index: {}]
  %s5 = inlined_call_operand.hbm [shape: bf16[128,640], index: 5, kind: input, shape index: {}]
  %s6 = inlined_call_operand.vmem [shape: f32[1,128], index: 6, kind: input, shape index: {}]
  %s7 = inlined_call_operand.hbm [shape: bf16[128,128], index: 7, kind: input, shape index: {}]
  %s8 = inlined_call_operand.vmem [shape: f32[1,128], index: 8, kind: input, shape index: {}]
  %s9 = inlined_call_operand.hbm [shape: bf16[2,32,128], index: 9, kind: output, shape index: {}]
  %s10 = sld [smem:[#allocation0]]
  $region89: #{tpu_custom_call.1} parent=0
    _
  %s12 = ssub.s32 1, %s10
  %s13 = scalar_select 0, %s12, %s10
  $region1: #{tpu_custom_call.1} parent=0
    #allocation2 [shape = 'u8[16384]{0}', space=vmem, size = 0x4000, scoped, tag = 'input window, operand 0']
    #allocation3 [shape = 's32[2]{0}', space=sflag, size = 0x8, scoped, tag = 'scoped memory for tpu_custom_call.1']
    #allocation4 [shape = 's32[2]{0}', space=sflag, size = 0x8, scoped, tag = 'scoped memory for tpu_custom_call.1']
    #allocation5 [shape = 'u8[163840]{0}', space=vmem, size = 0x28000, scoped, tag = 'input window, operand 1, single buffered']
    #allocation6 [shape = 's32[1]{0}', space=sflag, size = 0x4, scoped, tag = 'scoped memory for tpu_custom_call.1']
    #allocation7 [shape = 'u8[163840]{0}', space=vmem, size = 0x28000, scoped, tag = 'input window, operand 3, single buffered']
    #allocation8 [shape = 'u8[163840]{0}', space=vmem, size = 0x28000, scoped, tag = 'input window, operand 5, single buffered']
    #allocation9 [shape = 's32[1]{0}', space=sflag, size = 0x4, scoped, tag = 'scoped memory for tpu_custom_call.1']
    #allocation10 [shape = 'u8[32768]{0}', space=vmem, size = 0x8000, scoped, tag = 'input window, operand 7, single buffered']
    #allocation11 [shape = 'u8[16384]{0}', space=vmem, size = 0x4000, scoped, tag = 'output window, operand 0']
    %14 = vsyncpa [#allocation3], 0
    %s15 = scalar_lea.sflag [#allocation3], 1
    %16 = vsyncpa %s15, 0
    %17 = vsyncpa [#allocation6], 0
    %18 = vsyncpa [#allocation9], 0
    %19 = vsyncpa [#allocation4], 0
    %s20 = scalar_lea.sflag [#allocation4], 1
    %21 = vsyncpa %s20, 0
    loop: start=0, step=1, limit=4
    $region2: #{tpu_custom_call.1} parent=1 // loop_pre_header
      _
    $region3: #{tpu_custom_call.1} parent=1 // loop_header
      %s23 = sphi 0, %s27
      %p24 = scmp.ge.s32.totalorder %s23, 4
      %s33 = sphi 0, %s35
      %s36 = sphi 0, %s33
      %s37 = sphi 0, %s36
      %s53 = sphi 0, %s37
      %s57 = sphi 0, %s57
      %s59 = sphi 0, %s57
      %s60 = sphi 0, %s59
      %s74 = sphi 0, %s60
      %s78 = sphi 0, %s78
      %s80 = sphi 0, %s78
      %s81 = sphi 0, %s80
      %s95 = sphi 0, %s81
      %s99 = sphi 0, %s99
      %s101 = sphi 0, %s99
      %s102 = sphi 0, %s101
      %s116 = sphi 0, %s102
      %s120 = sphi 0, %s120
      %s122 = sphi 0, %s120
      %s123 = sphi 0, %s122
      %s137 = sphi 0, %s123
      %s141 = sphi 0, %s141
      %s143 = sphi 0, %s141
      %s144 = sphi 0, %s143
      %s158 = sphi 0, %s144
      %s162 = sphi 0, %s162
      %s164 = sphi 0, %s162
      %s165 = sphi 0, %s164
      %s179 = sphi 0, %s165
      %s183 = sphi 0, %s183
      %s185 = sphi 0, %s183
      %s186 = sphi 0, %s185
      %s200 = sphi 0, %s186
      %s204 = sphi 0, %s204
      %s206 = sphi 0, %s204
      %s207 = sphi 0, %s206
      %s221 = sphi 0, %s207
      %s227 = sphi 0, %s229
      %s230 = sphi 0, %s227
      %s231 = sphi 0, %s230
      %s247 = sphi 0, %s231
    $region4: #{tpu_custom_call.1} parent=1 // loop_header_branch
      %26 = sbr.rel (%p24) target = $region8
    $region5: #{tpu_custom_call.1} parent=1 // loop_body
      %s28 = ssub.s32 %s23, 1
      %s29 = ssub.s32 %s23, 2
      %s30 = sadd.s32 %s23, 1
      %s31 = ssub.s32 %s23, %s30
      %p32 = scmp.eq.s32.totalorder %s31, 0
      %s34 = sadd.s32 %s33, 1
      %s35 = scalar_select %p32, %s33, %s34
      %p38 = pneg %p32
      %p39 = scmp.eq.s32.totalorder %s23, 1
      %p40 = por %p38, %p39
      %p41 = scmp.ne.s32.totalorder %s33, %s36
      %p42 = scmp.eq.s32.totalorder %s23, 0
      %p43 = por %p41, %p42
      %p44 = scmp.ne.s32.totalorder %s33, %s36
      %p45 = scmp.eq.s32.totalorder %s28, 1
      %p46 = por %p44, %p45
      %p47 = scmp.ne.s32.totalorder %s36, %s37
      %p48 = scmp.eq.s32.totalorder %s28, 0
      %p49 = por %p47, %p48
      %p50 = scmp.ne.s32.totalorder %s36, %s37
      %p51 = scmp.eq.s32.totalorder %s29, 1
      %p52 = por %p50, %p51
      %p54 = scmp.ne.s32.totalorder %s37, %s53
      %p55 = scmp.eq.s32.totalorder %s29, 0
      %p56 = por %p54, %p55
      %s58 = sadd.s32 %s57, 1
      %p61 = scmp.eq.s32.totalorder %s23, 1
      %p62 = scmp.ne.s32.totalorder %s57, %s59
      %p63 = scmp.eq.s32.totalorder %s23, 0
      %p64 = por %p62, %p63
      %p65 = scmp.ne.s32.totalorder %s57, %s59
      %p66 = scmp.eq.s32.totalorder %s28, 1
      %p67 = por %p65, %p66
      %p68 = scmp.ne.s32.totalorder %s59, %s60
      %p69 = scmp.eq.s32.totalorder %s28, 0
      %p70 = por %p68, %p69
      %p71 = scmp.ne.s32.totalorder %s59, %s60
      %p72 = scmp.eq.s32.totalorder %s29, 1
      %p73 = por %p71, %p72
      %p75 = scmp.ne.s32.totalorder %s60, %s74
      %p76 = scmp.eq.s32.totalorder %s29, 0
      %p77 = por %p75, %p76
      %s79 = sadd.s32 %s78, 1
      %p82 = scmp.eq.s32.totalorder %s23, 1
      %p83 = scmp.ne.s32.totalorder %s78, %s80
      %p84 = scmp.eq.s32.totalorder %s23, 0
      %p85 = por %p83, %p84
      %p86 = scmp.ne.s32.totalorder %s78, %s80
      %p87 = scmp.eq.s32.totalorder %s28, 1
      %p88 = por %p86, %p87
      %p89 = scmp.ne.s32.totalorder %s80, %s81
      %p90 = scmp.eq.s32.totalorder %s28, 0
      %p91 = por %p89, %p90
      %p92 = scmp.ne.s32.totalorder %s80, %s81
      %p93 = scmp.eq.s32.totalorder %s29, 1
      %p94 = por %p92, %p93
      %p96 = scmp.ne.s32.totalorder %s81, %s95
      %p97 = scmp.eq.s32.totalorder %s29, 0
      %p98 = por %p96, %p97
      %s100 = sadd.s32 %s99, 1
      %p103 = scmp.eq.s32.totalorder %s23, 1
      %p104 = scmp.ne.s32.totalorder %s99, %s101
      %p105 = scmp.eq.s32.totalorder %s23, 0
      %p106 = por %p104, %p105
      %p107 = scmp.ne.s32.totalorder %s99, %s101
      %p108 = scmp.eq.s32.totalorder %s28, 1
      %p109 = por %p107, %p108
      %p110 = scmp.ne.s32.totalorder %s101, %s102
      %p111 = scmp.eq.s32.totalorder %s28, 0
      %p112 = por %p110, %p111
      %p113 = scmp.ne.s32.totalorder %s101, %s102
      %p114 = scmp.eq.s32.totalorder %s29, 1
      %p115 = por %p113, %p114
      %p117 = scmp.ne.s32.totalorder %s102, %s116
      %p118 = scmp.eq.s32.totalorder %s29, 0
      %p119 = por %p117, %p118
      %s121 = sadd.s32 %s120, 1
      %p124 = scmp.eq.s32.totalorder %s23, 1
      %p125 = scmp.ne.s32.totalorder %s120, %s122
      %p126 = scmp.eq.s32.totalorder %s23, 0
      %p127 = por %p125, %p126
      %p128 = scmp.ne.s32.totalorder %s120, %s122
      %p129 = scmp.eq.s32.totalorder %s28, 1
      %p130 = por %p128, %p129
      %p131 = scmp.ne.s32.totalorder %s122, %s123
      %p132 = scmp.eq.s32.totalorder %s28, 0
      %p133 = por %p131, %p132
      %p134 = scmp.ne.s32.totalorder %s122, %s123
      %p135 = scmp.eq.s32.totalorder %s29, 1
      %p136 = por %p134, %p135
      %p138 = scmp.ne.s32.totalorder %s123, %s137
      %p139 = scmp.eq.s32.totalorder %s29, 0
      %p140 = por %p138, %p139
      %s142 = sadd.s32 %s141, 1
      %p145 = scmp.eq.s32.totalorder %s23, 1
      %p146 = scmp.ne.s32.totalorder %s141, %s143
      %p147 = scmp.eq.s32.totalorder %s23, 0
      %p148 = por %p146, %p147
      %p149 = scmp.ne.s32.totalorder %s141, %s143
      %p150 = scmp.eq.s32.totalorder %s28, 1
      %p151 = por %p149, %p150
      %p152 = scmp.ne.s32.totalorder %s143, %s144
      %p153 = scmp.eq.s32.totalorder %s28, 0
      %p154 = por %p152, %p153
      %p155 = scmp.ne.s32.totalorder %s143, %s144
      %p156 = scmp.eq.s32.totalorder %s29, 1
      %p157 = por %p155, %p156
      %p159 = scmp.ne.s32.totalorder %s144, %s158
      %p160 = scmp.eq.s32.totalorder %s29, 0
      %p161 = por %p159, %p160
      %s163 = sadd.s32 %s162, 1
      %p166 = scmp.eq.s32.totalorder %s23, 1
      %p167 = scmp.ne.s32.totalorder %s162, %s164
      %p168 = scmp.eq.s32.totalorder %s23, 0
      %p169 = por %p167, %p168
      %p170 = scmp.ne.s32.totalorder %s162, %s164
      %p171 = scmp.eq.s32.totalorder %s28, 1
      %p172 = por %p170, %p171
      %p173 = scmp.ne.s32.totalorder %s164, %s165
      %p174 = scmp.eq.s32.totalorder %s28, 0
      %p175 = por %p173, %p174
      %p176 = scmp.ne.s32.totalorder %s164, %s165
      %p177 = scmp.eq.s32.totalorder %s29, 1
      %p178 = por %p176, %p177
      %p180 = scmp.ne.s32.totalorder %s165, %s179
      %p181 = scmp.eq.s32.totalorder %s29, 0
      %p182 = por %p180, %p181
      %s184 = sadd.s32 %s183, 1
      %p187 = scmp.eq.s32.totalorder %s23, 1
      %p188 = scmp.ne.s32.totalorder %s183, %s185
      %p189 = scmp.eq.s32.totalorder %s23, 0
      %p190 = por %p188, %p189
      %p191 = scmp.ne.s32.totalorder %s183, %s185
      %p192 = scmp.eq.s32.totalorder %s28, 1
      %p193 = por %p191, %p192
      %p194 = scmp.ne.s32.totalorder %s185, %s186
      %p195 = scmp.eq.s32.totalorder %s28, 0
      %p196 = por %p194, %p195
      %p197 = scmp.ne.s32.totalorder %s185, %s186
      %p198 = scmp.eq.s32.totalorder %s29, 1
      %p199 = por %p197, %p198
      %p201 = scmp.ne.s32.totalorder %s186, %s200
      %p202 = scmp.eq.s32.totalorder %s29, 0
      %p203 = por %p201, %p202
      %s205 = sadd.s32 %s204, 1
      %p208 = scmp.eq.s32.totalorder %s23, 1
      %p209 = scmp.ne.s32.totalorder %s204, %s206
      %p210 = scmp.eq.s32.totalorder %s23, 0
      %p211 = por %p209, %p210
      %p212 = scmp.ne.s32.totalorder %s204, %s206
      %p213 = scmp.eq.s32.totalorder %s28, 1
      %p214 = por %p212, %p213
      %p215 = scmp.ne.s32.totalorder %s206, %s207
      %p216 = scmp.eq.s32.totalorder %s28, 0
      %p217 = por %p215, %p216
      %p218 = scmp.ne.s32.totalorder %s206, %s207
      %p219 = scmp.eq.s32.totalorder %s29, 1
      %p220 = por %p218, %p219
      %p222 = scmp.ne.s32.totalorder %s207, %s221
      %p223 = scmp.eq.s32.totalorder %s29, 0
      %p224 = por %p222, %p223
      %s225 = ssub.s32 %s23, %s30
      %p226 = scmp.eq.s32.totalorder %s225, 0
      %s228 = sadd.s32 %s227, 1
      %s229 = scalar_select %p226, %s227, %s228
      %p232 = pneg %p226
      %p233 = scmp.eq.s32.totalorder %s23, 1
      %p234 = por %p232, %p233
      %p235 = scmp.ne.s32.totalorder %s227, %s230
      %p236 = scmp.eq.s32.totalorder %s23, 0
      %p237 = por %p235, %p236
      %p238 = scmp.ne.s32.totalorder %s227, %s230
      %p239 = scmp.eq.s32.totalorder %s28, 1
      %p240 = por %p238, %p239
      %p241 = scmp.ne.s32.totalorder %s230, %s231
      %p242 = scmp.eq.s32.totalorder %s28, 0
      %p243 = por %p241, %p242
      %p244 = scmp.ne.s32.totalorder %s230, %s231
      %p245 = scmp.eq.s32.totalorder %s29, 1
      %p246 = por %p244, %p245
      %p248 = scmp.ne.s32.totalorder %s231, %s247
      %p249 = scmp.eq.s32.totalorder %s29, 0
      %p250 = por %p248, %p249
      %p251 = scmp.le.s32.totalorder 1, %s23
      %p252 = scmp.lt.s32.totalorder %s23, 3
      %p253 = pnand %p251, %p252
      %p254 = pneg %p253
      // Predicated region
      $region9: #{tpu_custom_call.1} parent=5 // pred_check
        _
      $region10: #{tpu_custom_call.1} parent=5 // pred_check_branch
        %256 = sbr.rel (%p253) target = $region12
      $region11: #{tpu_custom_call.1} parent=5 // pred_region
        %s257 = ssub.s32 %s23, 1
        // Predicated region
        $region13: #{tpu_custom_call.1} parent=11 // pred_check
          %p258 = pneg %p70
        $region14: #{tpu_custom_call.1} parent=11 // pred_check_branch
          %260 = sbr.rel (%p258) target = $region16
        $region15: #{tpu_custom_call.1} parent=11 // pred_region
          %s262 = ssub.s32 5120, 5120
          %263 = vsyncadd [#allocation6], %s262
          %s264 = sshll.u32 [#allocation5], 4
          %s265 = int_to_ptr.vmem [resolvable:$true] %s264
          %270 = dma.hbm_to_vmem [thread:$0]  %s1, 5120, %s265, [#allocation6], 320, 320, 20
        $region16: #{tpu_custom_call.1} parent=11 // pred_fallthru
          _
        // Predicated region
        $region17: #{tpu_custom_call.1} parent=11 // pred_check
          %p271 = pneg %p91
        $region18: #{tpu_custom_call.1} parent=11 // pred_check_branch
          %273 = sbr.rel (%p271) target = $region20
        $region19: #{tpu_custom_call.1} parent=11 // pred_region
          _
        $region20: #{tpu_custom_call.1} parent=11 // pred_fallthru
          _
        // Predicated region
        $region21: #{tpu_custom_call.1} parent=11 // pred_check
          %p274 = pneg %p112
        $region22: #{tpu_custom_call.1} parent=11 // pred_check_branch
          %276 = sbr.rel (%p274) target = $region24
        $region23: #{tpu_custom_call.1} parent=11 // pred_region
          %s278 = ssub.s32 5120, 5120
          %279 = vsyncadd [#allocation6], %s278
          %s280 = sshll.u32 [#allocation7], 4
          %s281 = int_to_ptr.vmem [resolvable:$true] %s280
          %286 = dma.hbm_to_vmem [thread:$0]  %s3, 5120, %s281, [#allocation6], 320, 320, 20
        $region24: #{tpu_custom_call.1} parent=11 // pred_fallthru
          _
        // Predicated region
        $region25: #{tpu_custom_call.1} parent=11 // pred_check
          %p287 = pneg %p133
        $region26: #{tpu_custom_call.1} parent=11 // pred_check_branch
          %289 = sbr.rel (%p287) target = $region28
        $region27: #{tpu_custom_call.1} parent=11 // pred_region
          _
        $region28: #{tpu_custom_call.1} parent=11 // pred_fallthru
          _
        // Predicated region
        $region29: #{tpu_custom_call.1} parent=11 // pred_check
          %p290 = pneg %p154
        $region30: #{tpu_custom_call.1} parent=11 // pred_check_branch
          %292 = sbr.rel (%p290) target = $region32
        $region31: #{tpu_custom_call.1} parent=11 // pred_region
          %s294 = ssub.s32 5120, 5120
          %295 = vsyncadd [#allocation9], %s294
          %s296 = sshll.u32 [#allocation8], 4
          %s297 = int_to_ptr.vmem [resolvable:$true] %s296
          %302 = dma.hbm_to_vmem [thread:$0]  %s5, 5120, %s297, [#allocation9], 320, 320, 20
        $region32: #{tpu_custom_call.1} parent=11 // pred_fallthru
          _
        // Predicated region
        $region33: #{tpu_custom_call.1} parent=11 // pred_check
          %p303 = pneg %p175
        $region34: #{tpu_custom_call.1} parent=11 // pred_check_branch
          %305 = sbr.rel (%p303) target = $region36
        $region35: #{tpu_custom_call.1} parent=11 // pred_region
          _
        $region36: #{tpu_custom_call.1} parent=11 // pred_fallthru
          _
        // Predicated region
        $region37: #{tpu_custom_call.1} parent=11 // pred_check
          %p306 = pneg %p196
        $region38: #{tpu_custom_call.1} parent=11 // pred_check_branch
          %308 = sbr.rel (%p306) target = $region40
        $region39: #{tpu_custom_call.1} parent=11 // pred_region
          %s310 = ssub.s32 1024, 1024
          %311 = vsyncadd [#allocation9], %s310
          %s312 = sshll.u32 [#allocation10], 4
          %s313 = int_to_ptr.vmem [resolvable:$true] %s312
          %318 = dma.hbm_to_vmem [thread:$0]  %s7, 1024, %s313, [#allocation9], 64, 64, 4
        $region40: #{tpu_custom_call.1} parent=11 // pred_fallthru
          _
        // Predicated region
        $region41: #{tpu_custom_call.1} parent=11 // pred_check
          %p319 = pneg %p217
        $region42: #{tpu_custom_call.1} parent=11 // pred_check_branch
          %321 = sbr.rel (%p319) target = $region44
        $region43: #{tpu_custom_call.1} parent=11 // pred_region
          _
        $region44: #{tpu_custom_call.1} parent=11 // pred_fallthru
          _
      $region12: #{tpu_custom_call.1} parent=5 // pred_fallthru
        _
      %p322 = scmp.lt.s32.totalorder %s23, 2
      // Predicated region
      $region45: #{tpu_custom_call.1} parent=5 // pred_check
        %p323 = pneg %p322
      $region46: #{tpu_custom_call.1} parent=5 // pred_check_branch
        %325 = sbr.rel (%p323) target = $region48
      $region47: #{tpu_custom_call.1} parent=5 // pred_region
        // Predicated region
        $region49: #{tpu_custom_call.1} parent=47 // pred_check
          %p326 = pneg %p43
        $region50: #{tpu_custom_call.1} parent=47 // pred_check_branch
          %328 = sbr.rel (%p326) target = $region52
        $region51: #{tpu_custom_call.1} parent=47 // pred_region
          %s329 = sand.u32 %s33, 1
          %s330 = scalar_lea.sflag [#allocation3], %s329
          %s331 = sand.u32 %s33, 1
          %s332 = smul.addr %s331, 16
          %s333 = scalar_lea.vmem [#allocation2], %s332
          %s335 = ssub.s32 256, 256
          %336 = vsyncadd %s330, %s335
          %s337 = smul.addr %s23, 4
          %s338 = smul.addr %s337, 64
          %s339 = scalar_lea.hbm %s0, %s338
          %s340 = sshll.u32 %s333, 4
          %s341 = int_to_ptr.vmem [resolvable:$true] %s340
          %346 = dma.hbm_to_vmem [thread:$0]  %s339, 256, %s341, %s330, 64, 64, 4
        $region52: #{tpu_custom_call.1} parent=47 // pred_fallthru
          _
      $region48: #{tpu_custom_call.1} parent=5 // pred_fallthru
        _
      %p347 = scmp.le.s32.totalorder 1, %s23
      %p348 = scmp.lt.s32.totalorder %s23, 3
      %p349 = pnand %p347, %p348
      %p350 = pneg %p349
      // Predicated region
      $region53: #{tpu_custom_call.1} parent=5 // pred_check
        _
      $region54: #{tpu_custom_call.1} parent=5 // pred_check_branch
        %352 = sbr.rel (%p349) target = $region56
      $region55: #{tpu_custom_call.1} parent=5 // pred_region
        %s353 = ssub.s32 %s23, 1
        %s354 = sand.u32 %s36, 1
        %s355 = scalar_lea.sflag [#allocation3], %s354
        %s356 = sand.u32 %s36, 1
        %s357 = smul.addr %s356, 16
        %s358 = scalar_lea.vmem [#allocation2], %s357
        // Predicated region
        $region57: #{tpu_custom_call.1} parent=55 // pred_check
          %p359 = pneg %p49
        $region58: #{tpu_custom_call.1} parent=55 // pred_check_branch
          %361 = sbr.rel (%p359) target = $region60
        $region59: #{tpu_custom_call.1} parent=55 // pred_region
          %362 = dma.done %s355, 256
        $region60: #{tpu_custom_call.1} parent=55 // pred_fallthru
          _
        // Predicated region
        $region61: #{tpu_custom_call.1} parent=55 // pred_check
          %p363 = pneg %p70
        $region62: #{tpu_custom_call.1} parent=55 // pred_check_branch
          %365 = sbr.rel (%p363) target = $region64
        $region63: #{tpu_custom_call.1} parent=55 // pred_region
          %366 = dma.done [#allocation6], 5120
        $region64: #{tpu_custom_call.1} parent=55 // pred_fallthru
          _
        // Predicated region
        $region65: #{tpu_custom_call.1} parent=55 // pred_check
          %p367 = pneg %p112
        $region66: #{tpu_custom_call.1} parent=55 // pred_check_branch
          %369 = sbr.rel (%p367) target = $region68
        $region67: #{tpu_custom_call.1} parent=55 // pred_region
          %370 = dma.done [#allocation6], 5120
        $region68: #{tpu_custom_call.1} parent=55 // pred_fallthru
          _
        // Predicated region
        $region69: #{tpu_custom_call.1} parent=55 // pred_check
          %p371 = pneg %p154
        $region70: #{tpu_custom_call.1} parent=55 // pred_check_branch
          %373 = sbr.rel (%p371) target = $region72
        $region71: #{tpu_custom_call.1} parent=55 // pred_region
          %374 = dma.done [#allocation9], 5120
        $region72: #{tpu_custom_call.1} parent=55 // pred_fallthru
          _
        // Predicated region
        $region73: #{tpu_custom_call.1} parent=55 // pred_check
          %p375 = pneg %p196
        $region74: #{tpu_custom_call.1} parent=55 // pred_check_branch
          %377 = sbr.rel (%p375) target = $region76
        $region75: #{tpu_custom_call.1} parent=55 // pred_region
          %378 = dma.done [#allocation9], 1024
        $region76: #{tpu_custom_call.1} parent=55 // pred_fallthru
          _
        %s379 = sand.u32 %s36, 1
        %s380 = scalar_lea.sflag [#allocation3], %s379
        %s381 = sand.u32 %s36, 1
        %s382 = smul.addr %s381, 16
        %s383 = scalar_lea.vmem [#allocation2], %s382
        %p384 = pneg %p49
        %p385 = pneg %p46
        %p386 = pneg %p70
        %p387 = pneg %p67
        %p388 = pneg %p91
        %p389 = pneg %p88
        %p390 = pneg %p112
        %p391 = pneg %p109
        %p392 = pneg %p133
        %p393 = pneg %p130
        %p394 = pneg %p154
        %p395 = pneg %p151
        %p396 = pneg %p175
        %p397 = pneg %p172
        %p398 = pneg %p196
        %p399 = pneg %p193
        %p400 = pneg %p217
        %p401 = pneg %p214
        %p402 = pneg %p243
        %p403 = pneg %p240
        %s404 = sand.u32 %s230, 1
        %s405 = scalar_lea.sflag [#allocation4], %s404
        %s406 = sand.u32 %s230, 1
        %s407 = smul.addr %s406, 16
        %s408 = scalar_lea.vmem [#allocation11], %s407
        %v410 = vld [vmem:[%s358] sm:$0xf]
        %v411 = vld [vmem:[%s358 + $0x4] sm:$0xf]
        %v412 = vld [vmem:[%s358 + $0x8] sm:$0xf]
        %v413 = vld [vmem:[%s358 + $0xc] sm:$0xf]
        %v414 = vlaneseq
        %v415 = vshrl.u32 %v414, 7
        %v416 = vadd.s32 %v415, 8
        %v417 = vadd.s32 %v415, 16
        %v418 = vadd.s32 %v415, 24
        %vm419 = vcmp.lt.s32.totalorder %v415, 16
        %vm420 = vcmp.lt.s32.totalorder %v416, 16
        %vm421 = vcmp.lt.s32.totalorder %v417, 16
        %vm422 = vcmp.lt.s32.totalorder %v418, 16
        %v423 = vld [vmem:[#allocation5] sm:$0xff]
        %v424 = vld [vmem:[#allocation5 + $0x8] sm:$0xff]
        %v425 = vld [vmem:[#allocation5 + $0x10] sm:$0xf]
        %v426 = vld [vmem:[#allocation5 + $0x14] sm:$0xff]
        %v427 = vld [vmem:[#allocation5 + $0x1c] sm:$0xff]
        %v428 = vld [vmem:[#allocation5 + $0x24] sm:$0xf]
        %v429 = vld [vmem:[#allocation5 + $0x28] sm:$0xff]
        %v430 = vld [vmem:[#allocation5 + $0x30] sm:$0xff]
        %v431 = vld [vmem:[#allocation5 + $0x38] sm:$0xf]
        %v432 = vld [vmem:[#allocation5 + $0x3c] sm:$0xff]
        %v433 = vld [vmem:[#allocation5 + $0x44] sm:$0xff]
        %v434 = vld [vmem:[#allocation5 + $0x4c] sm:$0xf]
        %v435 = vld [vmem:[#allocation5 + $0x50] sm:$0xff]
        %v436 = vld [vmem:[#allocation5 + $0x58] sm:$0xff]
        %v437 = vld [vmem:[#allocation5 + $0x60] sm:$0xf]
        %v438 = vld [vmem:[#allocation5 + $0x64] sm:$0xff]
        %v439 = vld [vmem:[#allocation5 + $0x6c] sm:$0xff]
        %v440 = vld [vmem:[#allocation5 + $0x74] sm:$0xf]
        %v441 = vld [vmem:[#allocation5 + $0x78] sm:$0xff]
        %v442 = vld [vmem:[#allocation5 + $0x80] sm:$0xff]
        %v443 = vld [vmem:[#allocation5 + $0x88] sm:$0xf]
        %v444 = vld [vmem:[#allocation5 + $0x8c] sm:$0xff]
        %v445 = vld [vmem:[#allocation5 + $0x94] sm:$0xff]
        %v446 = vld [vmem:[#allocation5 + $0x9c] sm:$0xf]
        %v447 = vld [vmem:[#allocation5 + $0xa0] sm:$0xff]
        %v448 = vld [vmem:[#allocation5 + $0xa8] sm:$0xff]
        %v449 = vld [vmem:[#allocation5 + $0xb0] sm:$0xf]
        %v450 = vld [vmem:[#allocation5 + $0xb4] sm:$0xff]
        %v451 = vld [vmem:[#allocation5 + $0xbc] sm:$0xff]
        %v452 = vld [vmem:[#allocation5 + $0xc4] sm:$0xf]
        %v453 = vld [vmem:[#allocation5 + $0xc8] sm:$0xff]
        %v454 = vld [vmem:[#allocation5 + $0xd0] sm:$0xff]
        %v455 = vld [vmem:[#allocation5 + $0xd8] sm:$0xf]
        %v456 = vld [vmem:[#allocation5 + $0xdc] sm:$0xff]
        %v457 = vld [vmem:[#allocation5 + $0xe4] sm:$0xff]
        %v458 = vld [vmem:[#allocation5 + $0xec] sm:$0xf]
        %v459 = vld [vmem:[#allocation5 + $0xf0] sm:$0xff]
        %v460 = vld [vmem:[#allocation5 + $0xf8] sm:$0xff]
        %v461 = vld [vmem:[#allocation5 + $0x100] sm:$0xf]
        %v462 = vld [vmem:[#allocation5 + $0x104] sm:$0xff]
        %v463 = vld [vmem:[#allocation5 + $0x10c] sm:$0xff]
        %v464 = vld [vmem:[#allocation5 + $0x114] sm:$0xf]
        %v465 = vld [vmem:[#allocation5 + $0x118] sm:$0xff]
        %v466 = vld [vmem:[#allocation5 + $0x120] sm:$0xff]
        %v467 = vld [vmem:[#allocation5 + $0x128] sm:$0xf]
        %v468 = vld [vmem:[#allocation5 + $0x12c] sm:$0xff]
        %v469 = vld [vmem:[#allocation5 + $0x134] sm:$0xff]
        %v470 = vld [vmem:[#allocation5 + $0x13c] sm:$0xf]
        %v475 = vunpack.c.l.b16 %v410
        %v476 = vunpack.c.l.b16 %v411
        %v477 = vunpack.c.l.b16 %v412
        %v478 = vunpack.c.l.b16 %v413
        %v479 = vpack.c.b16 %v476, %v475
        %v480 = vpack.c.b16 %v478, %v477
        %v531 = vunpack.c.l.b16 %v423
        %v532 = vunpack.c.h.b16 %v423
        %v533 = vunpack.c.l.b16 %v424
        %v534 = vunpack.c.h.b16 %v424
        %v535 = vunpack.c.l.b16 %v425
        %v536 = vunpack.c.l.b16 %v426
        %v537 = vunpack.c.h.b16 %v426
        %v538 = vunpack.c.l.b16 %v427
        %v539 = vunpack.c.h.b16 %v427
        %v540 = vunpack.c.l.b16 %v428
        %v541 = vunpack.c.l.b16 %v429
        %v542 = vunpack.c.h.b16 %v429
        %v543 = vunpack.c.l.b16 %v430
        %v544 = vunpack.c.h.b16 %v430
        %v545 = vunpack.c.l.b16 %v431
        %v546 = vunpack.c.l.b16 %v432
        %v547 = vunpack.c.h.b16 %v432
        %v548 = vunpack.c.l.b16 %v433
        %v549 = vunpack.c.h.b16 %v433
        %v550 = vunpack.c.l.b16 %v434
        %v551 = vunpack.c.l.b16 %v435
        %v552 = vunpack.c.h.b16 %v435
        %v553 = vunpack.c.l.b16 %v436
        %v554 = vunpack.c.h.b16 %v436
        %v555 = vunpack.c.l.b16 %v437
        %v556 = vunpack.c.l.b16 %v438
        %v557 = vunpack.c.h.b16 %v438
        %v558 = vunpack.c.l.b16 %v439
        %v559 = vunpack.c.h.b16 %v439
        %v560 = vunpack.c.l.b16 %v440
        %v561 = vunpack.c.l.b16 %v441
        %v562 = vunpack.c.h.b16 %v441
        %v563 = vunpack.c.l.b16 %v442
        %v564 = vunpack.c.h.b16 %v442
        %v565 = vunpack.c.l.b16 %v443
        %v566 = vunpack.c.l.b16 %v444
        %v567 = vunpack.c.h.b16 %v444
        %v568 = vunpack.c.l.b16 %v445
        %v569 = vunpack.c.h.b16 %v445
        %v570 = vunpack.c.l.b16 %v446
        %v571 = vunpack.c.l.b16 %v447
        %v572 = vunpack.c.h.b16 %v447
        %v573 = vunpack.c.l.b16 %v448
        %v574 = vunpack.c.h.b16 %v448
        %v575 = vunpack.c.l.b16 %v449
        %v576 = vunpack.c.l.b16 %v450
        %v577 = vunpack.c.h.b16 %v450
        %v578 = vunpack.c.l.b16 %v451
        %v579 = vunpack.c.h.b16 %v451
        %v580 = vunpack.c.l.b16 %v452
        %v581 = vunpack.c.l.b16 %v453
        %v582 = vunpack.c.h.b16 %v453
        %v583 = vunpack.c.l.b16 %v454
        %v584 = vunpack.c.h.b16 %v454
        %v585 = vunpack.c.l.b16 %v455
        %v586 = vunpack.c.l.b16 %v456
        %v587 = vunpack.c.h.b16 %v456
        %v588 = vunpack.c.l.b16 %v457
        %v589 = vunpack.c.h.b16 %v457
        %v590 = vunpack.c.l.b16 %v458
        %v591 = vunpack.c.l.b16 %v459
        %v592 = vunpack.c.h.b16 %v459
        %v593 = vunpack.c.l.b16 %v460
        %v594 = vunpack.c.h.b16 %v460
        %v595 = vunpack.c.l.b16 %v461
        %v596 = vunpack.c.l.b16 %v462
        %v597 = vunpack.c.h.b16 %v462
        %v598 = vunpack.c.l.b16 %v463
        %v599 = vunpack.c.h.b16 %v463
        %v600 = vunpack.c.l.b16 %v464
        %v601 = vunpack.c.l.b16 %v465
        %v602 = vunpack.c.h.b16 %v465
        %v603 = vunpack.c.l.b16 %v466
        %v604 = vunpack.c.h.b16 %v466
        %v605 = vunpack.c.l.b16 %v467
        %v606 = vunpack.c.l.b16 %v468
        %v607 = vunpack.c.h.b16 %v468
        %v608 = vunpack.c.l.b16 %v469
        %v609 = vunpack.c.h.b16 %v469
        %v610 = vunpack.c.l.b16 %v470
        %v611 = vpack.c.b16 %v536, %v531
        %v612 = vpack.c.b16 %v537, %v532
        %v613 = vpack.c.b16 %v538, %v533
        %v614 = vpack.c.b16 %v539, %v534
        %v615 = vpack.c.b16 %v540, %v535
        %v616 = vpack.c.b16 %v546, %v541
        %v617 = vpack.c.b16 %v547, %v542
        %v618 = vpack.c.b16 %v548, %v543
        %v619 = vpack.c.b16 %v549, %v544
        %v620 = vpack.c.b16 %v550, %v545
        %v621 = vpack.c.b16 %v556, %v551
        %v622 = vpack.c.b16 %v557, %v552
        %v623 = vpack.c.b16 %v558, %v553
        %v624 = vpack.c.b16 %v559, %v554
        %v625 = vpack.c.b16 %v560, %v555
        %v626 = vpack.c.b16 %v566, %v561
        %v627 = vpack.c.b16 %v567, %v562
        %v628 = vpack.c.b16 %v568, %v563
        %v629 = vpack.c.b16 %v569, %v564
        %v630 = vpack.c.b16 %v570, %v565
        %v631 = vpack.c.b16 %v576, %v571
        %v632 = vpack.c.b16 %v577, %v572
        %v633 = vpack.c.b16 %v578, %v573
        %v634 = vpack.c.b16 %v579, %v574
        %v635 = vpack.c.b16 %v580, %v575
        %v636 = vpack.c.b16 %v586, %v581
        %v637 = vpack.c.b16 %v587, %v582
        %v638 = vpack.c.b16 %v588, %v583
        %v639 = vpack.c.b16 %v589, %v584
        %v640 = vpack.c.b16 %v590, %v585
        %v641 = vpack.c.b16 %v596, %v591
        %v642 = vpack.c.b16 %v597, %v592
        %v643 = vpack.c.b16 %v598, %v593
        %v644 = vpack.c.b16 %v599, %v594
        %v645 = vpack.c.b16 %v600, %v595
        %v646 = vpack.c.b16 %v606, %v601
        %v647 = vpack.c.b16 %v607, %v602
        %v648 = vpack.c.b16 %v608, %v603
        %v649 = vpack.c.b16 %v609, %v604
        %v650 = vpack.c.b16 %v610, %v605
        %691 = vmatprep.subr.bf16.mxu0 %v647
        %692 = vmatpush1.bf16.msra.mxu0 %v646
        %693 = vmatprep.subr.bf16.mxu0 %v642
        %694 = vmatpush1.bf16.msra.mxu0 %v641
        %695 = vmatprep.subr.bf16.mxu0 %v637
        %696 = vmatpush1.bf16.msra.mxu0 %v636
        %697 = vmatprep.subr.bf16.mxu0 %v632
        %698 = vmatpush1.bf16.msra.mxu0 %v631
        %699 = vmatprep.subr.bf16.mxu0 %v627
        %700 = vmatpush1.bf16.msra.mxu0 %v626
        %701 = vmatprep.subr.bf16.mxu0 %v622
        %702 = vmatpush1.bf16.msra.mxu0 %v621
        %703 = vmatprep.subr.bf16.mxu0 %v617
        %704 = vmatpush1.bf16.msra.mxu0 %v616
        %705 = vmatprep.subr.bf16.mxu0 %v612
        %706 = vmatpush1.bf16.msra.mxu0 %v611
        %707 = vmatprep.subr.bf16.mxu0 0
        %708 = vmatpush2.bf16.msra.mxu0 0
        %709 = vmatprep.subr.bf16.mxu0 0
        %710 = vmatpush2.bf16.msra.mxu0 0
        %711 = vmatprep.subr.bf16.mxu0 0
        %712 = vmatpush2.bf16.msra.mxu0 0
        %713 = vmatprep.subr.bf16.mxu0 0
        %714 = vmatpush2.bf16.msra.mxu0 0
        %715 = vmatprep.subr.bf16.mxu0 0
        %716 = vmatpush2.bf16.msra.mxu0 0
        %717 = vmatprep.subr.bf16.mxu0 0
        %718 = vmatpush2.bf16.msra.mxu0 0
        %719 = vmatprep.subr.bf16.mxu0 0
        %720 = vmatpush2.bf16.msra.mxu0 0
        %721 = vmatprep.subr.bf16.mxu0 0
        %722 = vmatpush2.bf16.msra.mxu0 0
        %723 = vmatprep.mubr.bf16.mxu0 0
        %724 = vmatmul.mubr.bf16.gmra.mxu0 %v479
        %v725 = vpop.f32.mrf.mxu0
        %v726 = vadd.f32 0.0, %v725
        %v727 = vpop.f32.mrf.mxu0
        %v728 = vadd.f32 0.0, %v727
        %v729 = vpop.f32.mrf.mxu0
        %v730 = vadd.f32 0.0, %v729
        %v731 = vpop.f32.mrf.mxu0
        %v732 = vadd.f32 0.0, %v731
        %733 = vmatprep.mubr.bf16.mxu0 0
        %734 = vmatmul.mubr.bf16.gmra.mxu0 %v480
        %v735 = vpop.f32.mrf.mxu0
        %v736 = vadd.f32 0.0, %v735
        %v737 = vpop.f32.mrf.mxu0
        %v738 = vadd.f32 0.0, %v737
        %v739 = vpop.f32.mrf.mxu0
        %v740 = vadd.f32 0.0, %v739
        %v741 = vpop.f32.mrf.mxu0
        %v742 = vadd.f32 0.0, %v741
        %743 = vdwg.mxu0
        %744 = vmatprep.subr.bf16.mxu0 %v649
        %745 = vmatpush1.bf16.msra.mxu0 %v648
        %746 = vmatprep.subr.bf16.mxu0 %v644
        %747 = vmatpush1.bf16.msra.mxu0 %v643
        %748 = vmatprep.subr.bf16.mxu0 %v639
        %749 = vmatpush1.bf16.msra.mxu0 %v638
        %750 = vmatprep.subr.bf16.mxu0 %v634
        %751 = vmatpush1.bf16.msra.mxu0 %v633
        %752 = vmatprep.subr.bf16.mxu0 %v629
        %753 = vmatpush1.bf16.msra.mxu0 %v628
        %754 = vmatprep.subr.bf16.mxu0 %v624
        %755 = vmatpush1.bf16.msra.mxu0 %v623
        %756 = vmatprep.subr.bf16.mxu0 %v619
        %757 = vmatpush1.bf16.msra.mxu0 %v618
        %758 = vmatprep.subr.bf16.mxu0 %v614
        %759 = vmatpush1.bf16.msra.mxu0 %v613
        %760 = vmatprep.subr.bf16.mxu0 0
        %761 = vmatpush2.bf16.msra.mxu0 0
        %762 = vmatprep.subr.bf16.mxu0 0
        %763 = vmatpush2.bf16.msra.mxu0 0
        %764 = vmatprep.subr.bf16.mxu0 0
        %765 = vmatpush2.bf16.msra.mxu0 0
        %766 = vmatprep.subr.bf16.mxu0 0
        %767 = vmatpush2.bf16.msra.mxu0 0
        %768 = vmatprep.subr.bf16.mxu0 0
        %769 = vmatpush2.bf16.msra.mxu0 0
        %770 = vmatprep.subr.bf16.mxu0 0
        %771 = vmatpush2.bf16.msra.mxu0 0
        %772 = vmatprep.subr.bf16.mxu0 0
        %773 = vmatpush2.bf16.msra.mxu0 0
        %774 = vmatprep.subr.bf16.mxu0 0
        %775 = vmatpush2.bf16.msra.mxu0 0
        %776 = vmatprep.mubr.bf16.mxu0 0
        %777 = vmatmul.mubr.bf16.gmra.mxu0 %v479
        %v778 = vpop.f32.mrf.mxu0
        %v779 = vadd.f32 0.0, %v778
        %v780 = vpop.f32.mrf.mxu0
        %v781 = vadd.f32 0.0, %v780
        %v782 = vpop.f32.mrf.mxu0
        %v783 = vadd.f32 0.0, %v782
        %v784 = vpop.f32.mrf.mxu0
        %v785 = vadd.f32 0.0, %v784
        %786 = vmatprep.mubr.bf16.mxu0 0
        %787 = vmatmul.mubr.bf16.gmra.mxu0 %v480
        %v788 = vpop.f32.mrf.mxu0
        %v789 = vadd.f32 0.0, %v788
        %v790 = vpop.f32.mrf.mxu0
        %v791 = vadd.f32 0.0, %v790
        %v792 = vpop.f32.mrf.mxu0
        %v793 = vadd.f32 0.0, %v792
        %v794 = vpop.f32.mrf.mxu0
        %v795 = vadd.f32 0.0, %v794
        %796 = vdwg.mxu0
        %797 = vmatprep.subr.bf16.mxu0 0
        %798 = vmatpush1.bf16.msra.mxu0 %v650
        %799 = vmatprep.subr.bf16.mxu0 0
        %800 = vmatpush1.bf16.msra.mxu0 %v645
        %801 = vmatprep.subr.bf16.mxu0 0
        %802 = vmatpush1.bf16.msra.mxu0 %v640
        %803 = vmatprep.subr.bf16.mxu0 0
        %804 = vmatpush1.bf16.msra.mxu0 %v635
        %805 = vmatprep.subr.bf16.mxu0 0
        %806 = vmatpush1.bf16.msra.mxu0 %v630
        %807 = vmatprep.subr.bf16.mxu0 0
        %808 = vmatpush1.bf16.msra.mxu0 %v625
        %809 = vmatprep.subr.bf16.mxu0 0
        %810 = vmatpush1.bf16.msra.mxu0 %v620
        %811 = vmatprep.subr.bf16.mxu0 0
        %812 = vmatpush1.bf16.msra.mxu0 %v615
        %813 = vmatprep.subr.bf16.mxu0 0
        %814 = vmatpush2.bf16.msra.mxu0 0
        %815 = vmatprep.subr.bf16.mxu0 0
        %816 = vmatpush2.bf16.msra.mxu0 0
        %817 = vmatprep.subr.bf16.mxu0 0
        %818 = vmatpush2.bf16.msra.mxu0 0
        %819 = vmatprep.subr.bf16.mxu0 0
        %820 = vmatpush2.bf16.msra.mxu0 0
        %821 = vmatprep.subr.bf16.mxu0 0
        %822 = vmatpush2.bf16.msra.mxu0 0
        %823 = vmatprep.subr.bf16.mxu0 0
        %824 = vmatpush2.bf16.msra.mxu0 0
        %825 = vmatprep.subr.bf16.mxu0 0
        %826 = vmatpush2.bf16.msra.mxu0 0
        %827 = vmatprep.subr.bf16.mxu0 0
        %828 = vmatpush2.bf16.msra.mxu0 0
        %829 = vmatprep.mubr.bf16.mxu0 0
        %830 = vmatmul.mubr.bf16.gmra.mxu0 %v479
        %v831 = vpop.f32.mrf.mxu0
        %v832 = vadd.f32 0.0, %v831
        %v833 = vpop.f32.mrf.mxu0
        %v834 = vpop.f32.mrf.mxu0
        %v835 = vadd.f32 0.0, %v834
        %v836 = vpop.f32.mrf.mxu0
        %837 = vmatprep.mubr.bf16.mxu0 0
        %838 = vmatmul.mubr.bf16.gmra.mxu0 %v480
        %v839 = vpop.f32.mrf.mxu0
        %v840 = vadd.f32 0.0, %v839
        %v841 = vpop.f32.mrf.mxu0
        %v842 = vpop.f32.mrf.mxu0
        %v843 = vadd.f32 0.0, %v842
        %v844 = vpop.f32.mrf.mxu0
        %845 = vdwg.mxu0
        %v846 = vrot.slane %v726, 6
        %v847 = vrot.slane %v730, 6
        %v848 = vrot.slane %v736, 6
        %v849 = vrot.slane %v740, 6
        %vm850 = vcmp.lt.s32.totalorder %v415, 2
        %v851 = vsel %vm850, %v848, %v849
        %v852 = vsel %vm850, %v847, %v848
        %v853 = vsel %vm850, %v846, %v847
        %v854 = vsel %vm850, %v849, %v846
        %v855 = vadd.f32 %v779, %v854
        %v856 = vadd.f32 %v783, %v853
        %v857 = vadd.f32 %v789, %v852
        %v858 = vadd.f32 %v793, %v851
        %v859 = vrot.slane %v728, 7
        %v860 = vrot.slane %v732, 7
        %v861 = vrot.slane %v738, 7
        %v862 = vrot.slane %v742, 7
        %vm863 = vcmp.lt.s32.totalorder %v415, 1
        %v864 = vsel %vm863, %v861, %v862
        %v865 = vsel %vm863, %v860, %v861
        %v866 = vsel %vm863, %v859, %v860
        %v867 = vsel %vm863, %v862, %v859
        %v868 = vadd.f32 %v855, %v867
        %v869 = vadd.f32 %v856, %v866
        %v870 = vadd.f32 %v857, %v865
        %v871 = vadd.f32 %v858, %v864
        %v872 = vrot.slane %v781, 1
        %v873 = vrot.slane %v785, 1
        %v874 = vrot.slane %v791, 1
        %v875 = vrot.slane %v795, 1
        %vm876 = vcmp.lt.s32.totalorder %v415, 7
        %v877 = vsel %vm876, %v874, %v875
        %v878 = vsel %vm876, %v873, %v874
        %v879 = vsel %vm876, %v872, %v873
        %v880 = vsel %vm876, %v875, %v872
        %v881 = vadd.f32 %v868, %v879
        %v882 = vadd.f32 %v869, %v878
        %v883 = vadd.f32 %v870, %v877
        %v884 = vadd.f32 %v871, %v880
        %v885 = vrot.slane %v832, 2
        %v886 = vrot.slane %v835, 2
        %v887 = vrot.slane %v840, 2
        %v888 = vrot.slane %v843, 2
        %vm889 = vcmp.lt.s32.totalorder %v415, 6
        %v890 = vsel %vm889, %v887, %v888
        %v891 = vsel %vm889, %v886, %v887
        %v892 = vsel %vm889, %v885, %v886
        %v893 = vsel %vm889, %v888, %v885
        %v894 = vadd.f32 %v881, %v892
        %v895 = vadd.f32 %v882, %v891
        %v896 = vadd.f32 %v883, %v890
        %v897 = vadd.f32 %v884, %v893
        %v898 = vld [vmem:[%s2] sm:$0x1]
        %v900 = vlaneseq
        %v901 = vshrl.u32 %v900, 7
        %v902 = vsub.s32 0, %v901
        %v903 = vrot.slane %v898, %v902
        %v905 = vadd.f32 %v894, %v903
        %v906 = vadd.f32 %v895, %v903
        %v907 = vadd.f32 %v896, %v903
        %v908 = vadd.f32 %v897, %v903
        %v909 = vmax.f32 %v905, 0.0
        %v910 = vmax.f32 %v906, 0.0
        %v911 = vmax.f32 %v907, 0.0
        %v912 = vmax.f32 %v908, 0.0
        %v913 = vsel %vm419, 1, 0
        %v914 = vsel %vm420, 1, 0
        %v915 = vsel %vm421, 1, 0
        %v916 = vsel %vm422, 1, 0
        %vm917 = vcmp.eq.s32.totalorder %v913, 1
        %vm918 = vcmp.eq.s32.totalorder %v914, 1
        %vm919 = vcmp.eq.s32.totalorder %v915, 1
        %vm920 = vcmp.eq.s32.totalorder %v916, 1
        %v921 = vsel %vm917, %v909, 0.0
        %v922 = vsel %vm918, %v910, 0.0
        %v923 = vsel %vm919, %v911, 0.0
        %v924 = vsel %vm920, %v912, 0.0
        %v925 = vpack.c.bf16 %v922, %v921
        %v926 = vpack.c.bf16 %v924, %v923
        %v927 = vld [vmem:[#allocation7] sm:$0xff]
        %v928 = vld [vmem:[#allocation7 + $0x8] sm:$0xff]
        %v929 = vld [vmem:[#allocation7 + $0x10] sm:$0xf]
        %v930 = vld [vmem:[#allocation7 + $0x14] sm:$0xff]
        %v931 = vld [vmem:[#allocation7 + $0x1c] sm:$0xff]
        %v932 = vld [vmem:[#allocation7 + $0x24] sm:$0xf]
        %v933 = vld [vmem:[#allocation7 + $0x28] sm:$0xff]
        %v934 = vld [vmem:[#allocation7 + $0x30] sm:$0xff]
        %v935 = vld [vmem:[#allocation7 + $0x38] sm:$0xf]
        %v936 = vld [vmem:[#allocation7 + $0x3c] sm:$0xff]
        %v937 = vld [vmem:[#allocation7 + $0x44] sm:$0xff]
        %v938 = vld [vmem:[#allocation7 + $0x4c] sm:$0xf]
        %v939 = vld [vmem:[#allocation7 + $0x50] sm:$0xff]
        %v940 = vld [vmem:[#allocation7 + $0x58] sm:$0xff]
        %v941 = vld [vmem:[#allocation7 + $0x60] sm:$0xf]
        %v942 = vld [vmem:[#allocation7 + $0x64] sm:$0xff]
        %v943 = vld [vmem:[#allocation7 + $0x6c] sm:$0xff]
        %v944 = vld [vmem:[#allocation7 + $0x74] sm:$0xf]
        %v945 = vld [vmem:[#allocation7 + $0x78] sm:$0xff]
        %v946 = vld [vmem:[#allocation7 + $0x80] sm:$0xff]
        %v947 = vld [vmem:[#allocation7 + $0x88] sm:$0xf]
        %v948 = vld [vmem:[#allocation7 + $0x8c] sm:$0xff]
        %v949 = vld [vmem:[#allocation7 + $0x94] sm:$0xff]
        %v950 = vld [vmem:[#allocation7 + $0x9c] sm:$0xf]
        %v951 = vld [vmem:[#allocation7 + $0xa0] sm:$0xff]
        %v952 = vld [vmem:[#allocation7 + $0xa8] sm:$0xff]
        %v953 = vld [vmem:[#allocation7 + $0xb0] sm:$0xf]
        %v954 = vld [vmem:[#allocation7 + $0xb4] sm:$0xff]
        %v955 = vld [vmem:[#allocation7 + $0xbc] sm:$0xff]
        %v956 = vld [vmem:[#allocation7 + $0xc4] sm:$0xf]
        %v957 = vld [vmem:[#allocation7 + $0xc8] sm:$0xff]
        %v958 = vld [vmem:[#allocation7 + $0xd0] sm:$0xff]
        %v959 = vld [vmem:[#allocation7 + $0xd8] sm:$0xf]
        %v960 = vld [vmem:[#allocation7 + $0xdc] sm:$0xff]
        %v961 = vld [vmem:[#allocation7 + $0xe4] sm:$0xff]
        %v962 = vld [vmem:[#allocation7 + $0xec] sm:$0xf]
        %v963 = vld [vmem:[#allocation7 + $0xf0] sm:$0xff]
        %v964 = vld [vmem:[#allocation7 + $0xf8] sm:$0xff]
        %v965 = vld [vmem:[#allocation7 + $0x100] sm:$0xf]
        %v966 = vld [vmem:[#allocation7 + $0x104] sm:$0xff]
        %v967 = vld [vmem:[#allocation7 + $0x10c] sm:$0xff]
        %v968 = vld [vmem:[#allocation7 + $0x114] sm:$0xf]
        %v969 = vld [vmem:[#allocation7 + $0x118] sm:$0xff]
        %v970 = vld [vmem:[#allocation7 + $0x120] sm:$0xff]
        %v971 = vld [vmem:[#allocation7 + $0x128] sm:$0xf]
        %v972 = vld [vmem:[#allocation7 + $0x12c] sm:$0xff]
        %v973 = vld [vmem:[#allocation7 + $0x134] sm:$0xff]
        %v974 = vld [vmem:[#allocation7 + $0x13c] sm:$0xf]
        %v1023 = vunpack.c.l.b16 %v927
        %v1024 = vunpack.c.h.b16 %v927
        %v1025 = vunpack.c.l.b16 %v928
        %v1026 = vunpack.c.h.b16 %v928
        %v1027 = vunpack.c.l.b16 %v929
        %v1028 = vunpack.c.l.b16 %v930
        %v1029 = vunpack.c.h.b16 %v930
        %v1030 = vunpack.c.l.b16 %v931
        %v1031 = vunpack.c.h.b16 %v931
        %v1032 = vunpack.c.l.b16 %v932
        %v1033 = vunpack.c.l.b16 %v933
        %v1034 = vunpack.c.h.b16 %v933
        %v1035 = vunpack.c.l.b16 %v934
        %v1036 = vunpack.c.h.b16 %v934
        %v1037 = vunpack.c.l.b16 %v935
        %v1038 = vunpack.c.l.b16 %v936
        %v1039 = vunpack.c.h.b16 %v936
        %v1040 = vunpack.c.l.b16 %v937
        %v1041 = vunpack.c.h.b16 %v937
        %v1042 = vunpack.c.l.b16 %v938
        %v1043 = vunpack.c.l.b16 %v939
        %v1044 = vunpack.c.h.b16 %v939
        %v1045 = vunpack.c.l.b16 %v940
        %v1046 = vunpack.c.h.b16 %v940
        %v1047 = vunpack.c.l.b16 %v941
        %v1048 = vunpack.c.l.b16 %v942
        %v1049 = vunpack.c.h.b16 %v942
        %v1050 = vunpack.c.l.b16 %v943
        %v1051 = vunpack.c.h.b16 %v943
        %v1052 = vunpack.c.l.b16 %v944
        %v1053 = vunpack.c.l.b16 %v945
        %v1054 = vunpack.c.h.b16 %v945
        %v1055 = vunpack.c.l.b16 %v946
        %v1056 = vunpack.c.h.b16 %v946
        %v1057 = vunpack.c.l.b16 %v947
        %v1058 = vunpack.c.l.b16 %v948
        %v1059 = vunpack.c.h.b16 %v948
        %v1060 = vunpack.c.l.b16 %v949
        %v1061 = vunpack.c.h.b16 %v949
        %v1062 = vunpack.c.l.b16 %v950
        %v1063 = vunpack.c.l.b16 %v951
        %v1064 = vunpack.c.h.b16 %v951
        %v1065 = vunpack.c.l.b16 %v952
        %v1066 = vunpack.c.h.b16 %v952
        %v1067 = vunpack.c.l.b16 %v953
        %v1068 = vunpack.c.l.b16 %v954
        %v1069 = vunpack.c.h.b16 %v954
        %v1070 = vunpack.c.l.b16 %v955
        %v1071 = vunpack.c.h.b16 %v955
        %v1072 = vunpack.c.l.b16 %v956
        %v1073 = vunpack.c.l.b16 %v957
        %v1074 = vunpack.c.h.b16 %v957
        %v1075 = vunpack.c.l.b16 %v958
        %v1076 = vunpack.c.h.b16 %v958
        %v1077 = vunpack.c.l.b16 %v959
        %v1078 = vunpack.c.l.b16 %v960
        %v1079 = vunpack.c.h.b16 %v960
        %v1080 = vunpack.c.l.b16 %v961
        %v1081 = vunpack.c.h.b16 %v961
        %v1082 = vunpack.c.l.b16 %v962
        %v1083 = vunpack.c.l.b16 %v963
        %v1084 = vunpack.c.h.b16 %v963
        %v1085 = vunpack.c.l.b16 %v964
        %v1086 = vunpack.c.h.b16 %v964
        %v1087 = vunpack.c.l.b16 %v965
        %v1088 = vunpack.c.l.b16 %v966
        %v1089 = vunpack.c.h.b16 %v966
        %v1090 = vunpack.c.l.b16 %v967
        %v1091 = vunpack.c.h.b16 %v967
        %v1092 = vunpack.c.l.b16 %v968
        %v1093 = vunpack.c.l.b16 %v969
        %v1094 = vunpack.c.h.b16 %v969
        %v1095 = vunpack.c.l.b16 %v970
        %v1096 = vunpack.c.h.b16 %v970
        %v1097 = vunpack.c.l.b16 %v971
        %v1098 = vunpack.c.l.b16 %v972
        %v1099 = vunpack.c.h.b16 %v972
        %v1100 = vunpack.c.l.b16 %v973
        %v1101 = vunpack.c.h.b16 %v973
        %v1102 = vunpack.c.l.b16 %v974
        %v1103 = vpack.c.b16 %v1028, %v1023
        %v1104 = vpack.c.b16 %v1029, %v1024
        %v1105 = vpack.c.b16 %v1030, %v1025
        %v1106 = vpack.c.b16 %v1031, %v1026
        %v1107 = vpack.c.b16 %v1032, %v1027
        %v1108 = vpack.c.b16 %v1038, %v1033
        %v1109 = vpack.c.b16 %v1039, %v1034
        %v1110 = vpack.c.b16 %v1040, %v1035
        %v1111 = vpack.c.b16 %v1041, %v1036
        %v1112 = vpack.c.b16 %v1042, %v1037
        %v1113 = vpack.c.b16 %v1048, %v1043
        %v1114 = vpack.c.b16 %v1049, %v1044
        %v1115 = vpack.c.b16 %v1050, %v1045
        %v1116 = vpack.c.b16 %v1051, %v1046
        %v1117 = vpack.c.b16 %v1052, %v1047
        %v1118 = vpack.c.b16 %v1058, %v1053
        %v1119 = vpack.c.b16 %v1059, %v1054
        %v1120 = vpack.c.b16 %v1060, %v1055
        %v1121 = vpack.c.b16 %v1061, %v1056
        %v1122 = vpack.c.b16 %v1062, %v1057
        %v1123 = vpack.c.b16 %v1068, %v1063
        %v1124 = vpack.c.b16 %v1069, %v1064
        %v1125 = vpack.c.b16 %v1070, %v1065
        %v1126 = vpack.c.b16 %v1071, %v1066
        %v1127 = vpack.c.b16 %v1072, %v1067
        %v1128 = vpack.c.b16 %v1078, %v1073
        %v1129 = vpack.c.b16 %v1079, %v1074
        %v1130 = vpack.c.b16 %v1080, %v1075
        %v1131 = vpack.c.b16 %v1081, %v1076
        %v1132 = vpack.c.b16 %v1082, %v1077
        %v1133 = vpack.c.b16 %v1088, %v1083
        %v1134 = vpack.c.b16 %v1089, %v1084
        %v1135 = vpack.c.b16 %v1090, %v1085
        %v1136 = vpack.c.b16 %v1091, %v1086
        %v1137 = vpack.c.b16 %v1092, %v1087
        %v1138 = vpack.c.b16 %v1098, %v1093
        %v1139 = vpack.c.b16 %v1099, %v1094
        %v1140 = vpack.c.b16 %v1100, %v1095
        %v1141 = vpack.c.b16 %v1101, %v1096
        %v1142 = vpack.c.b16 %v1102, %v1097
        %1183 = vmatprep.subr.bf16.mxu0 %v1139
        %1184 = vmatpush1.bf16.msra.mxu0 %v1138
        %1185 = vmatprep.subr.bf16.mxu0 %v1134
        %1186 = vmatpush1.bf16.msra.mxu0 %v1133
        %1187 = vmatprep.subr.bf16.mxu0 %v1129
        %1188 = vmatpush1.bf16.msra.mxu0 %v1128
        %1189 = vmatprep.subr.bf16.mxu0 %v1124
        %1190 = vmatpush1.bf16.msra.mxu0 %v1123
        %1191 = vmatprep.subr.bf16.mxu0 %v1119
        %1192 = vmatpush1.bf16.msra.mxu0 %v1118
        %1193 = vmatprep.subr.bf16.mxu0 %v1114
        %1194 = vmatpush1.bf16.msra.mxu0 %v1113
        %1195 = vmatprep.subr.bf16.mxu0 %v1109
        %1196 = vmatpush1.bf16.msra.mxu0 %v1108
        %1197 = vmatprep.subr.bf16.mxu0 %v1104
        %1198 = vmatpush1.bf16.msra.mxu0 %v1103
        %1199 = vmatprep.subr.bf16.mxu0 0
        %1200 = vmatpush2.bf16.msra.mxu0 0
        %1201 = vmatprep.subr.bf16.mxu0 0
        %1202 = vmatpush2.bf16.msra.mxu0 0
        %1203 = vmatprep.subr.bf16.mxu0 0
        %1204 = vmatpush2.bf16.msra.mxu0 0
        %1205 = vmatprep.subr.bf16.mxu0 0
        %1206 = vmatpush2.bf16.msra.mxu0 0
        %1207 = vmatprep.subr.bf16.mxu0 0
        %1208 = vmatpush2.bf16.msra.mxu0 0
        %1209 = vmatprep.subr.bf16.mxu0 0
        %1210 = vmatpush2.bf16.msra.mxu0 0
        %1211 = vmatprep.subr.bf16.mxu0 0
        %1212 = vmatpush2.bf16.msra.mxu0 0
        %1213 = vmatprep.subr.bf16.mxu0 0
        %1214 = vmatpush2.bf16.msra.mxu0 0
        %1215 = vmatprep.mubr.bf16.mxu0 0
        %1216 = vmatmul.mubr.bf16.gmra.mxu0 %v925
        %v1217 = vpop.f32.mrf.mxu0
        %v1218 = vadd.f32 0.0, %v1217
        %v1219 = vpop.f32.mrf.mxu0
        %v1220 = vadd.f32 0.0, %v1219
        %v1221 = vpop.f32.mrf.mxu0
        %v1222 = vadd.f32 0.0, %v1221
        %v1223 = vpop.f32.mrf.mxu0
        %v1224 = vadd.f32 0.0, %v1223
        %1225 = vmatprep.mubr.bf16.mxu0 0
        %1226 = vmatmul.mubr.bf16.gmra.mxu0 %v926
        %v1227 = vpop.f32.mrf.mxu0
        %v1228 = vadd.f32 0.0, %v1227
        %v1229 = vpop.f32.mrf.mxu0
        %v1230 = vadd.f32 0.0, %v1229
        %v1231 = vpop.f32.mrf.mxu0
        %v1232 = vadd.f32 0.0, %v1231
        %v1233 = vpop.f32.mrf.mxu0
        %v1234 = vadd.f32 0.0, %v1233
        %1235 = vdwg.mxu0
        %1236 = vmatprep.subr.bf16.mxu0 %v1141
        %1237 = vmatpush1.bf16.msra.mxu0 %v1140
        %1238 = vmatprep.subr.bf16.mxu0 %v1136
        %1239 = vmatpush1.bf16.msra.mxu0 %v1135
        %1240 = vmatprep.subr.bf16.mxu0 %v1131
        %1241 = vmatpush1.bf16.msra.mxu0 %v1130
        %1242 = vmatprep.subr.bf16.mxu0 %v1126
        %1243 = vmatpush1.bf16.msra.mxu0 %v1125
        %1244 = vmatprep.subr.bf16.mxu0 %v1121
        %1245 = vmatpush1.bf16.msra.mxu0 %v1120
        %1246 = vmatprep.subr.bf16.mxu0 %v1116
        %1247 = vmatpush1.bf16.msra.mxu0 %v1115
        %1248 = vmatprep.subr.bf16.mxu0 %v1111
        %1249 = vmatpush1.bf16.msra.mxu0 %v1110
        %1250 = vmatprep.subr.bf16.mxu0 %v1106
        %1251 = vmatpush1.bf16.msra.mxu0 %v1105
        %1252 = vmatprep.subr.bf16.mxu0 0
        %1253 = vmatpush2.bf16.msra.mxu0 0
        %1254 = vmatprep.subr.bf16.mxu0 0
        %1255 = vmatpush2.bf16.msra.mxu0 0
        %1256 = vmatprep.subr.bf16.mxu0 0
        %1257 = vmatpush2.bf16.msra.mxu0 0
        %1258 = vmatprep.subr.bf16.mxu0 0
        %1259 = vmatpush2.bf16.msra.mxu0 0
        %1260 = vmatprep.subr.bf16.mxu0 0
        %1261 = vmatpush2.bf16.msra.mxu0 0
        %1262 = vmatprep.subr.bf16.mxu0 0
        %1263 = vmatpush2.bf16.msra.mxu0 0
        %1264 = vmatprep.subr.bf16.mxu0 0
        %1265 = vmatpush2.bf16.msra.mxu0 0
        %1266 = vmatprep.subr.bf16.mxu0 0
        %1267 = vmatpush2.bf16.msra.mxu0 0
        %1268 = vmatprep.mubr.bf16.mxu0 0
        %1269 = vmatmul.mubr.bf16.gmra.mxu0 %v925
        %v1270 = vpop.f32.mrf.mxu0
        %v1271 = vadd.f32 0.0, %v1270
        %v1272 = vpop.f32.mrf.mxu0
        %v1273 = vadd.f32 0.0, %v1272
        %v1274 = vpop.f32.mrf.mxu0
        %v1275 = vadd.f32 0.0, %v1274
        %v1276 = vpop.f32.mrf.mxu0
        %v1277 = vadd.f32 0.0, %v1276
        %1278 = vmatprep.mubr.bf16.mxu0 0
        %1279 = vmatmul.mubr.bf16.gmra.mxu0 %v926
        %v1280 = vpop.f32.mrf.mxu0
        %v1281 = vadd.f32 0.0, %v1280
        %v1282 = vpop.f32.mrf.mxu0
        %v1283 = vadd.f32 0.0, %v1282
        %v1284 = vpop.f32.mrf.mxu0
        %v1285 = vadd.f32 0.0, %v1284
        %v1286 = vpop.f32.mrf.mxu0
        %v1287 = vadd.f32 0.0, %v1286
        %1288 = vdwg.mxu0
        %1289 = vmatprep.subr.bf16.mxu0 0
        %1290 = vmatpush1.bf16.msra.mxu0 %v1142
        %1291 = vmatprep.subr.bf16.mxu0 0
        %1292 = vmatpush1.bf16.msra.mxu0 %v1137
        %1293 = vmatprep.subr.bf16.mxu0 0
        %1294 = vmatpush1.bf16.msra.mxu0 %v1132
        %1295 = vmatprep.subr.bf16.mxu0 0
        %1296 = vmatpush1.bf16.msra.mxu0 %v1127
        %1297 = vmatprep.subr.bf16.mxu0 0
        %1298 = vmatpush1.bf16.msra.mxu0 %v1122
        %1299 = vmatprep.subr.bf16.mxu0 0
        %1300 = vmatpush1.bf16.msra.mxu0 %v1117
        %1301 = vmatprep.subr.bf16.mxu0 0
        %1302 = vmatpush1.bf16.msra.mxu0 %v1112
        %1303 = vmatprep.subr.bf16.mxu0 0
        %1304 = vmatpush1.bf16.msra.mxu0 %v1107
        %1305 = vmatprep.subr.bf16.mxu0 0
        %1306 = vmatpush2.bf16.msra.mxu0 0
        %1307 = vmatprep.subr.bf16.mxu0 0
        %1308 = vmatpush2.bf16.msra.mxu0 0
        %1309 = vmatprep.subr.bf16.mxu0 0
        %1310 = vmatpush2.bf16.msra.mxu0 0
        %1311 = vmatprep.subr.bf16.mxu0 0
        %1312 = vmatpush2.bf16.msra.mxu0 0
        %1313 = vmatprep.subr.bf16.mxu0 0
        %1314 = vmatpush2.bf16.msra.mxu0 0
        %1315 = vmatprep.subr.bf16.mxu0 0
        %1316 = vmatpush2.bf16.msra.mxu0 0
        %1317 = vmatprep.subr.bf16.mxu0 0
        %1318 = vmatpush2.bf16.msra.mxu0 0
        %1319 = vmatprep.subr.bf16.mxu0 0
        %1320 = vmatpush2.bf16.msra.mxu0 0
        %1321 = vmatprep.mubr.bf16.mxu0 0
        %1322 = vmatmul.mubr.bf16.gmra.mxu0 %v925
        %v1323 = vpop.f32.mrf.mxu0
        %v1324 = vadd.f32 0.0, %v1323
        %v1325 = vpop.f32.mrf.mxu0
        %v1326 = vpop.f32.mrf.mxu0
        %v1327 = vadd.f32 0.0, %v1326
        %v1328 = vpop.f32.mrf.mxu0
        %1329 = vmatprep.mubr.bf16.mxu0 0
        %1330 = vmatmul.mubr.bf16.gmra.mxu0 %v926
        %v1331 = vpop.f32.mrf.mxu0
        %v1332 = vadd.f32 0.0, %v1331
        %v1333 = vpop.f32.mrf.mxu0
        %v1334 = vpop.f32.mrf.mxu0
        %v1335 = vadd.f32 0.0, %v1334
        %v1336 = vpop.f32.mrf.mxu0
        %1337 = vdwg.mxu0
        %v1338 = vrot.slane %v1218, 6
        %v1339 = vrot.slane %v1222, 6
        %v1340 = vrot.slane %v1228, 6
        %v1341 = vrot.slane %v1232, 6
        %v1342 = vsel %vm850, %v1340, %v1341
        %v1343 = vsel %vm850, %v1339, %v1340
        %v1344 = vsel %vm850, %v1338, %v1339
        %v1345 = vsel %vm850, %v1341, %v1338
        %v1346 = vadd.f32 %v1271, %v1345
        %v1347 = vadd.f32 %v1275, %v1344
        %v1348 = vadd.f32 %v1281, %v1343
        %v1349 = vadd.f32 %v1285, %v1342
        %v1350 = vrot.slane %v1220, 7
        %v1351 = vrot.slane %v1224, 7
        %v1352 = vrot.slane %v1230, 7
        %v1353 = vrot.slane %v1234, 7
        %v1354 = vsel %vm863, %v1352, %v1353
        %v1355 = vsel %vm863, %v1351, %v1352
        %v1356 = vsel %vm863, %v1350, %v1351
        %v1357 = vsel %vm863, %v1353, %v1350
        %v1358 = vadd.f32 %v1346, %v1357
        %v1359 = vadd.f32 %v1347, %v1356
        %v1360 = vadd.f32 %v1348, %v1355
        %v1361 = vadd.f32 %v1349, %v1354
        %v1362 = vrot.slane %v1273, 1
        %v1363 = vrot.slane %v1277, 1
        %v1364 = vrot.slane %v1283, 1
        %v1365 = vrot.slane %v1287, 1
        %v1366 = vsel %vm876, %v1364, %v1365
        %v1367 = vsel %vm876, %v1363, %v1364
        %v1368 = vsel %vm876, %v1362, %v1363
        %v1369 = vsel %vm876, %v1365, %v1362
        %v1370 = vadd.f32 %v1358, %v1368
        %v1371 = vadd.f32 %v1359, %v1367
        %v1372 = vadd.f32 %v1360, %v1366
        %v1373 = vadd.f32 %v1361, %v1369
        %v1374 = vrot.slane %v1324, 2
        %v1375 = vrot.slane %v1327, 2
        %v1376 = vrot.slane %v1332, 2
        %v1377 = vrot.slane %v1335, 2
        %v1378 = vsel %vm889, %v1376, %v1377
        %v1379 = vsel %vm889, %v1375, %v1376
        %v1380 = vsel %vm889, %v1374, %v1375
        %v1381 = vsel %vm889, %v1377, %v1374
        %v1382 = vadd.f32 %v1370, %v1380
        %v1383 = vadd.f32 %v1371, %v1379
        %v1384 = vadd.f32 %v1372, %v1378
        %v1385 = vadd.f32 %v1373, %v1381
        %v1386 = vld [vmem:[%s4] sm:$0x1]
        %v1388 = vlaneseq
        %v1389 = vshrl.u32 %v1388, 7
        %v1390 = vsub.s32 0, %v1389
        %v1391 = vrot.slane %v1386, %v1390
        %v1393 = vadd.f32 %v1382, %v1391
        %v1394 = vadd.f32 %v1383, %v1391
        %v1395 = vadd.f32 %v1384, %v1391
        %v1396 = vadd.f32 %v1385, %v1391
        %v1397 = vmax.f32 %v1393, 0.0
        %v1398 = vmax.f32 %v1394, 0.0
        %v1399 = vmax.f32 %v1395, 0.0
        %v1400 = vmax.f32 %v1396, 0.0
        %v1401 = vsel %vm917, %v1397, 0.0
        %v1402 = vsel %vm918, %v1398, 0.0
        %v1403 = vsel %vm919, %v1399, 0.0
        %v1404 = vsel %vm920, %v1400, 0.0
        %v1405 = vpack.c.bf16 %v1402, %v1401
        %v1406 = vpack.c.bf16 %v1404, %v1403
        %v1407 = vld [vmem:[#allocation8] sm:$0xff]
        %v1408 = vld [vmem:[#allocation8 + $0x8] sm:$0xff]
        %v1409 = vld [vmem:[#allocation8 + $0x10] sm:$0xf]
        %v1410 = vld [vmem:[#allocation8 + $0x14] sm:$0xff]
        %v1411 = vld [vmem:[#allocation8 + $0x1c] sm:$0xff]
        %v1412 = vld [vmem:[#allocation8 + $0x24] sm:$0xf]
        %v1413 = vld [vmem:[#allocation8 + $0x28] sm:$0xff]
        %v1414 = vld [vmem:[#allocation8 + $0x30] sm:$0xff]
        %v1415 = vld [vmem:[#allocation8 + $0x38] sm:$0xf]
        %v1416 = vld [vmem:[#allocation8 + $0x3c] sm:$0xff]
        %v1417 = vld [vmem:[#allocation8 + $0x44] sm:$0xff]
        %v1418 = vld [vmem:[#allocation8 + $0x4c] sm:$0xf]
        %v1419 = vld [vmem:[#allocation8 + $0x50] sm:$0xff]
        %v1420 = vld [vmem:[#allocation8 + $0x58] sm:$0xff]
        %v1421 = vld [vmem:[#allocation8 + $0x60] sm:$0xf]
        %v1422 = vld [vmem:[#allocation8 + $0x64] sm:$0xff]
        %v1423 = vld [vmem:[#allocation8 + $0x6c] sm:$0xff]
        %v1424 = vld [vmem:[#allocation8 + $0x74] sm:$0xf]
        %v1425 = vld [vmem:[#allocation8 + $0x78] sm:$0xff]
        %v1426 = vld [vmem:[#allocation8 + $0x80] sm:$0xff]
        %v1427 = vld [vmem:[#allocation8 + $0x88] sm:$0xf]
        %v1428 = vld [vmem:[#allocation8 + $0x8c] sm:$0xff]
        %v1429 = vld [vmem:[#allocation8 + $0x94] sm:$0xff]
        %v1430 = vld [vmem:[#allocation8 + $0x9c] sm:$0xf]
        %v1431 = vld [vmem:[#allocation8 + $0xa0] sm:$0xff]
        %v1432 = vld [vmem:[#allocation8 + $0xa8] sm:$0xff]
        %v1433 = vld [vmem:[#allocation8 + $0xb0] sm:$0xf]
        %v1434 = vld [vmem:[#allocation8 + $0xb4] sm:$0xff]
        %v1435 = vld [vmem:[#allocation8 + $0xbc] sm:$0xff]
        %v1436 = vld [vmem:[#allocation8 + $0xc4] sm:$0xf]
        %v1437 = vld [vmem:[#allocation8 + $0xc8] sm:$0xff]
        %v1438 = vld [vmem:[#allocation8 + $0xd0] sm:$0xff]
        %v1439 = vld [vmem:[#allocation8 + $0xd8] sm:$0xf]
        %v1440 = vld [vmem:[#allocation8 + $0xdc] sm:$0xff]
        %v1441 = vld [vmem:[#allocation8 + $0xe4] sm:$0xff]
        %v1442 = vld [vmem:[#allocation8 + $0xec] sm:$0xf]
        %v1443 = vld [vmem:[#allocation8 + $0xf0] sm:$0xff]
        %v1444 = vld [vmem:[#allocation8 + $0xf8] sm:$0xff]
        %v1445 = vld [vmem:[#allocation8 + $0x100] sm:$0xf]
        %v1446 = vld [vmem:[#allocation8 + $0x104] sm:$0xff]
        %v1447 = vld [vmem:[#allocation8 + $0x10c] sm:$0xff]
        %v1448 = vld [vmem:[#allocation8 + $0x114] sm:$0xf]
        %v1449 = vld [vmem:[#allocation8 + $0x118] sm:$0xff]
        %v1450 = vld [vmem:[#allocation8 + $0x120] sm:$0xff]
        %v1451 = vld [vmem:[#allocation8 + $0x128] sm:$0xf]
        %v1452 = vld [vmem:[#allocation8 + $0x12c] sm:$0xff]
        %v1453 = vld [vmem:[#allocation8 + $0x134] sm:$0xff]
        %v1454 = vld [vmem:[#allocation8 + $0x13c] sm:$0xf]
        %v1503 = vunpack.c.l.b16 %v1407
        %v1504 = vunpack.c.h.b16 %v1407
        %v1505 = vunpack.c.l.b16 %v1408
        %v1506 = vunpack.c.h.b16 %v1408
        %v1507 = vunpack.c.l.b16 %v1409
        %v1508 = vunpack.c.l.b16 %v1410
        %v1509 = vunpack.c.h.b16 %v1410
        %v1510 = vunpack.c.l.b16 %v1411
        %v1511 = vunpack.c.h.b16 %v1411
        %v1512 = vunpack.c.l.b16 %v1412
        %v1513 = vunpack.c.l.b16 %v1413
        %v1514 = vunpack.c.h.b16 %v1413
        %v1515 = vunpack.c.l.b16 %v1414
        %v1516 = vunpack.c.h.b16 %v1414
        %v1517 = vunpack.c.l.b16 %v1415
        %v1518 = vunpack.c.l.b16 %v1416
        %v1519 = vunpack.c.h.b16 %v1416
        %v1520 = vunpack.c.l.b16 %v1417
        %v1521 = vunpack.c.h.b16 %v1417
        %v1522 = vunpack.c.l.b16 %v1418
        %v1523 = vunpack.c.l.b16 %v1419
        %v1524 = vunpack.c.h.b16 %v1419
        %v1525 = vunpack.c.l.b16 %v1420
        %v1526 = vunpack.c.h.b16 %v1420
        %v1527 = vunpack.c.l.b16 %v1421
        %v1528 = vunpack.c.l.b16 %v1422
        %v1529 = vunpack.c.h.b16 %v1422
        %v1530 = vunpack.c.l.b16 %v1423
        %v1531 = vunpack.c.h.b16 %v1423
        %v1532 = vunpack.c.l.b16 %v1424
        %v1533 = vunpack.c.l.b16 %v1425
        %v1534 = vunpack.c.h.b16 %v1425
        %v1535 = vunpack.c.l.b16 %v1426
        %v1536 = vunpack.c.h.b16 %v1426
        %v1537 = vunpack.c.l.b16 %v1427
        %v1538 = vunpack.c.l.b16 %v1428
        %v1539 = vunpack.c.h.b16 %v1428
        %v1540 = vunpack.c.l.b16 %v1429
        %v1541 = vunpack.c.h.b16 %v1429
        %v1542 = vunpack.c.l.b16 %v1430
        %v1543 = vunpack.c.l.b16 %v1431
        %v1544 = vunpack.c.h.b16 %v1431
        %v1545 = vunpack.c.l.b16 %v1432
        %v1546 = vunpack.c.h.b16 %v1432
        %v1547 = vunpack.c.l.b16 %v1433
        %v1548 = vunpack.c.l.b16 %v1434
        %v1549 = vunpack.c.h.b16 %v1434
        %v1550 = vunpack.c.l.b16 %v1435
        %v1551 = vunpack.c.h.b16 %v1435
        %v1552 = vunpack.c.l.b16 %v1436
        %v1553 = vunpack.c.l.b16 %v1437
        %v1554 = vunpack.c.h.b16 %v1437
        %v1555 = vunpack.c.l.b16 %v1438
        %v1556 = vunpack.c.h.b16 %v1438
        %v1557 = vunpack.c.l.b16 %v1439
        %v1558 = vunpack.c.l.b16 %v1440
        %v1559 = vunpack.c.h.b16 %v1440
        %v1560 = vunpack.c.l.b16 %v1441
        %v1561 = vunpack.c.h.b16 %v1441
        %v1562 = vunpack.c.l.b16 %v1442
        %v1563 = vunpack.c.l.b16 %v1443
        %v1564 = vunpack.c.h.b16 %v1443
        %v1565 = vunpack.c.l.b16 %v1444
        %v1566 = vunpack.c.h.b16 %v1444
        %v1567 = vunpack.c.l.b16 %v1445
        %v1568 = vunpack.c.l.b16 %v1446
        %v1569 = vunpack.c.h.b16 %v1446
        %v1570 = vunpack.c.l.b16 %v1447
        %v1571 = vunpack.c.h.b16 %v1447
        %v1572 = vunpack.c.l.b16 %v1448
        %v1573 = vunpack.c.l.b16 %v1449
        %v1574 = vunpack.c.h.b16 %v1449
        %v1575 = vunpack.c.l.b16 %v1450
        %v1576 = vunpack.c.h.b16 %v1450
        %v1577 = vunpack.c.l.b16 %v1451
        %v1578 = vunpack.c.l.b16 %v1452
        %v1579 = vunpack.c.h.b16 %v1452
        %v1580 = vunpack.c.l.b16 %v1453
        %v1581 = vunpack.c.h.b16 %v1453
        %v1582 = vunpack.c.l.b16 %v1454
        %v1583 = vpack.c.b16 %v1508, %v1503
        %v1584 = vpack.c.b16 %v1509, %v1504
        %v1585 = vpack.c.b16 %v1510, %v1505
        %v1586 = vpack.c.b16 %v1511, %v1506
        %v1587 = vpack.c.b16 %v1512, %v1507
        %v1588 = vpack.c.b16 %v1518, %v1513
        %v1589 = vpack.c.b16 %v1519, %v1514
        %v1590 = vpack.c.b16 %v1520, %v1515
        %v1591 = vpack.c.b16 %v1521, %v1516
        %v1592 = vpack.c.b16 %v1522, %v1517
        %v1593 = vpack.c.b16 %v1528, %v1523
        %v1594 = vpack.c.b16 %v1529, %v1524
        %v1595 = vpack.c.b16 %v1530, %v1525
        %v1596 = vpack.c.b16 %v1531, %v1526
        %v1597 = vpack.c.b16 %v1532, %v1527
        %v1598 = vpack.c.b16 %v1538, %v1533
        %v1599 = vpack.c.b16 %v1539, %v1534
        %v1600 = vpack.c.b16 %v1540, %v1535
        %v1601 = vpack.c.b16 %v1541, %v1536
        %v1602 = vpack.c.b16 %v1542, %v1537
        %v1603 = vpack.c.b16 %v1548, %v1543
        %v1604 = vpack.c.b16 %v1549, %v1544
        %v1605 = vpack.c.b16 %v1550, %v1545
        %v1606 = vpack.c.b16 %v1551, %v1546
        %v1607 = vpack.c.b16 %v1552, %v1547
        %v1608 = vpack.c.b16 %v1558, %v1553
        %v1609 = vpack.c.b16 %v1559, %v1554
        %v1610 = vpack.c.b16 %v1560, %v1555
        %v1611 = vpack.c.b16 %v1561, %v1556
        %v1612 = vpack.c.b16 %v1562, %v1557
        %v1613 = vpack.c.b16 %v1568, %v1563
        %v1614 = vpack.c.b16 %v1569, %v1564
        %v1615 = vpack.c.b16 %v1570, %v1565
        %v1616 = vpack.c.b16 %v1571, %v1566
        %v1617 = vpack.c.b16 %v1572, %v1567
        %v1618 = vpack.c.b16 %v1578, %v1573
        %v1619 = vpack.c.b16 %v1579, %v1574
        %v1620 = vpack.c.b16 %v1580, %v1575
        %v1621 = vpack.c.b16 %v1581, %v1576
        %v1622 = vpack.c.b16 %v1582, %v1577
        %1663 = vmatprep.subr.bf16.mxu0 %v1619
        %1664 = vmatpush1.bf16.msra.mxu0 %v1618
        %1665 = vmatprep.subr.bf16.mxu0 %v1614
        %1666 = vmatpush1.bf16.msra.mxu0 %v1613
        %1667 = vmatprep.subr.bf16.mxu0 %v1609
        %1668 = vmatpush1.bf16.msra.mxu0 %v1608
        %1669 = vmatprep.subr.bf16.mxu0 %v1604
        %1670 = vmatpush1.bf16.msra.mxu0 %v1603
        %1671 = vmatprep.subr.bf16.mxu0 %v1599
        %1672 = vmatpush1.bf16.msra.mxu0 %v1598
        %1673 = vmatprep.subr.bf16.mxu0 %v1594
        %1674 = vmatpush1.bf16.msra.mxu0 %v1593
        %1675 = vmatprep.subr.bf16.mxu0 %v1589
        %1676 = vmatpush1.bf16.msra.mxu0 %v1588
        %1677 = vmatprep.subr.bf16.mxu0 %v1584
        %1678 = vmatpush1.bf16.msra.mxu0 %v1583
        %1679 = vmatprep.subr.bf16.mxu0 0
        %1680 = vmatpush2.bf16.msra.mxu0 0
        %1681 = vmatprep.subr.bf16.mxu0 0
        %1682 = vmatpush2.bf16.msra.mxu0 0
        %1683 = vmatprep.subr.bf16.mxu0 0
        %1684 = vmatpush2.bf16.msra.mxu0 0
        %1685 = vmatprep.subr.bf16.mxu0 0
        %1686 = vmatpush2.bf16.msra.mxu0 0
        %1687 = vmatprep.subr.bf16.mxu0 0
        %1688 = vmatpush2.bf16.msra.mxu0 0
        %1689 = vmatprep.subr.bf16.mxu0 0
        %1690 = vmatpush2.bf16.msra.mxu0 0
        %1691 = vmatprep.subr.bf16.mxu0 0
        %1692 = vmatpush2.bf16.msra.mxu0 0
        %1693 = vmatprep.subr.bf16.mxu0 0
        %1694 = vmatpush2.bf16.msra.mxu0 0
        %1695 = vmatprep.mubr.bf16.mxu0 0
        %1696 = vmatmul.mubr.bf16.gmra.mxu0 %v1405
        %v1697 = vpop.f32.mrf.mxu0
        %v1698 = vadd.f32 0.0, %v1697
        %v1699 = vpop.f32.mrf.mxu0
        %v1700 = vadd.f32 0.0, %v1699
        %v1701 = vpop.f32.mrf.mxu0
        %v1702 = vadd.f32 0.0, %v1701
        %v1703 = vpop.f32.mrf.mxu0
        %v1704 = vadd.f32 0.0, %v1703
        %1705 = vmatprep.mubr.bf16.mxu0 0
        %1706 = vmatmul.mubr.bf16.gmra.mxu0 %v1406
        %v1707 = vpop.f32.mrf.mxu0
        %v1708 = vadd.f32 0.0, %v1707
        %v1709 = vpop.f32.mrf.mxu0
        %v1710 = vadd.f32 0.0, %v1709
        %v1711 = vpop.f32.mrf.mxu0
        %v1712 = vadd.f32 0.0, %v1711
        %v1713 = vpop.f32.mrf.mxu0
        %v1714 = vadd.f32 0.0, %v1713
        %1715 = vdwg.mxu0
        %1716 = vmatprep.subr.bf16.mxu0 %v1621
        %1717 = vmatpush1.bf16.msra.mxu0 %v1620
        %1718 = vmatprep.subr.bf16.mxu0 %v1616
        %1719 = vmatpush1.bf16.msra.mxu0 %v1615
        %1720 = vmatprep.subr.bf16.mxu0 %v1611
        %1721 = vmatpush1.bf16.msra.mxu0 %v1610
        %1722 = vmatprep.subr.bf16.mxu0 %v1606
        %1723 = vmatpush1.bf16.msra.mxu0 %v1605
        %1724 = vmatprep.subr.bf16.mxu0 %v1601
        %1725 = vmatpush1.bf16.msra.mxu0 %v1600
        %1726 = vmatprep.subr.bf16.mxu0 %v1596
        %1727 = vmatpush1.bf16.msra.mxu0 %v1595
        %1728 = vmatprep.subr.bf16.mxu0 %v1591
        %1729 = vmatpush1.bf16.msra.mxu0 %v1590
        %1730 = vmatprep.subr.bf16.mxu0 %v1586
        %1731 = vmatpush1.bf16.msra.mxu0 %v1585
        %1732 = vmatprep.subr.bf16.mxu0 0
        %1733 = vmatpush2.bf16.msra.mxu0 0
        %1734 = vmatprep.subr.bf16.mxu0 0
        %1735 = vmatpush2.bf16.msra.mxu0 0
        %1736 = vmatprep.subr.bf16.mxu0 0
        %1737 = vmatpush2.bf16.msra.mxu0 0
        %1738 = vmatprep.subr.bf16.mxu0 0
        %1739 = vmatpush2.bf16.msra.mxu0 0
        %1740 = vmatprep.subr.bf16.mxu0 0
        %1741 = vmatpush2.bf16.msra.mxu0 0
        %1742 = vmatprep.subr.bf16.mxu0 0
        %1743 = vmatpush2.bf16.msra.mxu0 0
        %1744 = vmatprep.subr.bf16.mxu0 0
        %1745 = vmatpush2.bf16.msra.mxu0 0
        %1746 = vmatprep.subr.bf16.mxu0 0
        %1747 = vmatpush2.bf16.msra.mxu0 0
        %1748 = vmatprep.mubr.bf16.mxu0 0
        %1749 = vmatmul.mubr.bf16.gmra.mxu0 %v1405
        %v1750 = vpop.f32.mrf.mxu0
        %v1751 = vadd.f32 0.0, %v1750
        %v1752 = vpop.f32.mrf.mxu0
        %v1753 = vadd.f32 0.0, %v1752
        %v1754 = vpop.f32.mrf.mxu0
        %v1755 = vadd.f32 0.0, %v1754
        %v1756 = vpop.f32.mrf.mxu0
        %v1757 = vadd.f32 0.0, %v1756
        %1758 = vmatprep.mubr.bf16.mxu0 0
        %1759 = vmatmul.mubr.bf16.gmra.mxu0 %v1406
        %v1760 = vpop.f32.mrf.mxu0
        %v1761 = vadd.f32 0.0, %v1760
        %v1762 = vpop.f32.mrf.mxu0
        %v1763 = vadd.f32 0.0, %v1762
        %v1764 = vpop.f32.mrf.mxu0
        %v1765 = vadd.f32 0.0, %v1764
        %v1766 = vpop.f32.mrf.mxu0
        %v1767 = vadd.f32 0.0, %v1766
        %1768 = vdwg.mxu0
        %1769 = vmatprep.subr.bf16.mxu0 0
        %1770 = vmatpush1.bf16.msra.mxu0 %v1622
        %1771 = vmatprep.subr.bf16.mxu0 0
        %1772 = vmatpush1.bf16.msra.mxu0 %v1617
        %1773 = vmatprep.subr.bf16.mxu0 0
        %1774 = vmatpush1.bf16.msra.mxu0 %v1612
        %1775 = vmatprep.subr.bf16.mxu0 0
        %1776 = vmatpush1.bf16.msra.mxu0 %v1607
        %1777 = vmatprep.subr.bf16.mxu0 0
        %1778 = vmatpush1.bf16.msra.mxu0 %v1602
        %1779 = vmatprep.subr.bf16.mxu0 0
        %1780 = vmatpush1.bf16.msra.mxu0 %v1597
        %1781 = vmatprep.subr.bf16.mxu0 0
        %1782 = vmatpush1.bf16.msra.mxu0 %v1592
        %1783 = vmatprep.subr.bf16.mxu0 0
        %1784 = vmatpush1.bf16.msra.mxu0 %v1587
        %1785 = vmatprep.subr.bf16.mxu0 0
        %1786 = vmatpush2.bf16.msra.mxu0 0
        %1787 = vmatprep.subr.bf16.mxu0 0
        %1788 = vmatpush2.bf16.msra.mxu0 0
        %1789 = vmatprep.subr.bf16.mxu0 0
        %1790 = vmatpush2.bf16.msra.mxu0 0
        %1791 = vmatprep.subr.bf16.mxu0 0
        %1792 = vmatpush2.bf16.msra.mxu0 0
        %1793 = vmatprep.subr.bf16.mxu0 0
        %1794 = vmatpush2.bf16.msra.mxu0 0
        %1795 = vmatprep.subr.bf16.mxu0 0
        %1796 = vmatpush2.bf16.msra.mxu0 0
        %1797 = vmatprep.subr.bf16.mxu0 0
        %1798 = vmatpush2.bf16.msra.mxu0 0
        %1799 = vmatprep.subr.bf16.mxu0 0
        %1800 = vmatpush2.bf16.msra.mxu0 0
        %1801 = vmatprep.mubr.bf16.mxu0 0
        %1802 = vmatmul.mubr.bf16.gmra.mxu0 %v1405
        %v1803 = vpop.f32.mrf.mxu0
        %v1804 = vadd.f32 0.0, %v1803
        %v1805 = vpop.f32.mrf.mxu0
        %v1806 = vpop.f32.mrf.mxu0
        %v1807 = vadd.f32 0.0, %v1806
        %v1808 = vpop.f32.mrf.mxu0
        %1809 = vmatprep.mubr.bf16.mxu0 0
        %1810 = vmatmul.mubr.bf16.gmra.mxu0 %v1406
        %v1811 = vpop.f32.mrf.mxu0
        %v1812 = vadd.f32 0.0, %v1811
        %v1813 = vpop.f32.mrf.mxu0
        %v1814 = vpop.f32.mrf.mxu0
        %v1815 = vadd.f32 0.0, %v1814
        %v1816 = vpop.f32.mrf.mxu0
        %1817 = vdwg.mxu0
        %v1818 = vrot.slane %v1698, 6
        %v1819 = vrot.slane %v1702, 6
        %v1820 = vrot.slane %v1708, 6
        %v1821 = vrot.slane %v1712, 6
        %v1822 = vsel %vm850, %v1820, %v1821
        %v1823 = vsel %vm850, %v1819, %v1820
        %v1824 = vsel %vm850, %v1818, %v1819
        %v1825 = vsel %vm850, %v1821, %v1818
        %v1826 = vadd.f32 %v1751, %v1825
        %v1827 = vadd.f32 %v1755, %v1824
        %v1828 = vadd.f32 %v1761, %v1823
        %v1829 = vadd.f32 %v1765, %v1822
        %v1830 = vrot.slane %v1700, 7
        %v1831 = vrot.slane %v1704, 7
        %v1832 = vrot.slane %v1710, 7
        %v1833 = vrot.slane %v1714, 7
        %v1834 = vsel %vm863, %v1832, %v1833
        %v1835 = vsel %vm863, %v1831, %v1832
        %v1836 = vsel %vm863, %v1830, %v1831
        %v1837 = vsel %vm863, %v1833, %v1830
        %v1838 = vadd.f32 %v1826, %v1837
        %v1839 = vadd.f32 %v1827, %v1836
        %v1840 = vadd.f32 %v1828, %v1835
        %v1841 = vadd.f32 %v1829, %v1834
        %v1842 = vrot.slane %v1753, 1
        %v1843 = vrot.slane %v1757, 1
        %v1844 = vrot.slane %v1763, 1
        %v1845 = vrot.slane %v1767, 1
        %v1846 = vsel %vm876, %v1844, %v1845
        %v1847 = vsel %vm876, %v1843, %v1844
        %v1848 = vsel %vm876, %v1842, %v1843
        %v1849 = vsel %vm876, %v1845, %v1842
        %v1850 = vadd.f32 %v1838, %v1848
        %v1851 = vadd.f32 %v1839, %v1847
        %v1852 = vadd.f32 %v1840, %v1846
        %v1853 = vadd.f32 %v1841, %v1849
        %v1854 = vrot.slane %v1804, 2
        %v1855 = vrot.slane %v1807, 2
        %v1856 = vrot.slane %v1812, 2
        %v1857 = vrot.slane %v1815, 2
        %v1858 = vsel %vm889, %v1856, %v1857
        %v1859 = vsel %vm889, %v1855, %v1856
        %v1860 = vsel %vm889, %v1854, %v1855
        %v1861 = vsel %vm889, %v1857, %v1854
        %v1862 = vadd.f32 %v1850, %v1860
        %v1863 = vadd.f32 %v1851, %v1859
        %v1864 = vadd.f32 %v1852, %v1858
        %v1865 = vadd.f32 %v1853, %v1861
        %v1866 = vld [vmem:[%s6] sm:$0x1]
        %v1868 = vlaneseq
        %v1869 = vshrl.u32 %v1868, 7
        %v1870 = vsub.s32 0, %v1869
        %v1871 = vrot.slane %v1866, %v1870
        %v1873 = vadd.f32 %v1862, %v1871
        %v1874 = vadd.f32 %v1863, %v1871
        %v1875 = vadd.f32 %v1864, %v1871
        %v1876 = vadd.f32 %v1865, %v1871
        %v1877 = vmax.f32 %v1873, 0.0
        %v1878 = vmax.f32 %v1874, 0.0
        %v1879 = vmax.f32 %v1875, 0.0
        %v1880 = vmax.f32 %v1876, 0.0
        %v1881 = vsel %vm917, %v1877, 0.0
        %v1882 = vsel %vm918, %v1878, 0.0
        %v1883 = vsel %vm919, %v1879, 0.0
        %v1884 = vsel %vm920, %v1880, 0.0
        %v1885 = vpack.c.bf16 %v1882, %v1881
        %v1886 = vpack.c.bf16 %v1884, %v1883
        %v1887 = vld [vmem:[#allocation10] sm:$0xf]
        %v1888 = vld [vmem:[#allocation10 + $0x4] sm:$0xf]
        %v1889 = vld [vmem:[#allocation10 + $0x8] sm:$0xf]
        %v1890 = vld [vmem:[#allocation10 + $0xc] sm:$0xf]
        %v1891 = vld [vmem:[#allocation10 + $0x10] sm:$0xf]
        %v1892 = vld [vmem:[#allocation10 + $0x14] sm:$0xf]
        %v1893 = vld [vmem:[#allocation10 + $0x18] sm:$0xf]
        %v1894 = vld [vmem:[#allocation10 + $0x1c] sm:$0xf]
        %v1895 = vld [vmem:[#allocation10 + $0x20] sm:$0xf]
        %v1896 = vld [vmem:[#allocation10 + $0x24] sm:$0xf]
        %v1897 = vld [vmem:[#allocation10 + $0x28] sm:$0xf]
        %v1898 = vld [vmem:[#allocation10 + $0x2c] sm:$0xf]
        %v1899 = vld [vmem:[#allocation10 + $0x30] sm:$0xf]
        %v1900 = vld [vmem:[#allocation10 + $0x34] sm:$0xf]
        %v1901 = vld [vmem:[#allocation10 + $0x38] sm:$0xf]
        %v1902 = vld [vmem:[#allocation10 + $0x3c] sm:$0xf]
        %v1903 = vld [vmem:[%s8] sm:$0x1]
        %v1905 = vlaneseq
        %v1906 = vshrl.u32 %v1905, 7
        %v1907 = vsub.s32 0, %v1906
        %v1908 = vrot.slane %v1903, %v1907
        %v1926 = vunpack.c.l.b16 %v1887
        %v1927 = vunpack.c.l.b16 %v1888
        %v1928 = vunpack.c.l.b16 %v1889
        %v1929 = vunpack.c.l.b16 %v1890
        %v1930 = vunpack.c.l.b16 %v1891
        %v1931 = vunpack.c.l.b16 %v1892
        %v1932 = vunpack.c.l.b16 %v1893
        %v1933 = vunpack.c.l.b16 %v1894
        %v1934 = vunpack.c.l.b16 %v1895
        %v1935 = vunpack.c.l.b16 %v1896
        %v1936 = vunpack.c.l.b16 %v1897
        %v1937 = vunpack.c.l.b16 %v1898
        %v1938 = vunpack.c.l.b16 %v1899
        %v1939 = vunpack.c.l.b16 %v1900
        %v1940 = vunpack.c.l.b16 %v1901
        %v1941 = vunpack.c.l.b16 %v1902
        %v1942 = vpack.c.b16 %v1927, %v1926
        %v1943 = vpack.c.b16 %v1929, %v1928
        %v1944 = vpack.c.b16 %v1931, %v1930
        %v1945 = vpack.c.b16 %v1933, %v1932
        %v1946 = vpack.c.b16 %v1935, %v1934
        %v1947 = vpack.c.b16 %v1937, %v1936
        %v1948 = vpack.c.b16 %v1939, %v1938
        %v1949 = vpack.c.b16 %v1941, %v1940
        %1958 = vmatprep.subr.bf16.mxu0 0
        %1959 = vmatpush1.bf16.msra.mxu0 %v1949
        %1960 = vmatprep.subr.bf16.mxu0 0
        %1961 = vmatpush1.bf16.msra.mxu0 %v1948
        %1962 = vmatprep.subr.bf16.mxu0 0
        %1963 = vmatpush1.bf16.msra.mxu0 %v1947
        %1964 = vmatprep.subr.bf16.mxu0 0
        %1965 = vmatpush1.bf16.msra.mxu0 %v1946
        %1966 = vmatprep.subr.bf16.mxu0 0
        %1967 = vmatpush1.bf16.msra.mxu0 %v1945
        %1968 = vmatprep.subr.bf16.mxu0 0
        %1969 = vmatpush1.bf16.msra.mxu0 %v1944
        %1970 = vmatprep.subr.bf16.mxu0 0
        %1971 = vmatpush1.bf16.msra.mxu0 %v1943
        %1972 = vmatprep.subr.bf16.mxu0 0
        %1973 = vmatpush1.bf16.msra.mxu0 %v1942
        %1974 = vmatprep.subr.bf16.mxu0 0
        %1975 = vmatpush2.bf16.msra.mxu0 0
        %1976 = vmatprep.subr.bf16.mxu0 0
        %1977 = vmatpush2.bf16.msra.mxu0 0
        %1978 = vmatprep.subr.bf16.mxu0 0
        %1979 = vmatpush2.bf16.msra.mxu0 0
        %1980 = vmatprep.subr.bf16.mxu0 0
        %1981 = vmatpush2.bf16.msra.mxu0 0
        %1982 = vmatprep.subr.bf16.mxu0 0
        %1983 = vmatpush2.bf16.msra.mxu0 0
        %1984 = vmatprep.subr.bf16.mxu0 0
        %1985 = vmatpush2.bf16.msra.mxu0 0
        %1986 = vmatprep.subr.bf16.mxu0 0
        %1987 = vmatpush2.bf16.msra.mxu0 0
        %1988 = vmatprep.subr.bf16.mxu0 0
        %1989 = vmatpush2.bf16.msra.mxu0 0
        %1990 = vmatprep.mubr.bf16.mxu0 0
        %1991 = vmatmul.mubr.bf16.gmra.mxu0 %v1885
        %v1992 = vpop.f32.mrf.mxu0
        %v1993 = vadd.f32 %v1908, %v1992
        %v1994 = vpop.f32.mrf.mxu0
        %v1995 = vpop.f32.mrf.mxu0
        %v1996 = vadd.f32 %v1908, %v1995
        %v1997 = vpop.f32.mrf.mxu0
        %1998 = vmatprep.mubr.bf16.mxu0 0
        %1999 = vmatmul.mubr.bf16.gmra.mxu0 %v1886
        %v2000 = vpop.f32.mrf.mxu0
        %v2001 = vadd.f32 %v1908, %v2000
        %v2002 = vpop.f32.mrf.mxu0
        %v2003 = vpop.f32.mrf.mxu0
        %v2004 = vadd.f32 %v1908, %v2003
        %v2005 = vpop.f32.mrf.mxu0
        %2006 = vdwg.mxu0
        %v2007 = vpack.c.bf16 %v1996, %v1993
        %v2008 = vpack.c.bf16 %v2004, %v2001
        %v2011 = vunpack.c.l.b16 %v2007
        %v2012 = vunpack.c.h.b16 %v2007
        %v2013 = vunpack.c.l.b16 %v2008
        %v2014 = vunpack.c.h.b16 %v2008
        %v2015 = vpack.c.b16 %v2011, %v2011
        %v2016 = vpack.c.b16 %v2012, %v2012
        %v2017 = vpack.c.b16 %v2013, %v2013
        %v2018 = vpack.c.b16 %v2014, %v2014
        %2023 = vst [vmem:[%s408] sm:$0xf] %v2015
        %2024 = vst [vmem:[%s408 + $0x4] sm:$0xf] %v2016
        %2025 = vst [vmem:[%s408 + $0x8] sm:$0xf] %v2017
        %2026 = vst [vmem:[%s408 + $0xc] sm:$0xf] %v2018
        %s2027 = sand.u32 %s230, 1
        %s2028 = scalar_lea.sflag [#allocation4], %s2027
        %s2029 = sand.u32 %s230, 1
        %s2030 = smul.addr %s2029, 16
        %s2031 = scalar_lea.vmem [#allocation11], %s2030
        // Predicated region
        $region77: #{tpu_custom_call.1} parent=55 // pred_check
          %p2032 = pneg %p240
        $region78: #{tpu_custom_call.1} parent=55 // pred_check_branch
          %2034 = sbr.rel (%p2032) target = $region80
        $region79: #{tpu_custom_call.1} parent=55 // pred_region
          %s2036 = ssub.s32 256, 256
          %2037 = vsyncadd %s2028, %s2036
          %s2038 = smul.addr %s28, 4
          %s2039 = smul.addr %s2038, 64
          %s2040 = scalar_lea.hbm %s9, %s2039
          %s2041 = sshll.u32 %s2031, 4
          %s2042 = int_to_ptr.vmem [resolvable:$true] %s2041
          %2047 = dma.vmem_to_hbm [thread:$0]  %s2042, 256, %s2040, %s2028, 64, 64, 4
        $region80: #{tpu_custom_call.1} parent=55 // pred_fallthru
          _
      $region56: #{tpu_custom_call.1} parent=5 // pred_fallthru
        _
      %p2048 = scmp.le.s32.totalorder 2, %s23
      // Predicated region
      $region81: #{tpu_custom_call.1} parent=5 // pred_check
        %p2049 = pneg %p2048
      $region82: #{tpu_custom_call.1} parent=5 // pred_check_branch
        %2051 = sbr.rel (%p2049) target = $region84
      $region83: #{tpu_custom_call.1} parent=5 // pred_region
        %s2052 = ssub.s32 %s23, 2
        // Predicated region
        $region85: #{tpu_custom_call.1} parent=83 // pred_check
          %p2053 = pneg %p246
        $region86: #{tpu_custom_call.1} parent=83 // pred_check_branch
          %2055 = sbr.rel (%p2053) target = $region88
        $region87: #{tpu_custom_call.1} parent=83 // pred_region
          %s2056 = sand.u32 %s231, 1
          %s2057 = scalar_lea.sflag [#allocation4], %s2056
          %s2058 = sand.u32 %s231, 1
          %s2059 = smul.addr %s2058, 16
          %s2060 = scalar_lea.vmem [#allocation11], %s2059
          %2061 = dma.done %s2057, 256
        $region88: #{tpu_custom_call.1} parent=83 // pred_fallthru
          _
      $region84: #{tpu_custom_call.1} parent=5 // pred_fallthru
        _
    $region6: #{tpu_custom_call.1} parent=1 // loop_footer
      %s27 = sadd.s32 1, %s23
    $region7: #{tpu_custom_call.1} parent=1 // loop_footer_branch
      %22 = sbr.rel target = $region3
    $region8: #{tpu_custom_call.1} parent=1 // loop_exit
      _
    %2062 = vsyncpa [#allocation3], 1
    %s2063 = scalar_lea.sflag [#allocation3], 1
    %2064 = vsyncpa %s2063, 1
    %2065 = vsyncpa [#allocation6], 1
    %2066 = vsyncpa [#allocation9], 1
    %2067 = vsyncpa [#allocation4], 1
    %s2068 = scalar_lea.sflag [#allocation4], 1
    %2069 = vsyncpa %s2068, 1

</llo_original>
